<compile_context>
chip_gen: v5e
topology: v5e:2x2
jax: 0.10.0
libtpu: 0.0.40
codegen_flags: <defaults>
</compile_context>

<pallas_src>
import jax
import jax.numpy as jnp
from jax import lax
from jax.experimental import pallas as pl
from jax.experimental.pallas import tpu as pltpu

C_IN = 1280      # head in_ch (EfficientNet-B0 feature width)
C_OUT = 128      # head out_ch
FRAMES = 10      # frame_num
BLOCK_B = 16     # batch elements fused per grid step (multiple of the bf16 sublane tile)
BN_EPS = 1e-5


def _round_up(x, m):
    return (x + m - 1) // m * m


def _shift_rows(a, shift):
    """Shift rows of a 2-D array toward higher indices (shift > 0), zero filling.

    Zero fill of the vacated rows implements the temporal zero padding of the conv
    and the (-inf ==) 0 padding of the maxpool (its input is >= 0 after ReLU).
    Shifts are by whole +-BLOCK_B row groups, so the slices stay vreg aligned and
    batch elements never bleed into each other.
    """
    n, c = a.shape
    zeros = jnp.zeros((abs(shift), c), a.dtype)
    if shift > 0:
        return jnp.concatenate([zeros, a[:n - shift, :]], axis=0)
    return jnp.concatenate([a[-shift:, :], zeros], axis=0)


def _head3d_kernel(x_ref, w_ref, scale_ref, shift_ref, wfc_ref, bfc_ref, out_ref):
    """One batch tile (BLOCK_B elements) per grid step.

    x_ref     : (frames, TB, C_IN)  bf16, time-major channels-last frames
    w_ref     : (C_IN, 3*C_OUT)     bf16, temporal taps packed along N: [W0|W1|W2]
    scale_ref : (1, C_OUT)          f32, folded BN scale = gamma / sqrt(var + eps)
    shift_ref : (1, C_OUT)          f32, folded BN shift (includes the conv bias)
    wfc_ref   : (frames, 1, C_OUT)  f32, fc weights in torch flatten order (c*T + t)
    bfc_ref   : (1, C_OUT)          f32, fc bias broadcast over lanes
    out_ref   : (TB, C_OUT)         f32, per-element logit broadcast over 128 lanes
    """
    frames, tb, c_in = x_ref.shape
    c_out = out_ref.shape[1]
    m = frames * tb

    # Time-major LHS: row r = t*TB + b.  Leading-dim merge is layout free (TB == 16).
    xp = x_ref[...].reshape(m, c_in)

    # --- Conv3d(C_IN->C_OUT, k=(3,3,3), pad=1) on a (T,1,1) volume -------------
    # One bf16 MXU matmul against the N-packed taps, f32 accumulation, then
    # recombine by shifting the 128-lane results (never the 1280-lane LHS).
    y = jnp.dot(xp, w_ref[...], preferred_element_type=jnp.float32)   # (M, 3*C_OUT)
    conv = (y[:, c_out:2 * c_out]                    # x[t]   @ W1
            + _shift_rows(y[:, :c_out], tb)          # x[t-1] @ W0   (zero at t = 0)
            + _shift_rows(y[:, 2 * c_out:], -tb))    # x[t+1] @ W2   (zero at t = T-1)

    # --- BatchNorm3d (inference, conv bias folded into shift) + ReLU -----------
    z = jnp.maximum(conv * scale_ref[...] + shift_ref[...], 0.0)      # (M, C_OUT), >= 0

    # --- MaxPool3d k=(3,3,3), pad=1, stride=1 on (T,1,1): temporal 3-tap max ---
    pool = jnp.maximum(jnp.maximum(z, _shift_rows(z, tb)), _shift_rows(z, -tb))

    # --- Flatten + Linear(C_OUT*frames -> 1) ------------------------------------
    acc = jnp.zeros((tb, c_out), jnp.float32)
    for t in range(frames):                          # static unroll, aligned 16-row slices
        acc = acc + pool[t * tb:(t + 1) * tb, :] * wfc_ref[t]
    logit = jnp.sum(acc, axis=-1, keepdims=True)                      # (TB, 1)
    out_ref[...] = jnp.broadcast_to(logit, (tb, c_out)) + bfc_ref[...]


def efficient3d_head(feat, params, frames=FRAMES, block_b=BLOCK_B):
    """feat: (B*frames, 1280) pooled EfficientNet-B0 features -> (B, 1) logits."""
    w_packed, scale, shift, wfc3, bfc = params
    assert block_b % 16 == 0, "block_b must be a multiple of the bf16 sublane tile (16)"
    assert wfc3.shape[0] == frames, "params were folded for a different frame_num"

    # Exactly reproduces `x.view((-1, 1280, frame_num, 1, 1))` (row-major reshape),
    # then a single fused transpose + bf16 cast to a time-major channels-last layout.
    # No host-side zero-padded copy: temporal padding is realised by zero-filled row
    # shifts inside the kernel.
    x_bct = jnp.reshape(feat, (-1, C_IN, frames))                     # (B, C_IN, T)
    b = x_bct.shape[0]
    x_tbc = jnp.transpose(x_bct, (2, 0, 1)).astype(jnp.bfloat16)      # (T, B, C_IN)

    b_pad = _round_up(b, block_b)                    # handle B not a multiple of block_b
    if b_pad != b:
        x_tbc = jnp.pad(x_tbc, ((0, 0), (0, b_pad - b), (0, 0)))

    out = pl.pallas_call(
        _head3d_kernel,
        out_shape=jax.ShapeDtypeStruct((b_pad, C_OUT), jnp.float32),
        grid=(b_pad // block_b,),
        in_specs=[
            pl.BlockSpec((frames, block_b, C_IN), lambda i: (0, i, 0)),
            pl.BlockSpec((C_IN, 3 * C_OUT), lambda i: (0, 0)),
            pl.BlockSpec((1, C_OUT), lambda i: (0, 0)),
            pl.BlockSpec((1, C_OUT), lambda i: (0, 0)),
            pl.BlockSpec((frames, 1, C_OUT), lambda i: (0, 0, 0)),
            pl.BlockSpec((1, C_OUT), lambda i: (0, 0)),
        ],
        out_specs=pl.BlockSpec((block_b, C_OUT), lambda i: (i, 0)),
        compiler_params=pltpu.CompilerParams(dimension_semantics=("parallel",)),
    )(x_tbc, w_packed, scale, shift, wfc3, bfc)

    return out[:b, :1]                               # (B, 1)


def init_params(key, frames=FRAMES):
    """Deterministic synthetic parameters with the exact PyTorch shapes."""
    ks = jax.random.split(key, 8)
    conv_w = 0.02 * jax.random.normal(ks[0], (C_OUT, C_IN, 3, 3, 3), jnp.float32)
    conv_b = 0.01 * jax.random.normal(ks[1], (C_OUT,), jnp.float32)
    gamma = 1.0 + 0.1 * jax.random.normal(ks[2], (C_OUT,), jnp.float32)
    beta = 0.1 * jax.random.normal(ks[3], (C_OUT,), jnp.float32)
    rmean = 0.1 * jax.random.normal(ks[4], (C_OUT,), jnp.float32)
    rvar = jax.random.uniform(ks[5], (C_OUT,), jnp.float32, 0.5, 1.5)
    fc_w = 0.05 * jax.random.normal(ks[6], (1, C_OUT * frames), jnp.float32)
    fc_b = 0.01 * jax.random.normal(ks[7], (1,), jnp.float32)
    return conv_w, conv_b, gamma, beta, rmean, rvar, fc_w, fc_b


def fold_params(raw, frames=FRAMES):
    """Fold BN + conv bias, pick the centre spatial tap, pack taps along N, and
    match torch's flatten order (index = c*frames + t) for the fc weights."""
    conv_w, conv_b, gamma, beta, rmean, rvar, fc_w, fc_b = raw
    # feat_h == feat_w == 1 with padding 1 => only the centre spatial tap ever
    # multiplies non-zero data; the three temporal taps remain, packed along N so a
    # single matmul fills the 256-wide v6e/v7x MXU (harmless on v5e).
    w_taps = jnp.transpose(conv_w[:, :, :, 1, 1], (1, 2, 0))          # (C_IN, 3, C_OUT)
    w_packed = w_taps.reshape(C_IN, 3 * C_OUT).astype(jnp.bfloat16)   # [W0|W1|W2]
    inv_std = 1.0 / jnp.sqrt(rvar + BN_EPS)
    scale = (gamma * inv_std).reshape(1, C_OUT)
    shift = (beta + (conv_b - rmean) * gamma * inv_std).reshape(1, C_OUT)
    wfc = jnp.transpose(fc_w[0].reshape(C_OUT, frames), (1, 0))       # (frames, C_OUT)
    wfc3 = wfc.reshape(frames, 1, C_OUT).astype(jnp.float32)
    bfc = jnp.broadcast_to(fc_b.reshape(1, 1), (1, C_OUT)).astype(jnp.float32)
    return w_packed, scale, shift, wfc3, bfc


def reference_forward(feat, raw, frames=FRAMES):
    """Pure-JAX (XLA, full f32) reference of Head3D forward in NCDHW layout."""
    conv_w, conv_b, gamma, beta, rmean, rvar, fc_w, fc_b = raw
    x = jnp.reshape(feat, (-1, C_IN, frames, 1, 1))
    b = x.shape[0]
    conv = lax.conv_general_dilated(
        x, conv_w, window_strides=(1, 1, 1),
        padding=((1, 1), (1, 1), (1, 1)),
        dimension_numbers=("NCDHW", "OIDHW", "NCDHW"),
        precision=lax.Precision.HIGHEST)
    conv = conv + conv_b.reshape(1, C_OUT, 1, 1, 1)
    bn = (conv - rmean.reshape(1, C_OUT, 1, 1, 1)) / jnp.sqrt(
        rvar.reshape(1, C_OUT, 1, 1, 1) + BN_EPS)
    bn = bn * gamma.reshape(1, C_OUT, 1, 1, 1) + beta.reshape(1, C_OUT, 1, 1, 1)
    y = jnp.maximum(bn, 0.0)
    pooled = lax.reduce_window(
        y, -jnp.inf, lax.max,
        window_dimensions=(1, 1, 3, 3, 3),
        window_strides=(1, 1, 1, 1, 1),
        padding=((0, 0), (0, 0), (1, 1), (1, 1), (1, 1)))
    flat = pooled.reshape(b, -1)
    return jnp.dot(flat, fc_w.T, precision=lax.Precision.HIGHEST) + fc_b.reshape(1, 1)


def _bf16_round(x):
    return x.astype(jnp.bfloat16).astype(jnp.float32)


if __name__ == "__main__":
    key = jax.random.PRNGKey(0)
    k_feat, k_param = jax.random.split(key)

    B = 20                         # deliberately not a multiple of BLOCK_B (remainder path)
    feat = jax.random.normal(k_feat, (B * FRAMES, C_IN), jnp.float32)  # trunk features

    raw = init_params(k_param)
    params = fold_params(raw)

    out = jax.jit(efficient3d_head)(feat, params)
    out = jax.block_until_ready(out)
    assert out.shape == (B, 1), f"bad output shape {out.shape}"

    # Tight check: XLA reference fed the same bf16-rounded matmul operands, so that
    # layout / indexing bugs are not hidden behind bf16 cast noise.
    raw_matched = (_bf16_round(raw[0]),) + raw[1:]
    ref_matched = jax.block_until_ready(reference_forward(_bf16_round(feat), raw_matched))
    if not jnp.allclose(out, ref_matched, rtol=5e-3, atol=5e-3):
        raise AssertionError(
            f"kernel / bf16-matched reference mismatch:\n{out.ravel()}\n{ref_matched.ravel()}")

    # Loose check: full-f32 module reference; only bf16 input/weight rounding differs.
    ref_f32 = jax.block_until_ready(reference_forward(feat, raw))
    if not jnp.allclose(out, ref_f32, rtol=5e-2, atol=5e-2):
        raise AssertionError(
            f"kernel / f32 reference mismatch:\n{out.ravel()}\n{ref_f32.ravel()}")

    print("KERNEL_OK")
</pallas_src>

<mosaic_0001>
module attributes {stable_mosaic.version = 11 : i64} {
  func.func @_head3d_kernel(%arg0: i32, %arg1: memref<10x16x1280xbf16, #tpu.memory_space<vmem>>, %arg2: memref<1280x384xbf16, #tpu.memory_space<vmem>>, %arg3: memref<1x128xf32, #tpu.memory_space<vmem>>, %arg4: memref<1x128xf32, #tpu.memory_space<vmem>>, %arg5: memref<10x1x128xf32, #tpu.memory_space<vmem>>, %arg6: memref<1x128xf32, #tpu.memory_space<vmem>>, %arg7: memref<16x128xf32, #tpu.memory_space<vmem>>) attributes {dimension_semantics = [#tpu.dimension_semantics<parallel>], iteration_bounds = array<i64: 2>, scalar_prefetch = 0 : i64, scratch_operands = 0 : i64, tpu.core_type = #tpu.core_type<tc>, window_params = [{transform_indices = @transform_0, window_bounds = array<i64: 10, 16, 1280>}, {pipeline_mode = #tpu.pipeline_mode<synchronous>, transform_indices = @transform_1, window_bounds = array<i64: 1280, 384>}, {pipeline_mode = #tpu.pipeline_mode<synchronous>, transform_indices = @transform_2, window_bounds = array<i64: 1, 128>}, {pipeline_mode = #tpu.pipeline_mode<synchronous>, transform_indices = @transform_3, window_bounds = array<i64: 1, 128>}, {pipeline_mode = #tpu.pipeline_mode<synchronous>, transform_indices = @transform_4, window_bounds = array<i64: 10, 1, 128>}, {pipeline_mode = #tpu.pipeline_mode<synchronous>, transform_indices = @transform_5, window_bounds = array<i64: 1, 128>}, {transform_indices = @transform_6, window_bounds = array<i64: 16, 128>}]} {
    %c0 = arith.constant 0 : index
    %c0_0 = arith.constant 0 : index
    %c0_1 = arith.constant 0 : index
    %0 = vector.load %arg1[%c0, %c0_0, %c0_1] : memref<10x16x1280xbf16, #tpu.memory_space<vmem>>, vector<10x16x1280xbf16>
    %1 = vector.shape_cast %0 : vector<10x16x1280xbf16> to vector<160x1280xbf16>
    %c0_2 = arith.constant 0 : index
    %c0_3 = arith.constant 0 : index
    %2 = vector.load %arg2[%c0_2, %c0_3] : memref<1280x384xbf16, #tpu.memory_space<vmem>>, vector<1280x384xbf16>
    %cst = arith.constant dense<0.000000e+00> : vector<160x384xf32>
    %3 = tpu.matmul %1, %2, %cst {dimension_numbers = #tpu.dot_dimension_numbers<[1], [0], [0], [1], [0, 0, 1, 1], [], []>} : vector<160x1280xbf16>, vector<1280x384xbf16>, vector<160x384xf32> -> vector<160x384xf32>
    %4 = vector.extract_strided_slice %3 {offsets = [0, 128], sizes = [160, 128], strides = [1, 1]} : vector<160x384xf32> to vector<160x128xf32>
    %5 = vector.extract_strided_slice %3 {offsets = [0, 0], sizes = [160, 128], strides = [1, 1]} : vector<160x384xf32> to vector<160x128xf32>
    %cst_4 = arith.constant 0.000000e+00 : f32
    %6 = vector.broadcast %cst_4 : f32 to vector<16x128xf32>
    %7 = vector.extract_strided_slice %5 {offsets = [0, 0], sizes = [144, 128], strides = [1, 1]} : vector<160x128xf32> to vector<144x128xf32>
    %8 = tpu.concatenate %6, %7 in 0 : vector<16x128xf32>, vector<144x128xf32> -> vector<160x128xf32>
    %9 = arith.addf %4, %8 : vector<160x128xf32>
    %10 = vector.extract_strided_slice %3 {offsets = [0, 256], sizes = [160, 128], strides = [1, 1]} : vector<160x384xf32> to vector<160x128xf32>
    %cst_5 = arith.constant 0.000000e+00 : f32
    %11 = vector.broadcast %cst_5 : f32 to vector<16x128xf32>
    %12 = vector.extract_strided_slice %10 {offsets = [16, 0], sizes = [144, 128], strides = [1, 1]} : vector<160x128xf32> to vector<144x128xf32>
    %13 = tpu.concatenate %12, %11 in 0 : vector<144x128xf32>, vector<16x128xf32> -> vector<160x128xf32>
    %14 = arith.addf %9, %13 : vector<160x128xf32>
    %c0_6 = arith.constant 0 : index
    %c0_7 = arith.constant 0 : index
    %15 = vector.load %arg3[%c0_6, %c0_7] : memref<1x128xf32, #tpu.memory_space<vmem>>, vector<1x128xf32>
    %16 = vector.broadcast %15 : vector<1x128xf32> to vector<160x128xf32>
    %17 = arith.mulf %14, %16 : vector<160x128xf32>
    %c0_8 = arith.constant 0 : index
    %c0_9 = arith.constant 0 : index
    %18 = vector.load %arg4[%c0_8, %c0_9] : memref<1x128xf32, #tpu.memory_space<vmem>>, vector<1x128xf32>
    %19 = vector.broadcast %18 : vector<1x128xf32> to vector<160x128xf32>
    %20 = arith.addf %17, %19 : vector<160x128xf32>
    %cst_10 = arith.constant 0.000000e+00 : f32
    %21 = vector.broadcast %cst_10 : f32 to vector<160x128xf32>
    %22 = arith.maximumf %20, %21 : vector<160x128xf32>
    %cst_11 = arith.constant 0.000000e+00 : f32
    %23 = vector.broadcast %cst_11 : f32 to vector<16x128xf32>
    %24 = vector.extract_strided_slice %22 {offsets = [0, 0], sizes = [144, 128], strides = [1, 1]} : vector<160x128xf32> to vector<144x128xf32>
    %25 = tpu.concatenate %23, %24 in 0 : vector<16x128xf32>, vector<144x128xf32> -> vector<160x128xf32>
    %26 = arith.maximumf %22, %25 : vector<160x128xf32>
    %cst_12 = arith.constant 0.000000e+00 : f32
    %27 = vector.broadcast %cst_12 : f32 to vector<16x128xf32>
    %28 = vector.extract_strided_slice %22 {offsets = [16, 0], sizes = [144, 128], strides = [1, 1]} : vector<160x128xf32> to vector<144x128xf32>
    %29 = tpu.concatenate %28, %27 in 0 : vector<144x128xf32>, vector<16x128xf32> -> vector<160x128xf32>
    %30 = arith.maximumf %26, %29 : vector<160x128xf32>
    %cst_13 = arith.constant 0.000000e+00 : f32
    %31 = vector.broadcast %cst_13 : f32 to vector<16x128xf32>
    %32 = vector.extract_strided_slice %30 {offsets = [0, 0], sizes = [16, 128], strides = [1, 1]} : vector<160x128xf32> to vector<16x128xf32>
    %c0_14 = arith.constant 0 : index
    %c0_15 = arith.constant 0 : index
    %c0_16 = arith.constant 0 : index
    %33 = vector.load %arg5[%c0_14, %c0_15, %c0_16] : memref<10x1x128xf32, #tpu.memory_space<vmem>>, vector<1x1x128xf32>
    %34 = vector.shape_cast %33 : vector<1x1x128xf32> to vector<1x128xf32>
    %35 = vector.broadcast %34 : vector<1x128xf32> to vector<16x128xf32>
    %36 = arith.mulf %32, %35 : vector<16x128xf32>
    %37 = arith.addf %31, %36 : vector<16x128xf32>
    %38 = vector.extract_strided_slice %30 {offsets = [16, 0], sizes = [16, 128], strides = [1, 1]} : vector<160x128xf32> to vector<16x128xf32>
    %c1 = arith.constant 1 : index
    %c0_17 = arith.constant 0 : index
    %c0_18 = arith.constant 0 : index
    %39 = vector.load %arg5[%c1, %c0_17, %c0_18] : memref<10x1x128xf32, #tpu.memory_space<vmem>>, vector<1x1x128xf32>
    %40 = vector.shape_cast %39 : vector<1x1x128xf32> to vector<1x128xf32>
    %41 = vector.broadcast %40 : vector<1x128xf32> to vector<16x128xf32>
    %42 = arith.mulf %38, %41 : vector<16x128xf32>
    %43 = arith.addf %37, %42 : vector<16x128xf32>
    %44 = vector.extract_strided_slice %30 {offsets = [32, 0], sizes = [16, 128], strides = [1, 1]} : vector<160x128xf32> to vector<16x128xf32>
    %c2 = arith.constant 2 : index
    %c0_19 = arith.constant 0 : index
    %c0_20 = arith.constant 0 : index
    %45 = vector.load %arg5[%c2, %c0_19, %c0_20] : memref<10x1x128xf32, #tpu.memory_space<vmem>>, vector<1x1x128xf32>
    %46 = vector.shape_cast %45 : vector<1x1x128xf32> to vector<1x128xf32>
    %47 = vector.broadcast %46 : vector<1x128xf32> to vector<16x128xf32>
    %48 = arith.mulf %44, %47 : vector<16x128xf32>
    %49 = arith.addf %43, %48 : vector<16x128xf32>
    %50 = vector.extract_strided_slice %30 {offsets = [48, 0], sizes = [16, 128], strides = [1, 1]} : vector<160x128xf32> to vector<16x128xf32>
    %c3 = arith.constant 3 : index
    %c0_21 = arith.constant 0 : index
    %c0_22 = arith.constant 0 : index
    %51 = vector.load %arg5[%c3, %c0_21, %c0_22] : memref<10x1x128xf32, #tpu.memory_space<vmem>>, vector<1x1x128xf32>
    %52 = vector.shape_cast %51 : vector<1x1x128xf32> to vector<1x128xf32>
    %53 = vector.broadcast %52 : vector<1x128xf32> to vector<16x128xf32>
    %54 = arith.mulf %50, %53 : vector<16x128xf32>
    %55 = arith.addf %49, %54 : vector<16x128xf32>
    %56 = vector.extract_strided_slice %30 {offsets = [64, 0], sizes = [16, 128], strides = [1, 1]} : vector<160x128xf32> to vector<16x128xf32>
    %c4 = arith.constant 4 : index
    %c0_23 = arith.constant 0 : index
    %c0_24 = arith.constant 0 : index
    %57 = vector.load %arg5[%c4, %c0_23, %c0_24] : memref<10x1x128xf32, #tpu.memory_space<vmem>>, vector<1x1x128xf32>
    %58 = vector.shape_cast %57 : vector<1x1x128xf32> to vector<1x128xf32>
    %59 = vector.broadcast %58 : vector<1x128xf32> to vector<16x128xf32>
    %60 = arith.mulf %56, %59 : vector<16x128xf32>
    %61 = arith.addf %55, %60 : vector<16x128xf32>
    %62 = vector.extract_strided_slice %30 {offsets = [80, 0], sizes = [16, 128], strides = [1, 1]} : vector<160x128xf32> to vector<16x128xf32>
    %c5 = arith.constant 5 : index
    %c0_25 = arith.constant 0 : index
    %c0_26 = arith.constant 0 : index
    %63 = vector.load %arg5[%c5, %c0_25, %c0_26] : memref<10x1x128xf32, #tpu.memory_space<vmem>>, vector<1x1x128xf32>
    %64 = vector.shape_cast %63 : vector<1x1x128xf32> to vector<1x128xf32>
    %65 = vector.broadcast %64 : vector<1x128xf32> to vector<16x128xf32>
    %66 = arith.mulf %62, %65 : vector<16x128xf32>
    %67 = arith.addf %61, %66 : vector<16x128xf32>
    %68 = vector.extract_strided_slice %30 {offsets = [96, 0], sizes = [16, 128], strides = [1, 1]} : vector<160x128xf32> to vector<16x128xf32>
    %c6 = arith.constant 6 : index
    %c0_27 = arith.constant 0 : index
    %c0_28 = arith.constant 0 : index
    %69 = vector.load %arg5[%c6, %c0_27, %c0_28] : memref<10x1x128xf32, #tpu.memory_space<vmem>>, vector<1x1x128xf32>
    %70 = vector.shape_cast %69 : vector<1x1x128xf32> to vector<1x128xf32>
    %71 = vector.broadcast %70 : vector<1x128xf32> to vector<16x128xf32>
    %72 = arith.mulf %68, %71 : vector<16x128xf32>
    %73 = arith.addf %67, %72 : vector<16x128xf32>
    %74 = vector.extract_strided_slice %30 {offsets = [112, 0], sizes = [16, 128], strides = [1, 1]} : vector<160x128xf32> to vector<16x128xf32>
    %c7 = arith.constant 7 : index
    %c0_29 = arith.constant 0 : index
    %c0_30 = arith.constant 0 : index
    %75 = vector.load %arg5[%c7, %c0_29, %c0_30] : memref<10x1x128xf32, #tpu.memory_space<vmem>>, vector<1x1x128xf32>
    %76 = vector.shape_cast %75 : vector<1x1x128xf32> to vector<1x128xf32>
    %77 = vector.broadcast %76 : vector<1x128xf32> to vector<16x128xf32>
    %78 = arith.mulf %74, %77 : vector<16x128xf32>
    %79 = arith.addf %73, %78 : vector<16x128xf32>
    %80 = vector.extract_strided_slice %30 {offsets = [128, 0], sizes = [16, 128], strides = [1, 1]} : vector<160x128xf32> to vector<16x128xf32>
    %c8 = arith.constant 8 : index
    %c0_31 = arith.constant 0 : index
    %c0_32 = arith.constant 0 : index
    %81 = vector.load %arg5[%c8, %c0_31, %c0_32] : memref<10x1x128xf32, #tpu.memory_space<vmem>>, vector<1x1x128xf32>
    %82 = vector.shape_cast %81 : vector<1x1x128xf32> to vector<1x128xf32>
    %83 = vector.broadcast %82 : vector<1x128xf32> to vector<16x128xf32>
    %84 = arith.mulf %80, %83 : vector<16x128xf32>
    %85 = arith.addf %79, %84 : vector<16x128xf32>
    %86 = vector.extract_strided_slice %30 {offsets = [144, 0], sizes = [16, 128], strides = [1, 1]} : vector<160x128xf32> to vector<16x128xf32>
    %c9 = arith.constant 9 : index
    %c0_33 = arith.constant 0 : index
    %c0_34 = arith.constant 0 : index
    %87 = vector.load %arg5[%c9, %c0_33, %c0_34] : memref<10x1x128xf32, #tpu.memory_space<vmem>>, vector<1x1x128xf32>
    %88 = vector.shape_cast %87 : vector<1x1x128xf32> to vector<1x128xf32>
    %89 = vector.broadcast %88 : vector<1x128xf32> to vector<16x128xf32>
    %90 = arith.mulf %86, %89 : vector<16x128xf32>
    %91 = arith.addf %85, %90 : vector<16x128xf32>
    %cst_35 = arith.constant dense<0.000000e+00> : vector<16xf32>
    %92 = vector.multi_reduction <add>, %91, %cst_35 [1] : vector<16x128xf32> to vector<16xf32>
    %93 = vector.shape_cast %92 : vector<16xf32> to vector<16x1xf32>
    %94 = vector.shape_cast %93 : vector<16x1xf32> to vector<16x1xf32>
    %95 = vector.broadcast %94 : vector<16x1xf32> to vector<16x128xf32>
    %c0_36 = arith.constant 0 : index
    %c0_37 = arith.constant 0 : index
    %96 = vector.load %arg6[%c0_36, %c0_37] : memref<1x128xf32, #tpu.memory_space<vmem>>, vector<1x128xf32>
    %97 = vector.broadcast %96 : vector<1x128xf32> to vector<16x128xf32>
    %98 = arith.addf %95, %97 : vector<16x128xf32>
    %c0_38 = arith.constant 0 : index
    %c0_39 = arith.constant 0 : index
    %99 = vector.load %arg7[%c0_38, %c0_39] : memref<16x128xf32, #tpu.memory_space<vmem>>, vector<16x128xf32>
    tpu.vector_store %arg7[%c0_38, %c0_39], %98 {strides = array<i32>} : memref<16x128xf32, #tpu.memory_space<vmem>>, vector<16x128xf32>,
    return
  }
  func.func @transform_0(%arg0: i32) -> (i32, i32, i32) {
    %c0_i32 = arith.constant 0 : i32
    %c0_i32_0 = arith.constant 0 : i32
    %c0_i32_1 = arith.constant 0 : i32
    return %c0_i32, %arg0, %c0_i32_0 : i32, i32, i32
  }
  func.func @transform_1(%arg0: i32) -> (i32, i32) {
    %c0_i32 = arith.constant 0 : i32
    %c0_i32_0 = arith.constant 0 : i32
    %c0_i32_1 = arith.constant 0 : i32
    return %c0_i32, %c0_i32_0 : i32, i32
  }
  func.func @transform_2(%arg0: i32) -> (i32, i32) {
    %c0_i32 = arith.constant 0 : i32
    %c0_i32_0 = arith.constant 0 : i32
    %c0_i32_1 = arith.constant 0 : i32
    return %c0_i32, %c0_i32_0 : i32, i32
  }
  func.func @transform_3(%arg0: i32) -> (i32, i32) {
    %c0_i32 = arith.constant 0 : i32
    %c0_i32_0 = arith.constant 0 : i32
    %c0_i32_1 = arith.constant 0 : i32
    return %c0_i32, %c0_i32_0 : i32, i32
  }
  func.func @transform_4(%arg0: i32) -> (i32, i32, i32) {
    %c0_i32 = arith.constant 0 : i32
    %c0_i32_0 = arith.constant 0 : i32
    %c0_i32_1 = arith.constant 0 : i32
    %c0_i32_2 = arith.constant 0 : i32
    return %c0_i32, %c0_i32_0, %c0_i32_1 : i32, i32, i32
  }
  func.func @transform_5(%arg0: i32) -> (i32, i32) {
    %c0_i32 = arith.constant 0 : i32
    %c0_i32_0 = arith.constant 0 : i32
    %c0_i32_1 = arith.constant 0 : i32
    return %c0_i32, %c0_i32_0 : i32, i32
  }
  func.func @transform_6(%arg0: i32) -> (i32, i32) {
    %c0_i32 = arith.constant 0 : i32
    %c0_i32_0 = arith.constant 0 : i32
    return %arg0, %c0_i32 : i32, i32
  }
}

</mosaic_0001>

<llo_original>
// kernel: efficient3d_head.1
$region0: #{efficient3d_head.1}
  #allocation0 [shape = 'u32[]', space=smem, size = 0x4, offset = 0x4, fixed_abs, tag = 'smem constant byte address 0x4 - core index']
  #allocation1 [shape = 'u32[72,128]{1,0:T(1,128)}', space=vmem, size = 0x9000, scoped, tag = 'internal scratch']
  %s0 = inlined_call_operand.vmem [shape: bf16[10,32,1280], index: 0, kind: input, shape index: {}]
  %s1 = inlined_call_operand.vmem [shape: bf16[1280,384], index: 1, kind: input, shape index: {}]
  %s2 = inlined_call_operand.vmem [shape: f32[1,128], index: 2, kind: input, shape index: {}]
  %s3 = inlined_call_operand.vmem [shape: f32[1,128], index: 3, kind: input, shape index: {}]
  %s4 = inlined_call_operand.vmem [shape: f32[10,1,128], index: 4, kind: input, shape index: {}]
  %s5 = inlined_call_operand.vmem [shape: f32[1,128], index: 5, kind: input, shape index: {}]
  %s6 = inlined_call_operand.vmem [shape: f32[32,128], index: 6, kind: output, shape index: {}]
  %s7 = sld [smem:[#allocation0]]
  $region80: #{efficient3d_head.1} parent=0
    _
  %s9 = ssub.s32 1, %s7
  %s10 = scalar_select 0, %s9, %s7
  $region1: #{efficient3d_head.1} parent=0
    #allocation2 [shape = 'u8[819200]{0}', space=vmem, size = 0xc8000, scoped, tag = 'input window, operand 0']
    loop: start=0, step=1, limit=4
    $region2: #{efficient3d_head.1} parent=1 // loop_pre_header
      _
    $region3: #{efficient3d_head.1} parent=1 // loop_header
      %s12 = sphi 0, %s16
      %p13 = scmp.ge.s32.totalorder %s12, 4
      %s22 = sphi 0, %s24
      %s25 = sphi 0, %s22
      %s26 = sphi 0, %s25
      %s42 = sphi 0, %s26
      %s46 = sphi 0, %s46
      %s48 = sphi 0, %s46
      %s49 = sphi 0, %s48
      %s63 = sphi 0, %s49
      %s67 = sphi 0, %s67
      %s69 = sphi 0, %s67
      %s70 = sphi 0, %s69
      %s84 = sphi 0, %s70
      %s88 = sphi 0, %s88
      %s90 = sphi 0, %s88
      %s91 = sphi 0, %s90
      %s105 = sphi 0, %s91
      %s109 = sphi 0, %s109
      %s111 = sphi 0, %s109
      %s112 = sphi 0, %s111
      %s126 = sphi 0, %s112
      %s130 = sphi 0, %s130
      %s132 = sphi 0, %s130
      %s133 = sphi 0, %s132
      %s147 = sphi 0, %s133
      %s153 = sphi 0, %s155
      %s156 = sphi 0, %s153
      %s157 = sphi 0, %s156
      %s173 = sphi 0, %s157
    $region4: #{efficient3d_head.1} parent=1 // loop_header_branch
      %15 = sbr.rel (%p13) target = $region8
    $region5: #{efficient3d_head.1} parent=1 // loop_body
      %s17 = ssub.s32 %s12, 1
      %s18 = ssub.s32 %s12, 2
      %s19 = sadd.s32 %s12, 1
      %s20 = ssub.s32 %s12, %s19
      %p21 = scmp.eq.s32.totalorder %s20, 0
      %s23 = sadd.s32 %s22, 1
      %s24 = scalar_select %p21, %s22, %s23
      %p27 = pneg %p21
      %p28 = scmp.eq.s32.totalorder %s12, 1
      %p29 = por %p27, %p28
      %p30 = scmp.ne.s32.totalorder %s22, %s25
      %p31 = scmp.eq.s32.totalorder %s12, 0
      %p32 = por %p30, %p31
      %p33 = scmp.ne.s32.totalorder %s22, %s25
      %p34 = scmp.eq.s32.totalorder %s17, 1
      %p35 = por %p33, %p34
      %p36 = scmp.ne.s32.totalorder %s25, %s26
      %p37 = scmp.eq.s32.totalorder %s17, 0
      %p38 = por %p36, %p37
      %p39 = scmp.ne.s32.totalorder %s25, %s26
      %p40 = scmp.eq.s32.totalorder %s18, 1
      %p41 = por %p39, %p40
      %p43 = scmp.ne.s32.totalorder %s26, %s42
      %p44 = scmp.eq.s32.totalorder %s18, 0
      %p45 = por %p43, %p44
      %s47 = sadd.s32 %s46, 1
      %p50 = scmp.eq.s32.totalorder %s12, 1
      %p51 = scmp.ne.s32.totalorder %s46, %s48
      %p52 = scmp.eq.s32.totalorder %s12, 0
      %p53 = por %p51, %p52
      %p54 = scmp.ne.s32.totalorder %s46, %s48
      %p55 = scmp.eq.s32.totalorder %s17, 1
      %p56 = por %p54, %p55
      %p57 = scmp.ne.s32.totalorder %s48, %s49
      %p58 = scmp.eq.s32.totalorder %s17, 0
      %p59 = por %p57, %p58
      %p60 = scmp.ne.s32.totalorder %s48, %s49
      %p61 = scmp.eq.s32.totalorder %s18, 1
      %p62 = por %p60, %p61
      %p64 = scmp.ne.s32.totalorder %s49, %s63
      %p65 = scmp.eq.s32.totalorder %s18, 0
      %p66 = por %p64, %p65
      %s68 = sadd.s32 %s67, 1
      %p71 = scmp.eq.s32.totalorder %s12, 1
      %p72 = scmp.ne.s32.totalorder %s67, %s69
      %p73 = scmp.eq.s32.totalorder %s12, 0
      %p74 = por %p72, %p73
      %p75 = scmp.ne.s32.totalorder %s67, %s69
      %p76 = scmp.eq.s32.totalorder %s17, 1
      %p77 = por %p75, %p76
      %p78 = scmp.ne.s32.totalorder %s69, %s70
      %p79 = scmp.eq.s32.totalorder %s17, 0
      %p80 = por %p78, %p79
      %p81 = scmp.ne.s32.totalorder %s69, %s70
      %p82 = scmp.eq.s32.totalorder %s18, 1
      %p83 = por %p81, %p82
      %p85 = scmp.ne.s32.totalorder %s70, %s84
      %p86 = scmp.eq.s32.totalorder %s18, 0
      %p87 = por %p85, %p86
      %s89 = sadd.s32 %s88, 1
      %p92 = scmp.eq.s32.totalorder %s12, 1
      %p93 = scmp.ne.s32.totalorder %s88, %s90
      %p94 = scmp.eq.s32.totalorder %s12, 0
      %p95 = por %p93, %p94
      %p96 = scmp.ne.s32.totalorder %s88, %s90
      %p97 = scmp.eq.s32.totalorder %s17, 1
      %p98 = por %p96, %p97
      %p99 = scmp.ne.s32.totalorder %s90, %s91
      %p100 = scmp.eq.s32.totalorder %s17, 0
      %p101 = por %p99, %p100
      %p102 = scmp.ne.s32.totalorder %s90, %s91
      %p103 = scmp.eq.s32.totalorder %s18, 1
      %p104 = por %p102, %p103
      %p106 = scmp.ne.s32.totalorder %s91, %s105
      %p107 = scmp.eq.s32.totalorder %s18, 0
      %p108 = por %p106, %p107
      %s110 = sadd.s32 %s109, 1
      %p113 = scmp.eq.s32.totalorder %s12, 1
      %p114 = scmp.ne.s32.totalorder %s109, %s111
      %p115 = scmp.eq.s32.totalorder %s12, 0
      %p116 = por %p114, %p115
      %p117 = scmp.ne.s32.totalorder %s109, %s111
      %p118 = scmp.eq.s32.totalorder %s17, 1
      %p119 = por %p117, %p118
      %p120 = scmp.ne.s32.totalorder %s111, %s112
      %p121 = scmp.eq.s32.totalorder %s17, 0
      %p122 = por %p120, %p121
      %p123 = scmp.ne.s32.totalorder %s111, %s112
      %p124 = scmp.eq.s32.totalorder %s18, 1
      %p125 = por %p123, %p124
      %p127 = scmp.ne.s32.totalorder %s112, %s126
      %p128 = scmp.eq.s32.totalorder %s18, 0
      %p129 = por %p127, %p128
      %s131 = sadd.s32 %s130, 1
      %p134 = scmp.eq.s32.totalorder %s12, 1
      %p135 = scmp.ne.s32.totalorder %s130, %s132
      %p136 = scmp.eq.s32.totalorder %s12, 0
      %p137 = por %p135, %p136
      %p138 = scmp.ne.s32.totalorder %s130, %s132
      %p139 = scmp.eq.s32.totalorder %s17, 1
      %p140 = por %p138, %p139
      %p141 = scmp.ne.s32.totalorder %s132, %s133
      %p142 = scmp.eq.s32.totalorder %s17, 0
      %p143 = por %p141, %p142
      %p144 = scmp.ne.s32.totalorder %s132, %s133
      %p145 = scmp.eq.s32.totalorder %s18, 1
      %p146 = por %p144, %p145
      %p148 = scmp.ne.s32.totalorder %s133, %s147
      %p149 = scmp.eq.s32.totalorder %s18, 0
      %p150 = por %p148, %p149
      %s151 = ssub.s32 %s12, %s19
      %p152 = scmp.eq.s32.totalorder %s151, 0
      %s154 = sadd.s32 %s153, 1
      %s155 = scalar_select %p152, %s153, %s154
      %p158 = pneg %p152
      %p159 = scmp.eq.s32.totalorder %s12, 1
      %p160 = por %p158, %p159
      %p161 = scmp.ne.s32.totalorder %s153, %s156
      %p162 = scmp.eq.s32.totalorder %s12, 0
      %p163 = por %p161, %p162
      %p164 = scmp.ne.s32.totalorder %s153, %s156
      %p165 = scmp.eq.s32.totalorder %s17, 1
      %p166 = por %p164, %p165
      %p167 = scmp.ne.s32.totalorder %s156, %s157
      %p168 = scmp.eq.s32.totalorder %s17, 0
      %p169 = por %p167, %p168
      %p170 = scmp.ne.s32.totalorder %s156, %s157
      %p171 = scmp.eq.s32.totalorder %s18, 1
      %p172 = por %p170, %p171
      %p174 = scmp.ne.s32.totalorder %s157, %s173
      %p175 = scmp.eq.s32.totalorder %s18, 0
      %p176 = por %p174, %p175
      %p177 = scmp.le.s32.totalorder 1, %s12
      %p178 = scmp.lt.s32.totalorder %s12, 3
      %p179 = pnand %p177, %p178
      %p180 = pneg %p179
      // Predicated region
      $region9: #{efficient3d_head.1} parent=5 // pred_check
        _
      $region10: #{efficient3d_head.1} parent=5 // pred_check_branch
        %182 = sbr.rel (%p179) target = $region12
      $region11: #{efficient3d_head.1} parent=5 // pred_region
        %s183 = ssub.s32 %s12, 1
        // Predicated region
        $region13: #{efficient3d_head.1} parent=11 // pred_check
          %p184 = pneg %p59
        $region14: #{efficient3d_head.1} parent=11 // pred_check_branch
          %186 = sbr.rel (%p184) target = $region16
        $region15: #{efficient3d_head.1} parent=11 // pred_region
          _
        $region16: #{efficient3d_head.1} parent=11 // pred_fallthru
          _
        // Predicated region
        $region17: #{efficient3d_head.1} parent=11 // pred_check
          %p187 = pneg %p80
        $region18: #{efficient3d_head.1} parent=11 // pred_check_branch
          %189 = sbr.rel (%p187) target = $region20
        $region19: #{efficient3d_head.1} parent=11 // pred_region
          _
        $region20: #{efficient3d_head.1} parent=11 // pred_fallthru
          _
        // Predicated region
        $region21: #{efficient3d_head.1} parent=11 // pred_check
          %p190 = pneg %p101
        $region22: #{efficient3d_head.1} parent=11 // pred_check_branch
          %192 = sbr.rel (%p190) target = $region24
        $region23: #{efficient3d_head.1} parent=11 // pred_region
          _
        $region24: #{efficient3d_head.1} parent=11 // pred_fallthru
          _
        // Predicated region
        $region25: #{efficient3d_head.1} parent=11 // pred_check
          %p193 = pneg %p122
        $region26: #{efficient3d_head.1} parent=11 // pred_check_branch
          %195 = sbr.rel (%p193) target = $region28
        $region27: #{efficient3d_head.1} parent=11 // pred_region
          _
        $region28: #{efficient3d_head.1} parent=11 // pred_fallthru
          _
        // Predicated region
        $region29: #{efficient3d_head.1} parent=11 // pred_check
          %p196 = pneg %p143
        $region30: #{efficient3d_head.1} parent=11 // pred_check_branch
          %198 = sbr.rel (%p196) target = $region32
        $region31: #{efficient3d_head.1} parent=11 // pred_region
          _
        $region32: #{efficient3d_head.1} parent=11 // pred_fallthru
          _
      $region12: #{efficient3d_head.1} parent=5 // pred_fallthru
        _
      %p199 = scmp.lt.s32.totalorder %s12, 2
      // Predicated region
      $region33: #{efficient3d_head.1} parent=5 // pred_check
        %p200 = pneg %p199
      $region34: #{efficient3d_head.1} parent=5 // pred_check_branch
        %202 = sbr.rel (%p200) target = $region36
      $region35: #{efficient3d_head.1} parent=5 // pred_region
        // Predicated region
        $region37: #{efficient3d_head.1} parent=35 // pred_check
          %p203 = pneg %p32
        $region38: #{efficient3d_head.1} parent=35 // pred_check_branch
          %205 = sbr.rel (%p203) target = $region40
        $region39: #{efficient3d_head.1} parent=35 // pred_region
          %s206 = sand.u32 %s22, 1
          %s207 = sand.u32 %s22, 1
          %s208 = smul.addr %s207, 800
          %s209 = scalar_lea.vmem [#allocation2], %s208
          %s210 = smul.u32 2, %s12
          %s211 = smul.addr %s210, 10
          %s212 = smul.addr %s211, 4
          %s213 = scalar_lea.vmem %s0, %s212
          // Predicated region
          $region41: #{efficient3d_head.1} parent=39 // pred_check
            _
          $region42: #{efficient3d_head.1} parent=39 // pred_check_branch
            %215 = sbr.rel (0) target = $region44
          $region43: #{efficient3d_head.1} parent=39 // pred_region
            // Predicated region
            $region45: #{efficient3d_head.1} parent=43 // pred_check
              _
            $region46: #{efficient3d_head.1} parent=43 // pred_check_branch
              %217 = sbr.rel (0) target = $region48
            $region47: #{efficient3d_head.1} parent=43 // pred_region
              loop: start=0, step=1, limit=1
              $region49: #{efficient3d_head.1} parent=47 // loop_pre_header
                _
              $region50: #{efficient3d_head.1} parent=47 // loop_header
                %s219 = sphi 0, %s223
                %p220 = scmp.ge.s32.totalorder %s219, 1
                %s224 = sphi %s213, %s213
                %s225 = sphi %s209, %s209
              $region51: #{efficient3d_head.1} parent=47 // loop_header_branch
                %222 = sbr.rel (%p220) target = $region55
              $region52: #{efficient3d_head.1} parent=47 // loop_body
                %v226 = vld [vmem:[%s224] sm:$0xff]
                %227 = vst [vmem:[%s225] sm:$0xff] %v226
                %v228 = vld [vmem:[%s224 + $0x8] sm:$0xff]
                %229 = vst [vmem:[%s225 + $0x8] sm:$0xff] %v228
                %v230 = vld [vmem:[%s224 + $0x10] sm:$0xff]
                %231 = vst [vmem:[%s225 + $0x10] sm:$0xff] %v230
                %v232 = vld [vmem:[%s224 + $0x18] sm:$0xff]
                %233 = vst [vmem:[%s225 + $0x18] sm:$0xff] %v232
                %v234 = vld [vmem:[%s224 + $0x20] sm:$0xff]
                %235 = vst [vmem:[%s225 + $0x20] sm:$0xff] %v234
                %v236 = vld [vmem:[%s224 + $0x28] sm:$0xff]
                %237 = vst [vmem:[%s225 + $0x28] sm:$0xff] %v236
                %v238 = vld [vmem:[%s224 + $0x30] sm:$0xff]
                %239 = vst [vmem:[%s225 + $0x30] sm:$0xff] %v238
                %v240 = vld [vmem:[%s224 + $0x38] sm:$0xff]
                %241 = vst [vmem:[%s225 + $0x38] sm:$0xff] %v240
                %v242 = vld [vmem:[%s224 + $0x40] sm:$0xff]
                %243 = vst [vmem:[%s225 + $0x40] sm:$0xff] %v242
                %v244 = vld [vmem:[%s224 + $0x48] sm:$0xff]
                %245 = vst [vmem:[%s225 + $0x48] sm:$0xff] %v244
                %v246 = vld [vmem:[%s224 + $0xa0] sm:$0xff]
                %247 = vst [vmem:[%s225 + $0x50] sm:$0xff] %v246
                %v248 = vld [vmem:[%s224 + $0xa8] sm:$0xff]
                %249 = vst [vmem:[%s225 + $0x58] sm:$0xff] %v248
                %v250 = vld [vmem:[%s224 + $0xb0] sm:$0xff]
                %251 = vst [vmem:[%s225 + $0x60] sm:$0xff] %v250
                %v252 = vld [vmem:[%s224 + $0xb8] sm:$0xff]
                %253 = vst [vmem:[%s225 + $0x68] sm:$0xff] %v252
                %v254 = vld [vmem:[%s224 + $0xc0] sm:$0xff]
                %255 = vst [vmem:[%s225 + $0x70] sm:$0xff] %v254
                %v256 = vld [vmem:[%s224 + $0xc8] sm:$0xff]
                %257 = vst [vmem:[%s225 + $0x78] sm:$0xff] %v256
                %v258 = vld [vmem:[%s224 + $0xd0] sm:$0xff]
                %259 = vst [vmem:[%s225 + $0x80] sm:$0xff] %v258
                %v260 = vld [vmem:[%s224 + $0xd8] sm:$0xff]
                %261 = vst [vmem:[%s225 + $0x88] sm:$0xff] %v260
                %v262 = vld [vmem:[%s224 + $0xe0] sm:$0xff]
                %263 = vst [vmem:[%s225 + $0x90] sm:$0xff] %v262
                %v264 = vld [vmem:[%s224 + $0xe8] sm:$0xff]
                %265 = vst [vmem:[%s225 + $0x98] sm:$0xff] %v264
                %v266 = vld [vmem:[%s224 + $0x140] sm:$0xff]
                %267 = vst [vmem:[%s225 + $0xa0] sm:$0xff] %v266
                %v268 = vld [vmem:[%s224 + $0x148] sm:$0xff]
                %269 = vst [vmem:[%s225 + $0xa8] sm:$0xff] %v268
                %v270 = vld [vmem:[%s224 + $0x150] sm:$0xff]
                %271 = vst [vmem:[%s225 + $0xb0] sm:$0xff] %v270
                %v272 = vld [vmem:[%s224 + $0x158] sm:$0xff]
                %273 = vst [vmem:[%s225 + $0xb8] sm:$0xff] %v272
                %v274 = vld [vmem:[%s224 + $0x160] sm:$0xff]
                %275 = vst [vmem:[%s225 + $0xc0] sm:$0xff] %v274
                %v276 = vld [vmem:[%s224 + $0x168] sm:$0xff]
                %277 = vst [vmem:[%s225 + $0xc8] sm:$0xff] %v276
                %v278 = vld [vmem:[%s224 + $0x170] sm:$0xff]
                %279 = vst [vmem:[%s225 + $0xd0] sm:$0xff] %v278
                %v280 = vld [vmem:[%s224 + $0x178] sm:$0xff]
                %281 = vst [vmem:[%s225 + $0xd8] sm:$0xff] %v280
                %v282 = vld [vmem:[%s224 + $0x180] sm:$0xff]
                %283 = vst [vmem:[%s225 + $0xe0] sm:$0xff] %v282
                %v284 = vld [vmem:[%s224 + $0x188] sm:$0xff]
                %285 = vst [vmem:[%s225 + $0xe8] sm:$0xff] %v284
                %v286 = vld [vmem:[%s224 + $0x1e0] sm:$0xff]
                %287 = vst [vmem:[%s225 + $0xf0] sm:$0xff] %v286
                %v288 = vld [vmem:[%s224 + $0x1e8] sm:$0xff]
                %289 = vst [vmem:[%s225 + $0xf8] sm:$0xff] %v288
                %v290 = vld [vmem:[%s224 + $0x1f0] sm:$0xff]
                %291 = vst [vmem:[%s225 + $0x100] sm:$0xff] %v290
                %v292 = vld [vmem:[%s224 + $0x1f8] sm:$0xff]
                %293 = vst [vmem:[%s225 + $0x108] sm:$0xff] %v292
                %v294 = vld [vmem:[%s224 + $0x200] sm:$0xff]
                %295 = vst [vmem:[%s225 + $0x110] sm:$0xff] %v294
                %v296 = vld [vmem:[%s224 + $0x208] sm:$0xff]
                %297 = vst [vmem:[%s225 + $0x118] sm:$0xff] %v296
                %v298 = vld [vmem:[%s224 + $0x210] sm:$0xff]
                %299 = vst [vmem:[%s225 + $0x120] sm:$0xff] %v298
                %v300 = vld [vmem:[%s224 + $0x218] sm:$0xff]
                %301 = vst [vmem:[%s225 + $0x128] sm:$0xff] %v300
                %v302 = vld [vmem:[%s224 + $0x220] sm:$0xff]
                %303 = vst [vmem:[%s225 + $0x130] sm:$0xff] %v302
                %v304 = vld [vmem:[%s224 + $0x228] sm:$0xff]
                %305 = vst [vmem:[%s225 + $0x138] sm:$0xff] %v304
                %v306 = vld [vmem:[%s224 + $0x280] sm:$0xff]
                %307 = vst [vmem:[%s225 + $0x140] sm:$0xff] %v306
                %v308 = vld [vmem:[%s224 + $0x288] sm:$0xff]
                %309 = vst [vmem:[%s225 + $0x148] sm:$0xff] %v308
                %v310 = vld [vmem:[%s224 + $0x290] sm:$0xff]
                %311 = vst [vmem:[%s225 + $0x150] sm:$0xff] %v310
                %v312 = vld [vmem:[%s224 + $0x298] sm:$0xff]
                %313 = vst [vmem:[%s225 + $0x158] sm:$0xff] %v312
                %v314 = vld [vmem:[%s224 + $0x2a0] sm:$0xff]
                %315 = vst [vmem:[%s225 + $0x160] sm:$0xff] %v314
                %v316 = vld [vmem:[%s224 + $0x2a8] sm:$0xff]
                %317 = vst [vmem:[%s225 + $0x168] sm:$0xff] %v316
                %v318 = vld [vmem:[%s224 + $0x2b0] sm:$0xff]
                %319 = vst [vmem:[%s225 + $0x170] sm:$0xff] %v318
                %v320 = vld [vmem:[%s224 + $0x2b8] sm:$0xff]
                %321 = vst [vmem:[%s225 + $0x178] sm:$0xff] %v320
                %v322 = vld [vmem:[%s224 + $0x2c0] sm:$0xff]
                %323 = vst [vmem:[%s225 + $0x180] sm:$0xff] %v322
                %v324 = vld [vmem:[%s224 + $0x2c8] sm:$0xff]
                %325 = vst [vmem:[%s225 + $0x188] sm:$0xff] %v324
                %v326 = vld [vmem:[%s224 + $0x320] sm:$0xff]
                %327 = vst [vmem:[%s225 + $0x190] sm:$0xff] %v326
                %v328 = vld [vmem:[%s224 + $0x328] sm:$0xff]
                %329 = vst [vmem:[%s225 + $0x198] sm:$0xff] %v328
                %v330 = vld [vmem:[%s224 + $0x330] sm:$0xff]
                %331 = vst [vmem:[%s225 + $0x1a0] sm:$0xff] %v330
                %v332 = vld [vmem:[%s224 + $0x338] sm:$0xff]
                %333 = vst [vmem:[%s225 + $0x1a8] sm:$0xff] %v332
                %v334 = vld [vmem:[%s224 + $0x340] sm:$0xff]
                %335 = vst [vmem:[%s225 + $0x1b0] sm:$0xff] %v334
                %v336 = vld [vmem:[%s224 + $0x348] sm:$0xff]
                %337 = vst [vmem:[%s225 + $0x1b8] sm:$0xff] %v336
                %v338 = vld [vmem:[%s224 + $0x350] sm:$0xff]
                %339 = vst [vmem:[%s225 + $0x1c0] sm:$0xff] %v338
                %v340 = vld [vmem:[%s224 + $0x358] sm:$0xff]
                %341 = vst [vmem:[%s225 + $0x1c8] sm:$0xff] %v340
                %v342 = vld [vmem:[%s224 + $0x360] sm:$0xff]
                %343 = vst [vmem:[%s225 + $0x1d0] sm:$0xff] %v342
                %v344 = vld [vmem:[%s224 + $0x368] sm:$0xff]
                %345 = vst [vmem:[%s225 + $0x1d8] sm:$0xff] %v344
                %v346 = vld [vmem:[%s224 + $0x3c0] sm:$0xff]
                %347 = vst [vmem:[%s225 + $0x1e0] sm:$0xff] %v346
                %v348 = vld [vmem:[%s224 + $0x3c8] sm:$0xff]
                %349 = vst [vmem:[%s225 + $0x1e8] sm:$0xff] %v348
                %v350 = vld [vmem:[%s224 + $0x3d0] sm:$0xff]
                %351 = vst [vmem:[%s225 + $0x1f0] sm:$0xff] %v350
                %v352 = vld [vmem:[%s224 + $0x3d8] sm:$0xff]
                %353 = vst [vmem:[%s225 + $0x1f8] sm:$0xff] %v352
                %v354 = vld [vmem:[%s224 + $0x3e0] sm:$0xff]
                %355 = vst [vmem:[%s225 + $0x200] sm:$0xff] %v354
                %v356 = vld [vmem:[%s224 + $0x3e8] sm:$0xff]
                %357 = vst [vmem:[%s225 + $0x208] sm:$0xff] %v356
                %v358 = vld [vmem:[%s224 + $0x3f0] sm:$0xff]
                %359 = vst [vmem:[%s225 + $0x210] sm:$0xff] %v358
                %v360 = vld [vmem:[%s224 + $0x3f8] sm:$0xff]
                %361 = vst [vmem:[%s225 + $0x218] sm:$0xff] %v360
                %v362 = vld [vmem:[%s224 + $0x400] sm:$0xff]
                %363 = vst [vmem:[%s225 + $0x220] sm:$0xff] %v362
                %v364 = vld [vmem:[%s224 + $0x408] sm:$0xff]
                %365 = vst [vmem:[%s225 + $0x228] sm:$0xff] %v364
                %v366 = vld [vmem:[%s224 + $0x460] sm:$0xff]
                %367 = vst [vmem:[%s225 + $0x230] sm:$0xff] %v366
                %v368 = vld [vmem:[%s224 + $0x468] sm:$0xff]
                %369 = vst [vmem:[%s225 + $0x238] sm:$0xff] %v368
                %v370 = vld [vmem:[%s224 + $0x470] sm:$0xff]
                %371 = vst [vmem:[%s225 + $0x240] sm:$0xff] %v370
                %v372 = vld [vmem:[%s224 + $0x478] sm:$0xff]
                %373 = vst [vmem:[%s225 + $0x248] sm:$0xff] %v372
                %v374 = vld [vmem:[%s224 + $0x480] sm:$0xff]
                %375 = vst [vmem:[%s225 + $0x250] sm:$0xff] %v374
                %v376 = vld [vmem:[%s224 + $0x488] sm:$0xff]
                %377 = vst [vmem:[%s225 + $0x258] sm:$0xff] %v376
                %v378 = vld [vmem:[%s224 + $0x490] sm:$0xff]
                %379 = vst [vmem:[%s225 + $0x260] sm:$0xff] %v378
                %v380 = vld [vmem:[%s224 + $0x498] sm:$0xff]
                %381 = vst [vmem:[%s225 + $0x268] sm:$0xff] %v380
                %v382 = vld [vmem:[%s224 + $0x4a0] sm:$0xff]
                %383 = vst [vmem:[%s225 + $0x270] sm:$0xff] %v382
                %v384 = vld [vmem:[%s224 + $0x4a8] sm:$0xff]
                %385 = vst [vmem:[%s225 + $0x278] sm:$0xff] %v384
                %v386 = vld [vmem:[%s224 + $0x500] sm:$0xff]
                %387 = vst [vmem:[%s225 + $0x280] sm:$0xff] %v386
                %v388 = vld [vmem:[%s224 + $0x508] sm:$0xff]
                %389 = vst [vmem:[%s225 + $0x288] sm:$0xff] %v388
                %v390 = vld [vmem:[%s224 + $0x510] sm:$0xff]
                %391 = vst [vmem:[%s225 + $0x290] sm:$0xff] %v390
                %v392 = vld [vmem:[%s224 + $0x518] sm:$0xff]
                %393 = vst [vmem:[%s225 + $0x298] sm:$0xff] %v392
                %v394 = vld [vmem:[%s224 + $0x520] sm:$0xff]
                %395 = vst [vmem:[%s225 + $0x2a0] sm:$0xff] %v394
                %v396 = vld [vmem:[%s224 + $0x528] sm:$0xff]
                %397 = vst [vmem:[%s225 + $0x2a8] sm:$0xff] %v396
                %v398 = vld [vmem:[%s224 + $0x530] sm:$0xff]
                %399 = vst [vmem:[%s225 + $0x2b0] sm:$0xff] %v398
                %v400 = vld [vmem:[%s224 + $0x538] sm:$0xff]
                %401 = vst [vmem:[%s225 + $0x2b8] sm:$0xff] %v400
                %v402 = vld [vmem:[%s224 + $0x540] sm:$0xff]
                %403 = vst [vmem:[%s225 + $0x2c0] sm:$0xff] %v402
                %v404 = vld [vmem:[%s224 + $0x548] sm:$0xff]
                %405 = vst [vmem:[%s225 + $0x2c8] sm:$0xff] %v404
                %v406 = vld [vmem:[%s224 + $0x5a0] sm:$0xff]
                %407 = vst [vmem:[%s225 + $0x2d0] sm:$0xff] %v406
                %v408 = vld [vmem:[%s224 + $0x5a8] sm:$0xff]
                %409 = vst [vmem:[%s225 + $0x2d8] sm:$0xff] %v408
                %v410 = vld [vmem:[%s224 + $0x5b0] sm:$0xff]
                %411 = vst [vmem:[%s225 + $0x2e0] sm:$0xff] %v410
                %v412 = vld [vmem:[%s224 + $0x5b8] sm:$0xff]
                %413 = vst [vmem:[%s225 + $0x2e8] sm:$0xff] %v412
                %v414 = vld [vmem:[%s224 + $0x5c0] sm:$0xff]
                %415 = vst [vmem:[%s225 + $0x2f0] sm:$0xff] %v414
                %v416 = vld [vmem:[%s224 + $0x5c8] sm:$0xff]
                %417 = vst [vmem:[%s225 + $0x2f8] sm:$0xff] %v416
                %v418 = vld [vmem:[%s224 + $0x5d0] sm:$0xff]
                %419 = vst [vmem:[%s225 + $0x300] sm:$0xff] %v418
                %v420 = vld [vmem:[%s224 + $0x5d8] sm:$0xff]
                %421 = vst [vmem:[%s225 + $0x308] sm:$0xff] %v420
                %v422 = vld [vmem:[%s224 + $0x5e0] sm:$0xff]
                %423 = vst [vmem:[%s225 + $0x310] sm:$0xff] %v422
                %v424 = vld [vmem:[%s224 + $0x5e8] sm:$0xff]
                %425 = vst [vmem:[%s225 + $0x318] sm:$0xff] %v424
              $region53: #{efficient3d_head.1} parent=47 // loop_footer
                %s223 = sadd.s32 1, %s219
              $region54: #{efficient3d_head.1} parent=47 // loop_footer_branch
                %218 = sbr.rel target = $region50
              $region55: #{efficient3d_head.1} parent=47 // loop_exit
                _
            $region48: #{efficient3d_head.1} parent=43 // pred_fallthru
              _
            // Predicated region
            $region56: #{efficient3d_head.1} parent=43 // pred_check
              _
            $region57: #{efficient3d_head.1} parent=43 // pred_check_branch
              %427 = sbr.rel target = $region59
            $region58: #{efficient3d_head.1} parent=43 // pred_region
              _
            $region59: #{efficient3d_head.1} parent=43 // pred_fallthru
              _
          $region44: #{efficient3d_head.1} parent=39 // pred_fallthru
            _
          %428 = vnop
        $region40: #{efficient3d_head.1} parent=35 // pred_fallthru
          _
      $region36: #{efficient3d_head.1} parent=5 // pred_fallthru
        _
      %p429 = scmp.le.s32.totalorder 1, %s12
      %p430 = scmp.lt.s32.totalorder %s12, 3
      %p431 = pnand %p429, %p430
      %p432 = pneg %p431
      // Predicated region
      $region60: #{efficient3d_head.1} parent=5 // pred_check
        _
      $region61: #{efficient3d_head.1} parent=5 // pred_check_branch
        %434 = sbr.rel (%p431) target = $region63
      $region62: #{efficient3d_head.1} parent=5 // pred_region
        %s435 = ssub.s32 %s12, 1
        %s436 = sand.u32 %s25, 1
        %s437 = sand.u32 %s25, 1
        %s438 = smul.addr %s437, 800
        %s439 = scalar_lea.vmem [#allocation2], %s438
        // Predicated region
        $region64: #{efficient3d_head.1} parent=62 // pred_check
          %p440 = pneg %p38
        $region65: #{efficient3d_head.1} parent=62 // pred_check_branch
          %442 = sbr.rel (%p440) target = $region67
        $region66: #{efficient3d_head.1} parent=62 // pred_region
          _
        $region67: #{efficient3d_head.1} parent=62 // pred_fallthru
          _
        %s443 = sand.u32 %s25, 1
        %s444 = sand.u32 %s25, 1
        %s445 = smul.addr %s444, 800
        %s446 = scalar_lea.vmem [#allocation2], %s445
        %p447 = pneg %p38
        %p448 = pneg %p35
        %p449 = pneg %p59
        %p450 = pneg %p56
        %p451 = pneg %p80
        %p452 = pneg %p77
        %p453 = pneg %p101
        %p454 = pneg %p98
        %p455 = pneg %p122
        %p456 = pneg %p119
        %p457 = pneg %p143
        %p458 = pneg %p140
        %p459 = pneg %p169
        %p460 = pneg %p166
        %s461 = smul.u32 2, %s17
        %p462 = scmp.lt.s32.totalorder %s461, 3
        %s463 = scalar_select %p462, %s461, 3
        %s464 = smul.addr %s463, 8
        %s465 = scalar_lea.vmem %s6, %s464
        %s466 = smul.u32 2, %s17
        %s467 = smul.u32 2, %s17
        %p468 = scmp.lt.s32.totalorder %s467, 3
        %s469 = scalar_select %p468, %s467, 3
        %s470 = smul.addr %s469, 8
        %s471 = scalar_lea.vmem %s6, %s470
        %s472 = smul.u32 2, %s17
        %v473 = vld [vmem:[%s439] sm:$0xff]
        %v474 = vld [vmem:[%s439 + $0x8] sm:$0xff]
        %v475 = vld [vmem:[%s439 + $0x10] sm:$0xff]
        %v476 = vld [vmem:[%s439 + $0x18] sm:$0xff]
        %v477 = vld [vmem:[%s439 + $0x20] sm:$0xff]
        %v478 = vld [vmem:[%s439 + $0x28] sm:$0xff]
        %v479 = vld [vmem:[%s439 + $0x30] sm:$0xff]
        %v480 = vld [vmem:[%s439 + $0x38] sm:$0xff]
        %v481 = vld [vmem:[%s439 + $0x40] sm:$0xff]
        %v482 = vld [vmem:[%s439 + $0x48] sm:$0xff]
        %v483 = vld [vmem:[%s439 + $0x50] sm:$0xff]
        %v484 = vld [vmem:[%s439 + $0x58] sm:$0xff]
        %v485 = vld [vmem:[%s439 + $0x60] sm:$0xff]
        %v486 = vld [vmem:[%s439 + $0x68] sm:$0xff]
        %v487 = vld [vmem:[%s439 + $0x70] sm:$0xff]
        %v488 = vld [vmem:[%s439 + $0x78] sm:$0xff]
        %v489 = vld [vmem:[%s439 + $0x80] sm:$0xff]
        %v490 = vld [vmem:[%s439 + $0x88] sm:$0xff]
        %v491 = vld [vmem:[%s439 + $0x90] sm:$0xff]
        %v492 = vld [vmem:[%s439 + $0x98] sm:$0xff]
        %v493 = vld [vmem:[%s439 + $0xa0] sm:$0xff]
        %v494 = vld [vmem:[%s439 + $0xa8] sm:$0xff]
        %v495 = vld [vmem:[%s439 + $0xb0] sm:$0xff]
        %v496 = vld [vmem:[%s439 + $0xb8] sm:$0xff]
        %v497 = vld [vmem:[%s439 + $0xc0] sm:$0xff]
        %v498 = vld [vmem:[%s439 + $0xc8] sm:$0xff]
        %v499 = vld [vmem:[%s439 + $0xd0] sm:$0xff]
        %v500 = vld [vmem:[%s439 + $0xd8] sm:$0xff]
        %v501 = vld [vmem:[%s439 + $0xe0] sm:$0xff]
        %v502 = vld [vmem:[%s439 + $0xe8] sm:$0xff]
        %v503 = vld [vmem:[%s439 + $0xf0] sm:$0xff]
        %v504 = vld [vmem:[%s439 + $0xf8] sm:$0xff]
        %v505 = vld [vmem:[%s439 + $0x100] sm:$0xff]
        %v506 = vld [vmem:[%s439 + $0x108] sm:$0xff]
        %v507 = vld [vmem:[%s439 + $0x110] sm:$0xff]
        %v508 = vld [vmem:[%s439 + $0x118] sm:$0xff]
        %v509 = vld [vmem:[%s439 + $0x120] sm:$0xff]
        %v510 = vld [vmem:[%s439 + $0x128] sm:$0xff]
        %v511 = vld [vmem:[%s439 + $0x130] sm:$0xff]
        %v512 = vld [vmem:[%s439 + $0x138] sm:$0xff]
        %v513 = vld [vmem:[%s439 + $0x140] sm:$0xff]
        %v514 = vld [vmem:[%s439 + $0x148] sm:$0xff]
        %v515 = vld [vmem:[%s439 + $0x150] sm:$0xff]
        %v516 = vld [vmem:[%s439 + $0x158] sm:$0xff]
        %v517 = vld [vmem:[%s439 + $0x160] sm:$0xff]
        %v518 = vld [vmem:[%s439 + $0x168] sm:$0xff]
        %v519 = vld [vmem:[%s439 + $0x170] sm:$0xff]
        %v520 = vld [vmem:[%s439 + $0x178] sm:$0xff]
        %v521 = vld [vmem:[%s439 + $0x180] sm:$0xff]
        %v522 = vld [vmem:[%s439 + $0x188] sm:$0xff]
        %v523 = vld [vmem:[%s439 + $0x190] sm:$0xff]
        %v524 = vld [vmem:[%s439 + $0x198] sm:$0xff]
        %v525 = vld [vmem:[%s439 + $0x1a0] sm:$0xff]
        %v526 = vld [vmem:[%s439 + $0x1a8] sm:$0xff]
        %v527 = vld [vmem:[%s439 + $0x1b0] sm:$0xff]
        %v528 = vld [vmem:[%s439 + $0x1b8] sm:$0xff]
        %v529 = vld [vmem:[%s439 + $0x1c0] sm:$0xff]
        %v530 = vld [vmem:[%s439 + $0x1c8] sm:$0xff]
        %v531 = vld [vmem:[%s439 + $0x1d0] sm:$0xff]
        %v532 = vld [vmem:[%s439 + $0x1d8] sm:$0xff]
        %v533 = vld [vmem:[%s439 + $0x1e0] sm:$0xff]
        %v534 = vld [vmem:[%s439 + $0x1e8] sm:$0xff]
        %v535 = vld [vmem:[%s439 + $0x1f0] sm:$0xff]
        %v536 = vld [vmem:[%s439 + $0x1f8] sm:$0xff]
        %v537 = vld [vmem:[%s439 + $0x200] sm:$0xff]
        %v538 = vld [vmem:[%s439 + $0x208] sm:$0xff]
        %v539 = vld [vmem:[%s439 + $0x210] sm:$0xff]
        %v540 = vld [vmem:[%s439 + $0x218] sm:$0xff]
        %v541 = vld [vmem:[%s439 + $0x220] sm:$0xff]
        %v542 = vld [vmem:[%s439 + $0x228] sm:$0xff]
        %v543 = vld [vmem:[%s439 + $0x230] sm:$0xff]
        %v544 = vld [vmem:[%s439 + $0x238] sm:$0xff]
        %v545 = vld [vmem:[%s439 + $0x240] sm:$0xff]
        %v546 = vld [vmem:[%s439 + $0x248] sm:$0xff]
        %v547 = vld [vmem:[%s439 + $0x250] sm:$0xff]
        %v548 = vld [vmem:[%s439 + $0x258] sm:$0xff]
        %v549 = vld [vmem:[%s439 + $0x260] sm:$0xff]
        %v550 = vld [vmem:[%s439 + $0x268] sm:$0xff]
        %v551 = vld [vmem:[%s439 + $0x270] sm:$0xff]
        %v552 = vld [vmem:[%s439 + $0x278] sm:$0xff]
        %v553 = vld [vmem:[%s439 + $0x280] sm:$0xff]
        %v554 = vld [vmem:[%s439 + $0x288] sm:$0xff]
        %v555 = vld [vmem:[%s439 + $0x290] sm:$0xff]
        %v556 = vld [vmem:[%s439 + $0x298] sm:$0xff]
        %v557 = vld [vmem:[%s439 + $0x2a0] sm:$0xff]
        %v558 = vld [vmem:[%s439 + $0x2a8] sm:$0xff]
        %v559 = vld [vmem:[%s439 + $0x2b0] sm:$0xff]
        %v560 = vld [vmem:[%s439 + $0x2b8] sm:$0xff]
        %v561 = vld [vmem:[%s439 + $0x2c0] sm:$0xff]
        %v562 = vld [vmem:[%s439 + $0x2c8] sm:$0xff]
        %v563 = vld [vmem:[%s439 + $0x2d0] sm:$0xff]
        %v564 = vld [vmem:[%s439 + $0x2d8] sm:$0xff]
        %v565 = vld [vmem:[%s439 + $0x2e0] sm:$0xff]
        %v566 = vld [vmem:[%s439 + $0x2e8] sm:$0xff]
        %v567 = vld [vmem:[%s439 + $0x2f0] sm:$0xff]
        %v568 = vld [vmem:[%s439 + $0x2f8] sm:$0xff]
        %v569 = vld [vmem:[%s439 + $0x300] sm:$0xff]
        %v570 = vld [vmem:[%s439 + $0x308] sm:$0xff]
        %v571 = vld [vmem:[%s439 + $0x310] sm:$0xff]
        %v572 = vld [vmem:[%s439 + $0x318] sm:$0xff]
        %v573 = vld [vmem:[%s1] sm:$0xff]
        %v574 = vld [vmem:[%s1 + $0x8] sm:$0xf]
        %v575 = vld [vmem:[%s1 + $0xc] sm:$0xff]
        %v576 = vld [vmem:[%s1 + $0x14] sm:$0xf]
        %v577 = vld [vmem:[%s1 + $0x18] sm:$0xff]
        %v578 = vld [vmem:[%s1 + $0x20] sm:$0xf]
        %v579 = vld [vmem:[%s1 + $0x24] sm:$0xff]
        %v580 = vld [vmem:[%s1 + $0x2c] sm:$0xf]
        %v581 = vld [vmem:[%s1 + $0x30] sm:$0xff]
        %v582 = vld [vmem:[%s1 + $0x38] sm:$0xf]
        %v583 = vld [vmem:[%s1 + $0x3c] sm:$0xff]
        %v584 = vld [vmem:[%s1 + $0x44] sm:$0xf]
        %v585 = vld [vmem:[%s1 + $0x48] sm:$0xff]
        %v586 = vld [vmem:[%s1 + $0x50] sm:$0xf]
        %v587 = vld [vmem:[%s1 + $0x54] sm:$0xff]
        %v588 = vld [vmem:[%s1 + $0x5c] sm:$0xf]
        %v589 = vld [vmem:[%s1 + $0x60] sm:$0xff]
        %v590 = vld [vmem:[%s1 + $0x68] sm:$0xf]
        %v591 = vld [vmem:[%s1 + $0x6c] sm:$0xff]
        %v592 = vld [vmem:[%s1 + $0x74] sm:$0xf]
        %v593 = vld [vmem:[%s1 + $0x78] sm:$0xff]
        %v594 = vld [vmem:[%s1 + $0x80] sm:$0xf]
        %v595 = vld [vmem:[%s1 + $0x84] sm:$0xff]
        %v596 = vld [vmem:[%s1 + $0x8c] sm:$0xf]
        %v597 = vld [vmem:[%s1 + $0x90] sm:$0xff]
        %v598 = vld [vmem:[%s1 + $0x98] sm:$0xf]
        %v599 = vld [vmem:[%s1 + $0x9c] sm:$0xff]
        %v600 = vld [vmem:[%s1 + $0xa4] sm:$0xf]
        %v601 = vld [vmem:[%s1 + $0xa8] sm:$0xff]
        %v602 = vld [vmem:[%s1 + $0xb0] sm:$0xf]
        %v603 = vld [vmem:[%s1 + $0xb4] sm:$0xff]
        %v604 = vld [vmem:[%s1 + $0xbc] sm:$0xf]
        %v605 = vld [vmem:[%s1 + $0xc0] sm:$0xff]
        %v606 = vld [vmem:[%s1 + $0xc8] sm:$0xf]
        %v607 = vld [vmem:[%s1 + $0xcc] sm:$0xff]
        %v608 = vld [vmem:[%s1 + $0xd4] sm:$0xf]
        %v609 = vld [vmem:[%s1 + $0xd8] sm:$0xff]
        %v610 = vld [vmem:[%s1 + $0xe0] sm:$0xf]
        %v611 = vld [vmem:[%s1 + $0xe4] sm:$0xff]
        %v612 = vld [vmem:[%s1 + $0xec] sm:$0xf]
        %v613 = vld [vmem:[%s1 + $0xf0] sm:$0xff]
        %v614 = vld [vmem:[%s1 + $0xf8] sm:$0xf]
        %v615 = vld [vmem:[%s1 + $0xfc] sm:$0xff]
        %v616 = vld [vmem:[%s1 + $0x104] sm:$0xf]
        %v617 = vld [vmem:[%s1 + $0x108] sm:$0xff]
        %v618 = vld [vmem:[%s1 + $0x110] sm:$0xf]
        %v619 = vld [vmem:[%s1 + $0x114] sm:$0xff]
        %v620 = vld [vmem:[%s1 + $0x11c] sm:$0xf]
        %v621 = vld [vmem:[%s1 + $0x120] sm:$0xff]
        %v622 = vld [vmem:[%s1 + $0x128] sm:$0xf]
        %v623 = vld [vmem:[%s1 + $0x12c] sm:$0xff]
        %v624 = vld [vmem:[%s1 + $0x134] sm:$0xf]
        %v625 = vld [vmem:[%s1 + $0x138] sm:$0xff]
        %v626 = vld [vmem:[%s1 + $0x140] sm:$0xf]
        %v627 = vld [vmem:[%s1 + $0x144] sm:$0xff]
        %v628 = vld [vmem:[%s1 + $0x14c] sm:$0xf]
        %v629 = vld [vmem:[%s1 + $0x150] sm:$0xff]
        %v630 = vld [vmem:[%s1 + $0x158] sm:$0xf]
        %v631 = vld [vmem:[%s1 + $0x15c] sm:$0xff]
        %v632 = vld [vmem:[%s1 + $0x164] sm:$0xf]
        %v633 = vld [vmem:[%s1 + $0x168] sm:$0xff]
        %v634 = vld [vmem:[%s1 + $0x170] sm:$0xf]
        %v635 = vld [vmem:[%s1 + $0x174] sm:$0xff]
        %v636 = vld [vmem:[%s1 + $0x17c] sm:$0xf]
        %v637 = vld [vmem:[%s1 + $0x180] sm:$0xff]
        %v638 = vld [vmem:[%s1 + $0x188] sm:$0xf]
        %v639 = vld [vmem:[%s1 + $0x18c] sm:$0xff]
        %v640 = vld [vmem:[%s1 + $0x194] sm:$0xf]
        %v641 = vld [vmem:[%s1 + $0x198] sm:$0xff]
        %v642 = vld [vmem:[%s1 + $0x1a0] sm:$0xf]
        %v643 = vld [vmem:[%s1 + $0x1a4] sm:$0xff]
        %v644 = vld [vmem:[%s1 + $0x1ac] sm:$0xf]
        %v645 = vld [vmem:[%s1 + $0x1b0] sm:$0xff]
        %v646 = vld [vmem:[%s1 + $0x1b8] sm:$0xf]
        %v647 = vld [vmem:[%s1 + $0x1bc] sm:$0xff]
        %v648 = vld [vmem:[%s1 + $0x1c4] sm:$0xf]
        %v649 = vld [vmem:[%s1 + $0x1c8] sm:$0xff]
        %v650 = vld [vmem:[%s1 + $0x1d0] sm:$0xf]
        %v651 = vld [vmem:[%s1 + $0x1d4] sm:$0xff]
        %v652 = vld [vmem:[%s1 + $0x1dc] sm:$0xf]
        %v653 = vld [vmem:[%s1 + $0x1e0] sm:$0xff]
        %v654 = vld [vmem:[%s1 + $0x1e8] sm:$0xf]
        %v655 = vld [vmem:[%s1 + $0x1ec] sm:$0xff]
        %v656 = vld [vmem:[%s1 + $0x1f4] sm:$0xf]
        %v657 = vld [vmem:[%s1 + $0x1f8] sm:$0xff]
        %v658 = vld [vmem:[%s1 + $0x200] sm:$0xf]
        %v659 = vld [vmem:[%s1 + $0x204] sm:$0xff]
        %v660 = vld [vmem:[%s1 + $0x20c] sm:$0xf]
        %v661 = vld [vmem:[%s1 + $0x210] sm:$0xff]
        %v662 = vld [vmem:[%s1 + $0x218] sm:$0xf]
        %v663 = vld [vmem:[%s1 + $0x21c] sm:$0xff]
        %v664 = vld [vmem:[%s1 + $0x224] sm:$0xf]
        %v665 = vld [vmem:[%s1 + $0x228] sm:$0xff]
        %v666 = vld [vmem:[%s1 + $0x230] sm:$0xf]
        %v667 = vld [vmem:[%s1 + $0x234] sm:$0xff]
        %v668 = vld [vmem:[%s1 + $0x23c] sm:$0xf]
        %v669 = vld [vmem:[%s1 + $0x240] sm:$0xff]
        %v670 = vld [vmem:[%s1 + $0x248] sm:$0xf]
        %v671 = vld [vmem:[%s1 + $0x24c] sm:$0xff]
        %v672 = vld [vmem:[%s1 + $0x254] sm:$0xf]
        %v673 = vld [vmem:[%s1 + $0x258] sm:$0xff]
        %v674 = vld [vmem:[%s1 + $0x260] sm:$0xf]
        %v675 = vld [vmem:[%s1 + $0x264] sm:$0xff]
        %v676 = vld [vmem:[%s1 + $0x26c] sm:$0xf]
        %v677 = vld [vmem:[%s1 + $0x270] sm:$0xff]
        %v678 = vld [vmem:[%s1 + $0x278] sm:$0xf]
        %v679 = vld [vmem:[%s1 + $0x27c] sm:$0xff]
        %v680 = vld [vmem:[%s1 + $0x284] sm:$0xf]
        %v681 = vld [vmem:[%s1 + $0x288] sm:$0xff]
        %v682 = vld [vmem:[%s1 + $0x290] sm:$0xf]
        %v683 = vld [vmem:[%s1 + $0x294] sm:$0xff]
        %v684 = vld [vmem:[%s1 + $0x29c] sm:$0xf]
        %v685 = vld [vmem:[%s1 + $0x2a0] sm:$0xff]
        %v686 = vld [vmem:[%s1 + $0x2a8] sm:$0xf]
        %v687 = vld [vmem:[%s1 + $0x2ac] sm:$0xff]
        %v688 = vld [vmem:[%s1 + $0x2b4] sm:$0xf]
        %v689 = vld [vmem:[%s1 + $0x2b8] sm:$0xff]
        %v690 = vld [vmem:[%s1 + $0x2c0] sm:$0xf]
        %v691 = vld [vmem:[%s1 + $0x2c4] sm:$0xff]
        %v692 = vld [vmem:[%s1 + $0x2cc] sm:$0xf]
        %v693 = vld [vmem:[%s1 + $0x2d0] sm:$0xff]
        %v694 = vld [vmem:[%s1 + $0x2d8] sm:$0xf]
        %v695 = vld [vmem:[%s1 + $0x2dc] sm:$0xff]
        %v696 = vld [vmem:[%s1 + $0x2e4] sm:$0xf]
        %v697 = vld [vmem:[%s1 + $0x2e8] sm:$0xff]
        %v698 = vld [vmem:[%s1 + $0x2f0] sm:$0xf]
        %v699 = vld [vmem:[%s1 + $0x2f4] sm:$0xff]
        %v700 = vld [vmem:[%s1 + $0x2fc] sm:$0xf]
        %v701 = vld [vmem:[%s1 + $0x300] sm:$0xff]
        %v702 = vld [vmem:[%s1 + $0x308] sm:$0xf]
        %v703 = vld [vmem:[%s1 + $0x30c] sm:$0xff]
        %v704 = vld [vmem:[%s1 + $0x314] sm:$0xf]
        %v705 = vld [vmem:[%s1 + $0x318] sm:$0xff]
        %v706 = vld [vmem:[%s1 + $0x320] sm:$0xf]
        %v707 = vld [vmem:[%s1 + $0x324] sm:$0xff]
        %v708 = vld [vmem:[%s1 + $0x32c] sm:$0xf]
        %v709 = vld [vmem:[%s1 + $0x330] sm:$0xff]
        %v710 = vld [vmem:[%s1 + $0x338] sm:$0xf]
        %v711 = vld [vmem:[%s1 + $0x33c] sm:$0xff]
        %v712 = vld [vmem:[%s1 + $0x344] sm:$0xf]
        %v713 = vld [vmem:[%s1 + $0x348] sm:$0xff]
        %v714 = vld [vmem:[%s1 + $0x350] sm:$0xf]
        %v715 = vld [vmem:[%s1 + $0x354] sm:$0xff]
        %v716 = vld [vmem:[%s1 + $0x35c] sm:$0xf]
        %v717 = vld [vmem:[%s1 + $0x360] sm:$0xff]
        %v718 = vld [vmem:[%s1 + $0x368] sm:$0xf]
        %v719 = vld [vmem:[%s1 + $0x36c] sm:$0xff]
        %v720 = vld [vmem:[%s1 + $0x374] sm:$0xf]
        %v721 = vld [vmem:[%s1 + $0x378] sm:$0xff]
        %v722 = vld [vmem:[%s1 + $0x380] sm:$0xf]
        %v723 = vld [vmem:[%s1 + $0x384] sm:$0xff]
        %v724 = vld [vmem:[%s1 + $0x38c] sm:$0xf]
        %v725 = vld [vmem:[%s1 + $0x390] sm:$0xff]
        %v726 = vld [vmem:[%s1 + $0x398] sm:$0xf]
        %v727 = vld [vmem:[%s1 + $0x39c] sm:$0xff]
        %v728 = vld [vmem:[%s1 + $0x3a4] sm:$0xf]
        %v729 = vld [vmem:[%s1 + $0x3a8] sm:$0xff]
        %v730 = vld [vmem:[%s1 + $0x3b0] sm:$0xf]
        %v731 = vld [vmem:[%s1 + $0x3b4] sm:$0xff]
        %v732 = vld [vmem:[%s1 + $0x3bc] sm:$0xf]
        %v733 = vld [vmem:[%s1 + $0x3c0] sm:$0xff]
        %v734 = vld [vmem:[%s1 + $0x3c8] sm:$0xf]
        %v735 = vld [vmem:[%s1 + $0x3cc] sm:$0xff]
        %v736 = vld [vmem:[%s1 + $0x3d4] sm:$0xf]
        %v737 = vld [vmem:[%s1 + $0x3d8] sm:$0xff]
        %v738 = vld [vmem:[%s1 + $0x3e0] sm:$0xf]
        %v739 = vld [vmem:[%s1 + $0x3e4] sm:$0xff]
        %v740 = vld [vmem:[%s1 + $0x3ec] sm:$0xf]
        %v741 = vld [vmem:[%s1 + $0x3f0] sm:$0xff]
        %v742 = vld [vmem:[%s1 + $0x3f8] sm:$0xf]
        %v743 = vld [vmem:[%s1 + $0x3fc] sm:$0xff]
        %v744 = vld [vmem:[%s1 + $0x404] sm:$0xf]
        %v745 = vld [vmem:[%s1 + $0x408] sm:$0xff]
        %v746 = vld [vmem:[%s1 + $0x410] sm:$0xf]
        %v747 = vld [vmem:[%s1 + $0x414] sm:$0xff]
        %v748 = vld [vmem:[%s1 + $0x41c] sm:$0xf]
        %v749 = vld [vmem:[%s1 + $0x420] sm:$0xff]
        %v750 = vld [vmem:[%s1 + $0x428] sm:$0xf]
        %v751 = vld [vmem:[%s1 + $0x42c] sm:$0xff]
        %v752 = vld [vmem:[%s1 + $0x434] sm:$0xf]
        %v753 = vld [vmem:[%s1 + $0x438] sm:$0xff]
        %v754 = vld [vmem:[%s1 + $0x440] sm:$0xf]
        %v755 = vld [vmem:[%s1 + $0x444] sm:$0xff]
        %v756 = vld [vmem:[%s1 + $0x44c] sm:$0xf]
        %v757 = vld [vmem:[%s1 + $0x450] sm:$0xff]
        %v758 = vld [vmem:[%s1 + $0x458] sm:$0xf]
        %v759 = vld [vmem:[%s1 + $0x45c] sm:$0xff]
        %v760 = vld [vmem:[%s1 + $0x464] sm:$0xf]
        %v761 = vld [vmem:[%s1 + $0x468] sm:$0xff]
        %v762 = vld [vmem:[%s1 + $0x470] sm:$0xf]
        %v763 = vld [vmem:[%s1 + $0x474] sm:$0xff]
        %v764 = vld [vmem:[%s1 + $0x47c] sm:$0xf]
        %v765 = vld [vmem:[%s1 + $0x480] sm:$0xff]
        %v766 = vld [vmem:[%s1 + $0x488] sm:$0xf]
        %v767 = vld [vmem:[%s1 + $0x48c] sm:$0xff]
        %v768 = vld [vmem:[%s1 + $0x494] sm:$0xf]
        %v769 = vld [vmem:[%s1 + $0x498] sm:$0xff]
        %v770 = vld [vmem:[%s1 + $0x4a0] sm:$0xf]
        %v771 = vld [vmem:[%s1 + $0x4a4] sm:$0xff]
        %v772 = vld [vmem:[%s1 + $0x4ac] sm:$0xf]
        %v773 = vld [vmem:[%s1 + $0x4b0] sm:$0xff]
        %v774 = vld [vmem:[%s1 + $0x4b8] sm:$0xf]
        %v775 = vld [vmem:[%s1 + $0x4bc] sm:$0xff]
        %v776 = vld [vmem:[%s1 + $0x4c4] sm:$0xf]
        %v777 = vld [vmem:[%s1 + $0x4c8] sm:$0xff]
        %v778 = vld [vmem:[%s1 + $0x4d0] sm:$0xf]
        %v779 = vld [vmem:[%s1 + $0x4d4] sm:$0xff]
        %v780 = vld [vmem:[%s1 + $0x4dc] sm:$0xf]
        %v781 = vld [vmem:[%s1 + $0x4e0] sm:$0xff]
        %v782 = vld [vmem:[%s1 + $0x4e8] sm:$0xf]
        %v783 = vld [vmem:[%s1 + $0x4ec] sm:$0xff]
        %v784 = vld [vmem:[%s1 + $0x4f4] sm:$0xf]
        %v785 = vld [vmem:[%s1 + $0x4f8] sm:$0xff]
        %v786 = vld [vmem:[%s1 + $0x500] sm:$0xf]
        %v787 = vld [vmem:[%s1 + $0x504] sm:$0xff]
        %v788 = vld [vmem:[%s1 + $0x50c] sm:$0xf]
        %v789 = vld [vmem:[%s1 + $0x510] sm:$0xff]
        %v790 = vld [vmem:[%s1 + $0x518] sm:$0xf]
        %v791 = vld [vmem:[%s1 + $0x51c] sm:$0xff]
        %v792 = vld [vmem:[%s1 + $0x524] sm:$0xf]
        %v793 = vld [vmem:[%s1 + $0x528] sm:$0xff]
        %v794 = vld [vmem:[%s1 + $0x530] sm:$0xf]
        %v795 = vld [vmem:[%s1 + $0x534] sm:$0xff]
        %v796 = vld [vmem:[%s1 + $0x53c] sm:$0xf]
        %v797 = vld [vmem:[%s1 + $0x540] sm:$0xff]
        %v798 = vld [vmem:[%s1 + $0x548] sm:$0xf]
        %v799 = vld [vmem:[%s1 + $0x54c] sm:$0xff]
        %v800 = vld [vmem:[%s1 + $0x554] sm:$0xf]
        %v801 = vld [vmem:[%s1 + $0x558] sm:$0xff]
        %v802 = vld [vmem:[%s1 + $0x560] sm:$0xf]
        %v803 = vld [vmem:[%s1 + $0x564] sm:$0xff]
        %v804 = vld [vmem:[%s1 + $0x56c] sm:$0xf]
        %v805 = vld [vmem:[%s1 + $0x570] sm:$0xff]
        %v806 = vld [vmem:[%s1 + $0x578] sm:$0xf]
        %v807 = vld [vmem:[%s1 + $0x57c] sm:$0xff]
        %v808 = vld [vmem:[%s1 + $0x584] sm:$0xf]
        %v809 = vld [vmem:[%s1 + $0x588] sm:$0xff]
        %v810 = vld [vmem:[%s1 + $0x590] sm:$0xf]
        %v811 = vld [vmem:[%s1 + $0x594] sm:$0xff]
        %v812 = vld [vmem:[%s1 + $0x59c] sm:$0xf]
        %v813 = vld [vmem:[%s1 + $0x5a0] sm:$0xff]
        %v814 = vld [vmem:[%s1 + $0x5a8] sm:$0xf]
        %v815 = vld [vmem:[%s1 + $0x5ac] sm:$0xff]
        %v816 = vld [vmem:[%s1 + $0x5b4] sm:$0xf]
        %v817 = vld [vmem:[%s1 + $0x5b8] sm:$0xff]
        %v818 = vld [vmem:[%s1 + $0x5c0] sm:$0xf]
        %v819 = vld [vmem:[%s1 + $0x5c4] sm:$0xff]
        %v820 = vld [vmem:[%s1 + $0x5cc] sm:$0xf]
        %v821 = vld [vmem:[%s1 + $0x5d0] sm:$0xff]
        %v822 = vld [vmem:[%s1 + $0x5d8] sm:$0xf]
        %v823 = vld [vmem:[%s1 + $0x5dc] sm:$0xff]
        %v824 = vld [vmem:[%s1 + $0x5e4] sm:$0xf]
        %v825 = vld [vmem:[%s1 + $0x5e8] sm:$0xff]
        %v826 = vld [vmem:[%s1 + $0x5f0] sm:$0xf]
        %v827 = vld [vmem:[%s1 + $0x5f4] sm:$0xff]
        %v828 = vld [vmem:[%s1 + $0x5fc] sm:$0xf]
        %v829 = vld [vmem:[%s1 + $0x600] sm:$0xff]
        %v830 = vld [vmem:[%s1 + $0x608] sm:$0xf]
        %v831 = vld [vmem:[%s1 + $0x60c] sm:$0xff]
        %v832 = vld [vmem:[%s1 + $0x614] sm:$0xf]
        %v833 = vld [vmem:[%s1 + $0x618] sm:$0xff]
        %v834 = vld [vmem:[%s1 + $0x620] sm:$0xf]
        %v835 = vld [vmem:[%s1 + $0x624] sm:$0xff]
        %v836 = vld [vmem:[%s1 + $0x62c] sm:$0xf]
        %v837 = vld [vmem:[%s1 + $0x630] sm:$0xff]
        %v838 = vld [vmem:[%s1 + $0x638] sm:$0xf]
        %v839 = vld [vmem:[%s1 + $0x63c] sm:$0xff]
        %v840 = vld [vmem:[%s1 + $0x644] sm:$0xf]
        %v841 = vld [vmem:[%s1 + $0x648] sm:$0xff]
        %v842 = vld [vmem:[%s1 + $0x650] sm:$0xf]
        %v843 = vld [vmem:[%s1 + $0x654] sm:$0xff]
        %v844 = vld [vmem:[%s1 + $0x65c] sm:$0xf]
        %v845 = vld [vmem:[%s1 + $0x660] sm:$0xff]
        %v846 = vld [vmem:[%s1 + $0x668] sm:$0xf]
        %v847 = vld [vmem:[%s1 + $0x66c] sm:$0xff]
        %v848 = vld [vmem:[%s1 + $0x674] sm:$0xf]
        %v849 = vld [vmem:[%s1 + $0x678] sm:$0xff]
        %v850 = vld [vmem:[%s1 + $0x680] sm:$0xf]
        %v851 = vld [vmem:[%s1 + $0x684] sm:$0xff]
        %v852 = vld [vmem:[%s1 + $0x68c] sm:$0xf]
        %v853 = vld [vmem:[%s1 + $0x690] sm:$0xff]
        %v854 = vld [vmem:[%s1 + $0x698] sm:$0xf]
        %v855 = vld [vmem:[%s1 + $0x69c] sm:$0xff]
        %v856 = vld [vmem:[%s1 + $0x6a4] sm:$0xf]
        %v857 = vld [vmem:[%s1 + $0x6a8] sm:$0xff]
        %v858 = vld [vmem:[%s1 + $0x6b0] sm:$0xf]
        %v859 = vld [vmem:[%s1 + $0x6b4] sm:$0xff]
        %v860 = vld [vmem:[%s1 + $0x6bc] sm:$0xf]
        %v861 = vld [vmem:[%s1 + $0x6c0] sm:$0xff]
        %v862 = vld [vmem:[%s1 + $0x6c8] sm:$0xf]
        %v863 = vld [vmem:[%s1 + $0x6cc] sm:$0xff]
        %v864 = vld [vmem:[%s1 + $0x6d4] sm:$0xf]
        %v865 = vld [vmem:[%s1 + $0x6d8] sm:$0xff]
        %v866 = vld [vmem:[%s1 + $0x6e0] sm:$0xf]
        %v867 = vld [vmem:[%s1 + $0x6e4] sm:$0xff]
        %v868 = vld [vmem:[%s1 + $0x6ec] sm:$0xf]
        %v869 = vld [vmem:[%s1 + $0x6f0] sm:$0xff]
        %v870 = vld [vmem:[%s1 + $0x6f8] sm:$0xf]
        %v871 = vld [vmem:[%s1 + $0x6fc] sm:$0xff]
        %v872 = vld [vmem:[%s1 + $0x704] sm:$0xf]
        %v873 = vld [vmem:[%s1 + $0x708] sm:$0xff]
        %v874 = vld [vmem:[%s1 + $0x710] sm:$0xf]
        %v875 = vld [vmem:[%s1 + $0x714] sm:$0xff]
        %v876 = vld [vmem:[%s1 + $0x71c] sm:$0xf]
        %v877 = vld [vmem:[%s1 + $0x720] sm:$0xff]
        %v878 = vld [vmem:[%s1 + $0x728] sm:$0xf]
        %v879 = vld [vmem:[%s1 + $0x72c] sm:$0xff]
        %v880 = vld [vmem:[%s1 + $0x734] sm:$0xf]
        %v881 = vld [vmem:[%s1 + $0x738] sm:$0xff]
        %v882 = vld [vmem:[%s1 + $0x740] sm:$0xf]
        %v883 = vld [vmem:[%s1 + $0x744] sm:$0xff]
        %v884 = vld [vmem:[%s1 + $0x74c] sm:$0xf]
        %v885 = vld [vmem:[%s1 + $0x750] sm:$0xff]
        %v886 = vld [vmem:[%s1 + $0x758] sm:$0xf]
        %v887 = vld [vmem:[%s1 + $0x75c] sm:$0xff]
        %v888 = vld [vmem:[%s1 + $0x764] sm:$0xf]
        %v889 = vld [vmem:[%s1 + $0x768] sm:$0xff]
        %v890 = vld [vmem:[%s1 + $0x770] sm:$0xf]
        %v891 = vld [vmem:[%s1 + $0x774] sm:$0xff]
        %v892 = vld [vmem:[%s1 + $0x77c] sm:$0xf]
        %v993 = vunpack.c.l.b16 %v473
        %v994 = vunpack.c.h.b16 %v473
        %v995 = vunpack.c.l.b16 %v474
        %v996 = vunpack.c.h.b16 %v474
        %v997 = vunpack.c.l.b16 %v475
        %v998 = vunpack.c.h.b16 %v475
        %v999 = vunpack.c.l.b16 %v476
        %v1000 = vunpack.c.h.b16 %v476
        %v1001 = vunpack.c.l.b16 %v477
        %v1002 = vunpack.c.h.b16 %v477
        %v1003 = vunpack.c.l.b16 %v478
        %v1004 = vunpack.c.h.b16 %v478
        %v1005 = vunpack.c.l.b16 %v479
        %v1006 = vunpack.c.h.b16 %v479
        %v1007 = vunpack.c.l.b16 %v480
        %v1008 = vunpack.c.h.b16 %v480
        %v1009 = vunpack.c.l.b16 %v481
        %v1010 = vunpack.c.h.b16 %v481
        %v1011 = vunpack.c.l.b16 %v482
        %v1012 = vunpack.c.h.b16 %v482
        %v1013 = vunpack.c.l.b16 %v483
        %v1014 = vunpack.c.h.b16 %v483
        %v1015 = vunpack.c.l.b16 %v484
        %v1016 = vunpack.c.h.b16 %v484
        %v1017 = vunpack.c.l.b16 %v485
        %v1018 = vunpack.c.h.b16 %v485
        %v1019 = vunpack.c.l.b16 %v486
        %v1020 = vunpack.c.h.b16 %v486
        %v1021 = vunpack.c.l.b16 %v487
        %v1022 = vunpack.c.h.b16 %v487
        %v1023 = vunpack.c.l.b16 %v488
        %v1024 = vunpack.c.h.b16 %v488
        %v1025 = vunpack.c.l.b16 %v489
        %v1026 = vunpack.c.h.b16 %v489
        %v1027 = vunpack.c.l.b16 %v490
        %v1028 = vunpack.c.h.b16 %v490
        %v1029 = vunpack.c.l.b16 %v491
        %v1030 = vunpack.c.h.b16 %v491
        %v1031 = vunpack.c.l.b16 %v492
        %v1032 = vunpack.c.h.b16 %v492
        %v1033 = vunpack.c.l.b16 %v493
        %v1034 = vunpack.c.h.b16 %v493
        %v1035 = vunpack.c.l.b16 %v494
        %v1036 = vunpack.c.h.b16 %v494
        %v1037 = vunpack.c.l.b16 %v495
        %v1038 = vunpack.c.h.b16 %v495
        %v1039 = vunpack.c.l.b16 %v496
        %v1040 = vunpack.c.h.b16 %v496
        %v1041 = vunpack.c.l.b16 %v497
        %v1042 = vunpack.c.h.b16 %v497
        %v1043 = vunpack.c.l.b16 %v498
        %v1044 = vunpack.c.h.b16 %v498
        %v1045 = vunpack.c.l.b16 %v499
        %v1046 = vunpack.c.h.b16 %v499
        %v1047 = vunpack.c.l.b16 %v500
        %v1048 = vunpack.c.h.b16 %v500
        %v1049 = vunpack.c.l.b16 %v501
        %v1050 = vunpack.c.h.b16 %v501
        %v1051 = vunpack.c.l.b16 %v502
        %v1052 = vunpack.c.h.b16 %v502
        %v1053 = vunpack.c.l.b16 %v503
        %v1054 = vunpack.c.h.b16 %v503
        %v1055 = vunpack.c.l.b16 %v504
        %v1056 = vunpack.c.h.b16 %v504
        %v1057 = vunpack.c.l.b16 %v505
        %v1058 = vunpack.c.h.b16 %v505
        %v1059 = vunpack.c.l.b16 %v506
        %v1060 = vunpack.c.h.b16 %v506
        %v1061 = vunpack.c.l.b16 %v507
        %v1062 = vunpack.c.h.b16 %v507
        %v1063 = vunpack.c.l.b16 %v508
        %v1064 = vunpack.c.h.b16 %v508
        %v1065 = vunpack.c.l.b16 %v509
        %v1066 = vunpack.c.h.b16 %v509
        %v1067 = vunpack.c.l.b16 %v510
        %v1068 = vunpack.c.h.b16 %v510
        %v1069 = vunpack.c.l.b16 %v511
        %v1070 = vunpack.c.h.b16 %v511
        %v1071 = vunpack.c.l.b16 %v512
        %v1072 = vunpack.c.h.b16 %v512
        %v1073 = vunpack.c.l.b16 %v513
        %v1074 = vunpack.c.h.b16 %v513
        %v1075 = vunpack.c.l.b16 %v514
        %v1076 = vunpack.c.h.b16 %v514
        %v1077 = vunpack.c.l.b16 %v515
        %v1078 = vunpack.c.h.b16 %v515
        %v1079 = vunpack.c.l.b16 %v516
        %v1080 = vunpack.c.h.b16 %v516
        %v1081 = vunpack.c.l.b16 %v517
        %v1082 = vunpack.c.h.b16 %v517
        %v1083 = vunpack.c.l.b16 %v518
        %v1084 = vunpack.c.h.b16 %v518
        %v1085 = vunpack.c.l.b16 %v519
        %v1086 = vunpack.c.h.b16 %v519
        %v1087 = vunpack.c.l.b16 %v520
        %v1088 = vunpack.c.h.b16 %v520
        %v1089 = vunpack.c.l.b16 %v521
        %v1090 = vunpack.c.h.b16 %v521
        %v1091 = vunpack.c.l.b16 %v522
        %v1092 = vunpack.c.h.b16 %v522
        %v1093 = vunpack.c.l.b16 %v523
        %v1094 = vunpack.c.h.b16 %v523
        %v1095 = vunpack.c.l.b16 %v524
        %v1096 = vunpack.c.h.b16 %v524
        %v1097 = vunpack.c.l.b16 %v525
        %v1098 = vunpack.c.h.b16 %v525
        %v1099 = vunpack.c.l.b16 %v526
        %v1100 = vunpack.c.h.b16 %v526
        %v1101 = vunpack.c.l.b16 %v527
        %v1102 = vunpack.c.h.b16 %v527
        %v1103 = vunpack.c.l.b16 %v528
        %v1104 = vunpack.c.h.b16 %v528
        %v1105 = vunpack.c.l.b16 %v529
        %v1106 = vunpack.c.h.b16 %v529
        %v1107 = vunpack.c.l.b16 %v530
        %v1108 = vunpack.c.h.b16 %v530
        %v1109 = vunpack.c.l.b16 %v531
        %v1110 = vunpack.c.h.b16 %v531
        %v1111 = vunpack.c.l.b16 %v532
        %v1112 = vunpack.c.h.b16 %v532
        %v1113 = vunpack.c.l.b16 %v533
        %v1114 = vunpack.c.h.b16 %v533
        %v1115 = vunpack.c.l.b16 %v534
        %v1116 = vunpack.c.h.b16 %v534
        %v1117 = vunpack.c.l.b16 %v535
        %v1118 = vunpack.c.h.b16 %v535
        %v1119 = vunpack.c.l.b16 %v536
        %v1120 = vunpack.c.h.b16 %v536
        %v1121 = vunpack.c.l.b16 %v537
        %v1122 = vunpack.c.h.b16 %v537
        %v1123 = vunpack.c.l.b16 %v538
        %v1124 = vunpack.c.h.b16 %v538
        %v1125 = vunpack.c.l.b16 %v539
        %v1126 = vunpack.c.h.b16 %v539
        %v1127 = vunpack.c.l.b16 %v540
        %v1128 = vunpack.c.h.b16 %v540
        %v1129 = vunpack.c.l.b16 %v541
        %v1130 = vunpack.c.h.b16 %v541
        %v1131 = vunpack.c.l.b16 %v542
        %v1132 = vunpack.c.h.b16 %v542
        %v1133 = vunpack.c.l.b16 %v543
        %v1134 = vunpack.c.h.b16 %v543
        %v1135 = vunpack.c.l.b16 %v544
        %v1136 = vunpack.c.h.b16 %v544
        %v1137 = vunpack.c.l.b16 %v545
        %v1138 = vunpack.c.h.b16 %v545
        %v1139 = vunpack.c.l.b16 %v546
        %v1140 = vunpack.c.h.b16 %v546
        %v1141 = vunpack.c.l.b16 %v547
        %v1142 = vunpack.c.h.b16 %v547
        %v1143 = vunpack.c.l.b16 %v548
        %v1144 = vunpack.c.h.b16 %v548
        %v1145 = vunpack.c.l.b16 %v549
        %v1146 = vunpack.c.h.b16 %v549
        %v1147 = vunpack.c.l.b16 %v550
        %v1148 = vunpack.c.h.b16 %v550
        %v1149 = vunpack.c.l.b16 %v551
        %v1150 = vunpack.c.h.b16 %v551
        %v1151 = vunpack.c.l.b16 %v552
        %v1152 = vunpack.c.h.b16 %v552
        %v1153 = vunpack.c.l.b16 %v553
        %v1154 = vunpack.c.h.b16 %v553
        %v1155 = vunpack.c.l.b16 %v554
        %v1156 = vunpack.c.h.b16 %v554
        %v1157 = vunpack.c.l.b16 %v555
        %v1158 = vunpack.c.h.b16 %v555
        %v1159 = vunpack.c.l.b16 %v556
        %v1160 = vunpack.c.h.b16 %v556
        %v1161 = vunpack.c.l.b16 %v557
        %v1162 = vunpack.c.h.b16 %v557
        %v1163 = vunpack.c.l.b16 %v558
        %v1164 = vunpack.c.h.b16 %v558
        %v1165 = vunpack.c.l.b16 %v559
        %v1166 = vunpack.c.h.b16 %v559
        %v1167 = vunpack.c.l.b16 %v560
        %v1168 = vunpack.c.h.b16 %v560
        %v1169 = vunpack.c.l.b16 %v561
        %v1170 = vunpack.c.h.b16 %v561
        %v1171 = vunpack.c.l.b16 %v562
        %v1172 = vunpack.c.h.b16 %v562
        %v1173 = vunpack.c.l.b16 %v563
        %v1174 = vunpack.c.h.b16 %v563
        %v1175 = vunpack.c.l.b16 %v564
        %v1176 = vunpack.c.h.b16 %v564
        %v1177 = vunpack.c.l.b16 %v565
        %v1178 = vunpack.c.h.b16 %v565
        %v1179 = vunpack.c.l.b16 %v566
        %v1180 = vunpack.c.h.b16 %v566
        %v1181 = vunpack.c.l.b16 %v567
        %v1182 = vunpack.c.h.b16 %v567
        %v1183 = vunpack.c.l.b16 %v568
        %v1184 = vunpack.c.h.b16 %v568
        %v1185 = vunpack.c.l.b16 %v569
        %v1186 = vunpack.c.h.b16 %v569
        %v1187 = vunpack.c.l.b16 %v570
        %v1188 = vunpack.c.h.b16 %v570
        %v1189 = vunpack.c.l.b16 %v571
        %v1190 = vunpack.c.h.b16 %v571
        %v1191 = vunpack.c.l.b16 %v572
        %v1192 = vunpack.c.h.b16 %v572
        %v1193 = vpack.c.b16 %v1003, %v993
        %v1194 = vpack.c.b16 %v1004, %v994
        %v1195 = vpack.c.b16 %v1005, %v995
        %v1196 = vpack.c.b16 %v1006, %v996
        %v1197 = vpack.c.b16 %v1007, %v997
        %v1198 = vpack.c.b16 %v1008, %v998
        %v1199 = vpack.c.b16 %v1009, %v999
        %v1200 = vpack.c.b16 %v1010, %v1000
        %v1201 = vpack.c.b16 %v1011, %v1001
        %v1202 = vpack.c.b16 %v1012, %v1002
        %v1203 = vpack.c.b16 %v1023, %v1013
        %v1204 = vpack.c.b16 %v1024, %v1014
        %v1205 = vpack.c.b16 %v1025, %v1015
        %v1206 = vpack.c.b16 %v1026, %v1016
        %v1207 = vpack.c.b16 %v1027, %v1017
        %v1208 = vpack.c.b16 %v1028, %v1018
        %v1209 = vpack.c.b16 %v1029, %v1019
        %v1210 = vpack.c.b16 %v1030, %v1020
        %v1211 = vpack.c.b16 %v1031, %v1021
        %v1212 = vpack.c.b16 %v1032, %v1022
        %v1213 = vpack.c.b16 %v1043, %v1033
        %v1214 = vpack.c.b16 %v1044, %v1034
        %v1215 = vpack.c.b16 %v1045, %v1035
        %v1216 = vpack.c.b16 %v1046, %v1036
        %v1217 = vpack.c.b16 %v1047, %v1037
        %v1218 = vpack.c.b16 %v1048, %v1038
        %v1219 = vpack.c.b16 %v1049, %v1039
        %v1220 = vpack.c.b16 %v1050, %v1040
        %v1221 = vpack.c.b16 %v1051, %v1041
        %v1222 = vpack.c.b16 %v1052, %v1042
        %v1223 = vpack.c.b16 %v1063, %v1053
        %v1224 = vpack.c.b16 %v1064, %v1054
        %v1225 = vpack.c.b16 %v1065, %v1055
        %v1226 = vpack.c.b16 %v1066, %v1056
        %v1227 = vpack.c.b16 %v1067, %v1057
        %v1228 = vpack.c.b16 %v1068, %v1058
        %v1229 = vpack.c.b16 %v1069, %v1059
        %v1230 = vpack.c.b16 %v1070, %v1060
        %v1231 = vpack.c.b16 %v1071, %v1061
        %v1232 = vpack.c.b16 %v1072, %v1062
        %v1233 = vpack.c.b16 %v1083, %v1073
        %v1234 = vpack.c.b16 %v1084, %v1074
        %v1235 = vpack.c.b16 %v1085, %v1075
        %v1236 = vpack.c.b16 %v1086, %v1076
        %v1237 = vpack.c.b16 %v1087, %v1077
        %v1238 = vpack.c.b16 %v1088, %v1078
        %v1239 = vpack.c.b16 %v1089, %v1079
        %v1240 = vpack.c.b16 %v1090, %v1080
        %v1241 = vpack.c.b16 %v1091, %v1081
        %v1242 = vpack.c.b16 %v1092, %v1082
        %v1243 = vpack.c.b16 %v1103, %v1093
        %v1244 = vpack.c.b16 %v1104, %v1094
        %v1245 = vpack.c.b16 %v1105, %v1095
        %v1246 = vpack.c.b16 %v1106, %v1096
        %v1247 = vpack.c.b16 %v1107, %v1097
        %v1248 = vpack.c.b16 %v1108, %v1098
        %v1249 = vpack.c.b16 %v1109, %v1099
        %v1250 = vpack.c.b16 %v1110, %v1100
        %v1251 = vpack.c.b16 %v1111, %v1101
        %v1252 = vpack.c.b16 %v1112, %v1102
        %v1253 = vpack.c.b16 %v1123, %v1113
        %v1254 = vpack.c.b16 %v1124, %v1114
        %v1255 = vpack.c.b16 %v1125, %v1115
        %v1256 = vpack.c.b16 %v1126, %v1116
        %v1257 = vpack.c.b16 %v1127, %v1117
        %v1258 = vpack.c.b16 %v1128, %v1118
        %v1259 = vpack.c.b16 %v1129, %v1119
        %v1260 = vpack.c.b16 %v1130, %v1120
        %v1261 = vpack.c.b16 %v1131, %v1121
        %v1262 = vpack.c.b16 %v1132, %v1122
        %v1263 = vpack.c.b16 %v1143, %v1133
        %v1264 = vpack.c.b16 %v1144, %v1134
        %v1265 = vpack.c.b16 %v1145, %v1135
        %v1266 = vpack.c.b16 %v1146, %v1136
        %v1267 = vpack.c.b16 %v1147, %v1137
        %v1268 = vpack.c.b16 %v1148, %v1138
        %v1269 = vpack.c.b16 %v1149, %v1139
        %v1270 = vpack.c.b16 %v1150, %v1140
        %v1271 = vpack.c.b16 %v1151, %v1141
        %v1272 = vpack.c.b16 %v1152, %v1142
        %v1273 = vpack.c.b16 %v1163, %v1153
        %v1274 = vpack.c.b16 %v1164, %v1154
        %v1275 = vpack.c.b16 %v1165, %v1155
        %v1276 = vpack.c.b16 %v1166, %v1156
        %v1277 = vpack.c.b16 %v1167, %v1157
        %v1278 = vpack.c.b16 %v1168, %v1158
        %v1279 = vpack.c.b16 %v1169, %v1159
        %v1280 = vpack.c.b16 %v1170, %v1160
        %v1281 = vpack.c.b16 %v1171, %v1161
        %v1282 = vpack.c.b16 %v1172, %v1162
        %v1283 = vpack.c.b16 %v1183, %v1173
        %v1284 = vpack.c.b16 %v1184, %v1174
        %v1285 = vpack.c.b16 %v1185, %v1175
        %v1286 = vpack.c.b16 %v1186, %v1176
        %v1287 = vpack.c.b16 %v1187, %v1177
        %v1288 = vpack.c.b16 %v1188, %v1178
        %v1289 = vpack.c.b16 %v1189, %v1179
        %v1290 = vpack.c.b16 %v1190, %v1180
        %v1291 = vpack.c.b16 %v1191, %v1181
        %v1292 = vpack.c.b16 %v1192, %v1182
        %v1713 = vunpack.c.l.b16 %v573
        %v1714 = vunpack.c.h.b16 %v573
        %v1715 = vunpack.c.l.b16 %v574
        %v1716 = vunpack.c.l.b16 %v575
        %v1717 = vunpack.c.h.b16 %v575
        %v1718 = vunpack.c.l.b16 %v576
        %v1719 = vunpack.c.l.b16 %v577
        %v1720 = vunpack.c.h.b16 %v577
        %v1721 = vunpack.c.l.b16 %v578
        %v1722 = vunpack.c.l.b16 %v579
        %v1723 = vunpack.c.h.b16 %v579
        %v1724 = vunpack.c.l.b16 %v580
        %v1725 = vunpack.c.l.b16 %v581
        %v1726 = vunpack.c.h.b16 %v581
        %v1727 = vunpack.c.l.b16 %v582
        %v1728 = vunpack.c.l.b16 %v583
        %v1729 = vunpack.c.h.b16 %v583
        %v1730 = vunpack.c.l.b16 %v584
        %v1731 = vunpack.c.l.b16 %v585
        %v1732 = vunpack.c.h.b16 %v585
        %v1733 = vunpack.c.l.b16 %v586
        %v1734 = vunpack.c.l.b16 %v587
        %v1735 = vunpack.c.h.b16 %v587
        %v1736 = vunpack.c.l.b16 %v588
        %v1737 = vunpack.c.l.b16 %v589
        %v1738 = vunpack.c.h.b16 %v589
        %v1739 = vunpack.c.l.b16 %v590
        %v1740 = vunpack.c.l.b16 %v591
        %v1741 = vunpack.c.h.b16 %v591
        %v1742 = vunpack.c.l.b16 %v592
        %v1743 = vunpack.c.l.b16 %v593
        %v1744 = vunpack.c.h.b16 %v593
        %v1745 = vunpack.c.l.b16 %v594
        %v1746 = vunpack.c.l.b16 %v595
        %v1747 = vunpack.c.h.b16 %v595
        %v1748 = vunpack.c.l.b16 %v596
        %v1749 = vunpack.c.l.b16 %v597
        %v1750 = vunpack.c.h.b16 %v597
        %v1751 = vunpack.c.l.b16 %v598
        %v1752 = vunpack.c.l.b16 %v599
        %v1753 = vunpack.c.h.b16 %v599
        %v1754 = vunpack.c.l.b16 %v600
        %v1755 = vunpack.c.l.b16 %v601
        %v1756 = vunpack.c.h.b16 %v601
        %v1757 = vunpack.c.l.b16 %v602
        %v1758 = vunpack.c.l.b16 %v603
        %v1759 = vunpack.c.h.b16 %v603
        %v1760 = vunpack.c.l.b16 %v604
        %v1761 = vunpack.c.l.b16 %v605
        %v1762 = vunpack.c.h.b16 %v605
        %v1763 = vunpack.c.l.b16 %v606
        %v1764 = vunpack.c.l.b16 %v607
        %v1765 = vunpack.c.h.b16 %v607
        %v1766 = vunpack.c.l.b16 %v608
        %v1767 = vunpack.c.l.b16 %v609
        %v1768 = vunpack.c.h.b16 %v609
        %v1769 = vunpack.c.l.b16 %v610
        %v1770 = vunpack.c.l.b16 %v611
        %v1771 = vunpack.c.h.b16 %v611
        %v1772 = vunpack.c.l.b16 %v612
        %v1773 = vunpack.c.l.b16 %v613
        %v1774 = vunpack.c.h.b16 %v613
        %v1775 = vunpack.c.l.b16 %v614
        %v1776 = vunpack.c.l.b16 %v615
        %v1777 = vunpack.c.h.b16 %v615
        %v1778 = vunpack.c.l.b16 %v616
        %v1779 = vunpack.c.l.b16 %v617
        %v1780 = vunpack.c.h.b16 %v617
        %v1781 = vunpack.c.l.b16 %v618
        %v1782 = vunpack.c.l.b16 %v619
        %v1783 = vunpack.c.h.b16 %v619
        %v1784 = vunpack.c.l.b16 %v620
        %v1785 = vunpack.c.l.b16 %v621
        %v1786 = vunpack.c.h.b16 %v621
        %v1787 = vunpack.c.l.b16 %v622
        %v1788 = vunpack.c.l.b16 %v623
        %v1789 = vunpack.c.h.b16 %v623
        %v1790 = vunpack.c.l.b16 %v624
        %v1791 = vunpack.c.l.b16 %v625
        %v1792 = vunpack.c.h.b16 %v625
        %v1793 = vunpack.c.l.b16 %v626
        %v1794 = vunpack.c.l.b16 %v627
        %v1795 = vunpack.c.h.b16 %v627
        %v1796 = vunpack.c.l.b16 %v628
        %v1797 = vunpack.c.l.b16 %v629
        %v1798 = vunpack.c.h.b16 %v629
        %v1799 = vunpack.c.l.b16 %v630
        %v1800 = vunpack.c.l.b16 %v631
        %v1801 = vunpack.c.h.b16 %v631
        %v1802 = vunpack.c.l.b16 %v632
        %v1803 = vunpack.c.l.b16 %v633
        %v1804 = vunpack.c.h.b16 %v633
        %v1805 = vunpack.c.l.b16 %v634
        %v1806 = vunpack.c.l.b16 %v635
        %v1807 = vunpack.c.h.b16 %v635
        %v1808 = vunpack.c.l.b16 %v636
        %v1809 = vunpack.c.l.b16 %v637
        %v1810 = vunpack.c.h.b16 %v637
        %v1811 = vunpack.c.l.b16 %v638
        %v1812 = vunpack.c.l.b16 %v639
        %v1813 = vunpack.c.h.b16 %v639
        %v1814 = vunpack.c.l.b16 %v640
        %v1815 = vunpack.c.l.b16 %v641
        %v1816 = vunpack.c.h.b16 %v641
        %v1817 = vunpack.c.l.b16 %v642
        %v1818 = vunpack.c.l.b16 %v643
        %v1819 = vunpack.c.h.b16 %v643
        %v1820 = vunpack.c.l.b16 %v644
        %v1821 = vunpack.c.l.b16 %v645
        %v1822 = vunpack.c.h.b16 %v645
        %v1823 = vunpack.c.l.b16 %v646
        %v1824 = vunpack.c.l.b16 %v647
        %v1825 = vunpack.c.h.b16 %v647
        %v1826 = vunpack.c.l.b16 %v648
        %v1827 = vunpack.c.l.b16 %v649
        %v1828 = vunpack.c.h.b16 %v649
        %v1829 = vunpack.c.l.b16 %v650
        %v1830 = vunpack.c.l.b16 %v651
        %v1831 = vunpack.c.h.b16 %v651
        %v1832 = vunpack.c.l.b16 %v652
        %v1833 = vunpack.c.l.b16 %v653
        %v1834 = vunpack.c.h.b16 %v653
        %v1835 = vunpack.c.l.b16 %v654
        %v1836 = vunpack.c.l.b16 %v655
        %v1837 = vunpack.c.h.b16 %v655
        %v1838 = vunpack.c.l.b16 %v656
        %v1839 = vunpack.c.l.b16 %v657
        %v1840 = vunpack.c.h.b16 %v657
        %v1841 = vunpack.c.l.b16 %v658
        %v1842 = vunpack.c.l.b16 %v659
        %v1843 = vunpack.c.h.b16 %v659
        %v1844 = vunpack.c.l.b16 %v660
        %v1845 = vunpack.c.l.b16 %v661
        %v1846 = vunpack.c.h.b16 %v661
        %v1847 = vunpack.c.l.b16 %v662
        %v1848 = vunpack.c.l.b16 %v663
        %v1849 = vunpack.c.h.b16 %v663
        %v1850 = vunpack.c.l.b16 %v664
        %v1851 = vunpack.c.l.b16 %v665
        %v1852 = vunpack.c.h.b16 %v665
        %v1853 = vunpack.c.l.b16 %v666
        %v1854 = vunpack.c.l.b16 %v667
        %v1855 = vunpack.c.h.b16 %v667
        %v1856 = vunpack.c.l.b16 %v668
        %v1857 = vunpack.c.l.b16 %v669
        %v1858 = vunpack.c.h.b16 %v669
        %v1859 = vunpack.c.l.b16 %v670
        %v1860 = vunpack.c.l.b16 %v671
        %v1861 = vunpack.c.h.b16 %v671
        %v1862 = vunpack.c.l.b16 %v672
        %v1863 = vunpack.c.l.b16 %v673
        %v1864 = vunpack.c.h.b16 %v673
        %v1865 = vunpack.c.l.b16 %v674
        %v1866 = vunpack.c.l.b16 %v675
        %v1867 = vunpack.c.h.b16 %v675
        %v1868 = vunpack.c.l.b16 %v676
        %v1869 = vunpack.c.l.b16 %v677
        %v1870 = vunpack.c.h.b16 %v677
        %v1871 = vunpack.c.l.b16 %v678
        %v1872 = vunpack.c.l.b16 %v679
        %v1873 = vunpack.c.h.b16 %v679
        %v1874 = vunpack.c.l.b16 %v680
        %v1875 = vunpack.c.l.b16 %v681
        %v1876 = vunpack.c.h.b16 %v681
        %v1877 = vunpack.c.l.b16 %v682
        %v1878 = vunpack.c.l.b16 %v683
        %v1879 = vunpack.c.h.b16 %v683
        %v1880 = vunpack.c.l.b16 %v684
        %v1881 = vunpack.c.l.b16 %v685
        %v1882 = vunpack.c.h.b16 %v685
        %v1883 = vunpack.c.l.b16 %v686
        %v1884 = vunpack.c.l.b16 %v687
        %v1885 = vunpack.c.h.b16 %v687
        %v1886 = vunpack.c.l.b16 %v688
        %v1887 = vunpack.c.l.b16 %v689
        %v1888 = vunpack.c.h.b16 %v689
        %v1889 = vunpack.c.l.b16 %v690
        %v1890 = vunpack.c.l.b16 %v691
        %v1891 = vunpack.c.h.b16 %v691
        %v1892 = vunpack.c.l.b16 %v692
        %v1893 = vunpack.c.l.b16 %v693
        %v1894 = vunpack.c.h.b16 %v693
        %v1895 = vunpack.c.l.b16 %v694
        %v1896 = vunpack.c.l.b16 %v695
        %v1897 = vunpack.c.h.b16 %v695
        %v1898 = vunpack.c.l.b16 %v696
        %v1899 = vunpack.c.l.b16 %v697
        %v1900 = vunpack.c.h.b16 %v697
        %v1901 = vunpack.c.l.b16 %v698
        %v1902 = vunpack.c.l.b16 %v699
        %v1903 = vunpack.c.h.b16 %v699
        %v1904 = vunpack.c.l.b16 %v700
        %v1905 = vunpack.c.l.b16 %v701
        %v1906 = vunpack.c.h.b16 %v701
        %v1907 = vunpack.c.l.b16 %v702
        %v1908 = vunpack.c.l.b16 %v703
        %v1909 = vunpack.c.h.b16 %v703
        %v1910 = vunpack.c.l.b16 %v704
        %v1911 = vunpack.c.l.b16 %v705
        %v1912 = vunpack.c.h.b16 %v705
        %v1913 = vunpack.c.l.b16 %v706
        %v1914 = vunpack.c.l.b16 %v707
        %v1915 = vunpack.c.h.b16 %v707
        %v1916 = vunpack.c.l.b16 %v708
        %v1917 = vunpack.c.l.b16 %v709
        %v1918 = vunpack.c.h.b16 %v709
        %v1919 = vunpack.c.l.b16 %v710
        %v1920 = vunpack.c.l.b16 %v711
        %v1921 = vunpack.c.h.b16 %v711
        %v1922 = vunpack.c.l.b16 %v712
        %v1923 = vunpack.c.l.b16 %v713
        %v1924 = vunpack.c.h.b16 %v713
        %v1925 = vunpack.c.l.b16 %v714
        %v1926 = vunpack.c.l.b16 %v715
        %v1927 = vunpack.c.h.b16 %v715
        %v1928 = vunpack.c.l.b16 %v716
        %v1929 = vunpack.c.l.b16 %v717
        %v1930 = vunpack.c.h.b16 %v717
        %v1931 = vunpack.c.l.b16 %v718
        %v1932 = vunpack.c.l.b16 %v719
        %v1933 = vunpack.c.h.b16 %v719
        %v1934 = vunpack.c.l.b16 %v720
        %v1935 = vunpack.c.l.b16 %v721
        %v1936 = vunpack.c.h.b16 %v721
        %v1937 = vunpack.c.l.b16 %v722
        %v1938 = vunpack.c.l.b16 %v723
        %v1939 = vunpack.c.h.b16 %v723
        %v1940 = vunpack.c.l.b16 %v724
        %v1941 = vunpack.c.l.b16 %v725
        %v1942 = vunpack.c.h.b16 %v725
        %v1943 = vunpack.c.l.b16 %v726
        %v1944 = vunpack.c.l.b16 %v727
        %v1945 = vunpack.c.h.b16 %v727
        %v1946 = vunpack.c.l.b16 %v728
        %v1947 = vunpack.c.l.b16 %v729
        %v1948 = vunpack.c.h.b16 %v729
        %v1949 = vunpack.c.l.b16 %v730
        %v1950 = vunpack.c.l.b16 %v731
        %v1951 = vunpack.c.h.b16 %v731
        %v1952 = vunpack.c.l.b16 %v732
        %v1953 = vunpack.c.l.b16 %v733
        %v1954 = vunpack.c.h.b16 %v733
        %v1955 = vunpack.c.l.b16 %v734
        %v1956 = vunpack.c.l.b16 %v735
        %v1957 = vunpack.c.h.b16 %v735
        %v1958 = vunpack.c.l.b16 %v736
        %v1959 = vunpack.c.l.b16 %v737
        %v1960 = vunpack.c.h.b16 %v737
        %v1961 = vunpack.c.l.b16 %v738
        %v1962 = vunpack.c.l.b16 %v739
        %v1963 = vunpack.c.h.b16 %v739
        %v1964 = vunpack.c.l.b16 %v740
        %v1965 = vunpack.c.l.b16 %v741
        %v1966 = vunpack.c.h.b16 %v741
        %v1967 = vunpack.c.l.b16 %v742
        %v1968 = vunpack.c.l.b16 %v743
        %v1969 = vunpack.c.h.b16 %v743
        %v1970 = vunpack.c.l.b16 %v744
        %v1971 = vunpack.c.l.b16 %v745
        %v1972 = vunpack.c.h.b16 %v745
        %v1973 = vunpack.c.l.b16 %v746
        %v1974 = vunpack.c.l.b16 %v747
        %v1975 = vunpack.c.h.b16 %v747
        %v1976 = vunpack.c.l.b16 %v748
        %v1977 = vunpack.c.l.b16 %v749
        %v1978 = vunpack.c.h.b16 %v749
        %v1979 = vunpack.c.l.b16 %v750
        %v1980 = vunpack.c.l.b16 %v751
        %v1981 = vunpack.c.h.b16 %v751
        %v1982 = vunpack.c.l.b16 %v752
        %v1983 = vunpack.c.l.b16 %v753
        %v1984 = vunpack.c.h.b16 %v753
        %v1985 = vunpack.c.l.b16 %v754
        %v1986 = vunpack.c.l.b16 %v755
        %v1987 = vunpack.c.h.b16 %v755
        %v1988 = vunpack.c.l.b16 %v756
        %v1989 = vunpack.c.l.b16 %v757
        %v1990 = vunpack.c.h.b16 %v757
        %v1991 = vunpack.c.l.b16 %v758
        %v1992 = vunpack.c.l.b16 %v759
        %v1993 = vunpack.c.h.b16 %v759
        %v1994 = vunpack.c.l.b16 %v760
        %v1995 = vunpack.c.l.b16 %v761
        %v1996 = vunpack.c.h.b16 %v761
        %v1997 = vunpack.c.l.b16 %v762
        %v1998 = vunpack.c.l.b16 %v763
        %v1999 = vunpack.c.h.b16 %v763
        %v2000 = vunpack.c.l.b16 %v764
        %v2001 = vunpack.c.l.b16 %v765
        %v2002 = vunpack.c.h.b16 %v765
        %v2003 = vunpack.c.l.b16 %v766
        %v2004 = vunpack.c.l.b16 %v767
        %v2005 = vunpack.c.h.b16 %v767
        %v2006 = vunpack.c.l.b16 %v768
        %v2007 = vunpack.c.l.b16 %v769
        %v2008 = vunpack.c.h.b16 %v769
        %v2009 = vunpack.c.l.b16 %v770
        %v2010 = vunpack.c.l.b16 %v771
        %v2011 = vunpack.c.h.b16 %v771
        %v2012 = vunpack.c.l.b16 %v772
        %v2013 = vunpack.c.l.b16 %v773
        %v2014 = vunpack.c.h.b16 %v773
        %v2015 = vunpack.c.l.b16 %v774
        %v2016 = vunpack.c.l.b16 %v775
        %v2017 = vunpack.c.h.b16 %v775
        %v2018 = vunpack.c.l.b16 %v776
        %v2019 = vunpack.c.l.b16 %v777
        %v2020 = vunpack.c.h.b16 %v777
        %v2021 = vunpack.c.l.b16 %v778
        %v2022 = vunpack.c.l.b16 %v779
        %v2023 = vunpack.c.h.b16 %v779
        %v2024 = vunpack.c.l.b16 %v780
        %v2025 = vunpack.c.l.b16 %v781
        %v2026 = vunpack.c.h.b16 %v781
        %v2027 = vunpack.c.l.b16 %v782
        %v2028 = vunpack.c.l.b16 %v783
        %v2029 = vunpack.c.h.b16 %v783
        %v2030 = vunpack.c.l.b16 %v784
        %v2031 = vunpack.c.l.b16 %v785
        %v2032 = vunpack.c.h.b16 %v785
        %v2033 = vunpack.c.l.b16 %v786
        %v2034 = vunpack.c.l.b16 %v787
        %v2035 = vunpack.c.h.b16 %v787
        %v2036 = vunpack.c.l.b16 %v788
        %v2037 = vunpack.c.l.b16 %v789
        %v2038 = vunpack.c.h.b16 %v789
        %v2039 = vunpack.c.l.b16 %v790
        %v2040 = vunpack.c.l.b16 %v791
        %v2041 = vunpack.c.h.b16 %v791
        %v2042 = vunpack.c.l.b16 %v792
        %v2043 = vunpack.c.l.b16 %v793
        %v2044 = vunpack.c.h.b16 %v793
        %v2045 = vunpack.c.l.b16 %v794
        %v2046 = vunpack.c.l.b16 %v795
        %v2047 = vunpack.c.h.b16 %v795
        %v2048 = vunpack.c.l.b16 %v796
        %v2049 = vunpack.c.l.b16 %v797
        %v2050 = vunpack.c.h.b16 %v797
        %v2051 = vunpack.c.l.b16 %v798
        %v2052 = vunpack.c.l.b16 %v799
        %v2053 = vunpack.c.h.b16 %v799
        %v2054 = vunpack.c.l.b16 %v800
        %v2055 = vunpack.c.l.b16 %v801
        %v2056 = vunpack.c.h.b16 %v801
        %v2057 = vunpack.c.l.b16 %v802
        %v2058 = vunpack.c.l.b16 %v803
        %v2059 = vunpack.c.h.b16 %v803
        %v2060 = vunpack.c.l.b16 %v804
        %v2061 = vunpack.c.l.b16 %v805
        %v2062 = vunpack.c.h.b16 %v805
        %v2063 = vunpack.c.l.b16 %v806
        %v2064 = vunpack.c.l.b16 %v807
        %v2065 = vunpack.c.h.b16 %v807
        %v2066 = vunpack.c.l.b16 %v808
        %v2067 = vunpack.c.l.b16 %v809
        %v2068 = vunpack.c.h.b16 %v809
        %v2069 = vunpack.c.l.b16 %v810
        %v2070 = vunpack.c.l.b16 %v811
        %v2071 = vunpack.c.h.b16 %v811
        %v2072 = vunpack.c.l.b16 %v812
        %v2073 = vunpack.c.l.b16 %v813
        %v2074 = vunpack.c.h.b16 %v813
        %v2075 = vunpack.c.l.b16 %v814
        %v2076 = vunpack.c.l.b16 %v815
        %v2077 = vunpack.c.h.b16 %v815
        %v2078 = vunpack.c.l.b16 %v816
        %v2079 = vunpack.c.l.b16 %v817
        %v2080 = vunpack.c.h.b16 %v817
        %v2081 = vunpack.c.l.b16 %v818
        %v2082 = vunpack.c.l.b16 %v819
        %v2083 = vunpack.c.h.b16 %v819
        %v2084 = vunpack.c.l.b16 %v820
        %v2085 = vunpack.c.l.b16 %v821
        %v2086 = vunpack.c.h.b16 %v821
        %v2087 = vunpack.c.l.b16 %v822
        %v2088 = vunpack.c.l.b16 %v823
        %v2089 = vunpack.c.h.b16 %v823
        %v2090 = vunpack.c.l.b16 %v824
        %v2091 = vunpack.c.l.b16 %v825
        %v2092 = vunpack.c.h.b16 %v825
        %v2093 = vunpack.c.l.b16 %v826
        %v2094 = vunpack.c.l.b16 %v827
        %v2095 = vunpack.c.h.b16 %v827
        %v2096 = vunpack.c.l.b16 %v828
        %v2097 = vunpack.c.l.b16 %v829
        %v2098 = vunpack.c.h.b16 %v829
        %v2099 = vunpack.c.l.b16 %v830
        %v2100 = vunpack.c.l.b16 %v831
        %v2101 = vunpack.c.h.b16 %v831
        %v2102 = vunpack.c.l.b16 %v832
        %v2103 = vunpack.c.l.b16 %v833
        %v2104 = vunpack.c.h.b16 %v833
        %v2105 = vunpack.c.l.b16 %v834
        %v2106 = vunpack.c.l.b16 %v835
        %v2107 = vunpack.c.h.b16 %v835
        %v2108 = vunpack.c.l.b16 %v836
        %v2109 = vunpack.c.l.b16 %v837
        %v2110 = vunpack.c.h.b16 %v837
        %v2111 = vunpack.c.l.b16 %v838
        %v2112 = vunpack.c.l.b16 %v839
        %v2113 = vunpack.c.h.b16 %v839
        %v2114 = vunpack.c.l.b16 %v840
        %v2115 = vunpack.c.l.b16 %v841
        %v2116 = vunpack.c.h.b16 %v841
        %v2117 = vunpack.c.l.b16 %v842
        %v2118 = vunpack.c.l.b16 %v843
        %v2119 = vunpack.c.h.b16 %v843
        %v2120 = vunpack.c.l.b16 %v844
        %v2121 = vunpack.c.l.b16 %v845
        %v2122 = vunpack.c.h.b16 %v845
        %v2123 = vunpack.c.l.b16 %v846
        %v2124 = vunpack.c.l.b16 %v847
        %v2125 = vunpack.c.h.b16 %v847
        %v2126 = vunpack.c.l.b16 %v848
        %v2127 = vunpack.c.l.b16 %v849
        %v2128 = vunpack.c.h.b16 %v849
        %v2129 = vunpack.c.l.b16 %v850
        %v2130 = vunpack.c.l.b16 %v851
        %v2131 = vunpack.c.h.b16 %v851
        %v2132 = vunpack.c.l.b16 %v852
        %v2133 = vunpack.c.l.b16 %v853
        %v2134 = vunpack.c.h.b16 %v853
        %v2135 = vunpack.c.l.b16 %v854
        %v2136 = vunpack.c.l.b16 %v855
        %v2137 = vunpack.c.h.b16 %v855
        %v2138 = vunpack.c.l.b16 %v856
        %v2139 = vunpack.c.l.b16 %v857
        %v2140 = vunpack.c.h.b16 %v857
        %v2141 = vunpack.c.l.b16 %v858
        %v2142 = vunpack.c.l.b16 %v859
        %v2143 = vunpack.c.h.b16 %v859
        %v2144 = vunpack.c.l.b16 %v860
        %v2145 = vunpack.c.l.b16 %v861
        %v2146 = vunpack.c.h.b16 %v861
        %v2147 = vunpack.c.l.b16 %v862
        %v2148 = vunpack.c.l.b16 %v863
        %v2149 = vunpack.c.h.b16 %v863
        %v2150 = vunpack.c.l.b16 %v864
        %v2151 = vunpack.c.l.b16 %v865
        %v2152 = vunpack.c.h.b16 %v865
        %v2153 = vunpack.c.l.b16 %v866
        %v2154 = vunpack.c.l.b16 %v867
        %v2155 = vunpack.c.h.b16 %v867
        %v2156 = vunpack.c.l.b16 %v868
        %v2157 = vunpack.c.l.b16 %v869
        %v2158 = vunpack.c.h.b16 %v869
        %v2159 = vunpack.c.l.b16 %v870
        %v2160 = vunpack.c.l.b16 %v871
        %v2161 = vunpack.c.h.b16 %v871
        %v2162 = vunpack.c.l.b16 %v872
        %v2163 = vunpack.c.l.b16 %v873
        %v2164 = vunpack.c.h.b16 %v873
        %v2165 = vunpack.c.l.b16 %v874
        %v2166 = vunpack.c.l.b16 %v875
        %v2167 = vunpack.c.h.b16 %v875
        %v2168 = vunpack.c.l.b16 %v876
        %v2169 = vunpack.c.l.b16 %v877
        %v2170 = vunpack.c.h.b16 %v877
        %v2171 = vunpack.c.l.b16 %v878
        %v2172 = vunpack.c.l.b16 %v879
        %v2173 = vunpack.c.h.b16 %v879
        %v2174 = vunpack.c.l.b16 %v880
        %v2175 = vunpack.c.l.b16 %v881
        %v2176 = vunpack.c.h.b16 %v881
        %v2177 = vunpack.c.l.b16 %v882
        %v2178 = vunpack.c.l.b16 %v883
        %v2179 = vunpack.c.h.b16 %v883
        %v2180 = vunpack.c.l.b16 %v884
        %v2181 = vunpack.c.l.b16 %v885
        %v2182 = vunpack.c.h.b16 %v885
        %v2183 = vunpack.c.l.b16 %v886
        %v2184 = vunpack.c.l.b16 %v887
        %v2185 = vunpack.c.h.b16 %v887
        %v2186 = vunpack.c.l.b16 %v888
        %v2187 = vunpack.c.l.b16 %v889
        %v2188 = vunpack.c.h.b16 %v889
        %v2189 = vunpack.c.l.b16 %v890
        %v2190 = vunpack.c.l.b16 %v891
        %v2191 = vunpack.c.h.b16 %v891
        %v2192 = vunpack.c.l.b16 %v892
        %v2193 = vpack.c.b16 %v1716, %v1713
        %v2194 = vpack.c.b16 %v1717, %v1714
        %v2195 = vpack.c.b16 %v1718, %v1715
        %v2196 = vpack.c.b16 %v1722, %v1719
        %v2197 = vpack.c.b16 %v1723, %v1720
        %v2198 = vpack.c.b16 %v1724, %v1721
        %v2199 = vpack.c.b16 %v1728, %v1725
        %v2200 = vpack.c.b16 %v1729, %v1726
        %v2201 = vpack.c.b16 %v1730, %v1727
        %v2202 = vpack.c.b16 %v1734, %v1731
        %v2203 = vpack.c.b16 %v1735, %v1732
        %v2204 = vpack.c.b16 %v1736, %v1733
        %v2205 = vpack.c.b16 %v1740, %v1737
        %v2206 = vpack.c.b16 %v1741, %v1738
        %v2207 = vpack.c.b16 %v1742, %v1739
        %v2208 = vpack.c.b16 %v1746, %v1743
        %v2209 = vpack.c.b16 %v1747, %v1744
        %v2210 = vpack.c.b16 %v1748, %v1745
        %v2211 = vpack.c.b16 %v1752, %v1749
        %v2212 = vpack.c.b16 %v1753, %v1750
        %v2213 = vpack.c.b16 %v1754, %v1751
        %v2214 = vpack.c.b16 %v1758, %v1755
        %v2215 = vpack.c.b16 %v1759, %v1756
        %v2216 = vpack.c.b16 %v1760, %v1757
        %v2217 = vpack.c.b16 %v1764, %v1761
        %v2218 = vpack.c.b16 %v1765, %v1762
        %v2219 = vpack.c.b16 %v1766, %v1763
        %v2220 = vpack.c.b16 %v1770, %v1767
        %v2221 = vpack.c.b16 %v1771, %v1768
        %v2222 = vpack.c.b16 %v1772, %v1769
        %v2223 = vpack.c.b16 %v1776, %v1773
        %v2224 = vpack.c.b16 %v1777, %v1774
        %v2225 = vpack.c.b16 %v1778, %v1775
        %v2226 = vpack.c.b16 %v1782, %v1779
        %v2227 = vpack.c.b16 %v1783, %v1780
        %v2228 = vpack.c.b16 %v1784, %v1781
        %v2229 = vpack.c.b16 %v1788, %v1785
        %v2230 = vpack.c.b16 %v1789, %v1786
        %v2231 = vpack.c.b16 %v1790, %v1787
        %v2232 = vpack.c.b16 %v1794, %v1791
        %v2233 = vpack.c.b16 %v1795, %v1792
        %v2234 = vpack.c.b16 %v1796, %v1793
        %v2235 = vpack.c.b16 %v1800, %v1797
        %v2236 = vpack.c.b16 %v1801, %v1798
        %v2237 = vpack.c.b16 %v1802, %v1799
        %v2238 = vpack.c.b16 %v1806, %v1803
        %v2239 = vpack.c.b16 %v1807, %v1804
        %v2240 = vpack.c.b16 %v1808, %v1805
        %v2241 = vpack.c.b16 %v1812, %v1809
        %v2242 = vpack.c.b16 %v1813, %v1810
        %v2243 = vpack.c.b16 %v1814, %v1811
        %v2244 = vpack.c.b16 %v1818, %v1815
        %v2245 = vpack.c.b16 %v1819, %v1816
        %v2246 = vpack.c.b16 %v1820, %v1817
        %v2247 = vpack.c.b16 %v1824, %v1821
        %v2248 = vpack.c.b16 %v1825, %v1822
        %v2249 = vpack.c.b16 %v1826, %v1823
        %v2250 = vpack.c.b16 %v1830, %v1827
        %v2251 = vpack.c.b16 %v1831, %v1828
        %v2252 = vpack.c.b16 %v1832, %v1829
        %v2253 = vpack.c.b16 %v1836, %v1833
        %v2254 = vpack.c.b16 %v1837, %v1834
        %v2255 = vpack.c.b16 %v1838, %v1835
        %v2256 = vpack.c.b16 %v1842, %v1839
        %v2257 = vpack.c.b16 %v1843, %v1840
        %v2258 = vpack.c.b16 %v1844, %v1841
        %v2259 = vpack.c.b16 %v1848, %v1845
        %v2260 = vpack.c.b16 %v1849, %v1846
        %v2261 = vpack.c.b16 %v1850, %v1847
        %v2262 = vpack.c.b16 %v1854, %v1851
        %v2263 = vpack.c.b16 %v1855, %v1852
        %v2264 = vpack.c.b16 %v1856, %v1853
        %v2265 = vpack.c.b16 %v1860, %v1857
        %v2266 = vpack.c.b16 %v1861, %v1858
        %v2267 = vpack.c.b16 %v1862, %v1859
        %v2268 = vpack.c.b16 %v1866, %v1863
        %v2269 = vpack.c.b16 %v1867, %v1864
        %v2270 = vpack.c.b16 %v1868, %v1865
        %v2271 = vpack.c.b16 %v1872, %v1869
        %v2272 = vpack.c.b16 %v1873, %v1870
        %v2273 = vpack.c.b16 %v1874, %v1871
        %v2274 = vpack.c.b16 %v1878, %v1875
        %v2275 = vpack.c.b16 %v1879, %v1876
        %v2276 = vpack.c.b16 %v1880, %v1877
        %v2277 = vpack.c.b16 %v1884, %v1881
        %v2278 = vpack.c.b16 %v1885, %v1882
        %v2279 = vpack.c.b16 %v1886, %v1883
        %v2280 = vpack.c.b16 %v1890, %v1887
        %v2281 = vpack.c.b16 %v1891, %v1888
        %v2282 = vpack.c.b16 %v1892, %v1889
        %v2283 = vpack.c.b16 %v1896, %v1893
        %v2284 = vpack.c.b16 %v1897, %v1894
        %v2285 = vpack.c.b16 %v1898, %v1895
        %v2286 = vpack.c.b16 %v1902, %v1899
        %v2287 = vpack.c.b16 %v1903, %v1900
        %v2288 = vpack.c.b16 %v1904, %v1901
        %v2289 = vpack.c.b16 %v1908, %v1905
        %v2290 = vpack.c.b16 %v1909, %v1906
        %v2291 = vpack.c.b16 %v1910, %v1907
        %v2292 = vpack.c.b16 %v1914, %v1911
        %v2293 = vpack.c.b16 %v1915, %v1912
        %v2294 = vpack.c.b16 %v1916, %v1913
        %v2295 = vpack.c.b16 %v1920, %v1917
        %v2296 = vpack.c.b16 %v1921, %v1918
        %v2297 = vpack.c.b16 %v1922, %v1919
        %v2298 = vpack.c.b16 %v1926, %v1923
        %v2299 = vpack.c.b16 %v1927, %v1924
        %v2300 = vpack.c.b16 %v1928, %v1925
        %v2301 = vpack.c.b16 %v1932, %v1929
        %v2302 = vpack.c.b16 %v1933, %v1930
        %v2303 = vpack.c.b16 %v1934, %v1931
        %v2304 = vpack.c.b16 %v1938, %v1935
        %v2305 = vpack.c.b16 %v1939, %v1936
        %v2306 = vpack.c.b16 %v1940, %v1937
        %v2307 = vpack.c.b16 %v1944, %v1941
        %v2308 = vpack.c.b16 %v1945, %v1942
        %v2309 = vpack.c.b16 %v1946, %v1943
        %v2310 = vpack.c.b16 %v1950, %v1947
        %v2311 = vpack.c.b16 %v1951, %v1948
        %v2312 = vpack.c.b16 %v1952, %v1949
        %v2313 = vpack.c.b16 %v1956, %v1953
        %v2314 = vpack.c.b16 %v1957, %v1954
        %v2315 = vpack.c.b16 %v1958, %v1955
        %v2316 = vpack.c.b16 %v1962, %v1959
        %v2317 = vpack.c.b16 %v1963, %v1960
        %v2318 = vpack.c.b16 %v1964, %v1961
        %v2319 = vpack.c.b16 %v1968, %v1965
        %v2320 = vpack.c.b16 %v1969, %v1966
        %v2321 = vpack.c.b16 %v1970, %v1967
        %v2322 = vpack.c.b16 %v1974, %v1971
        %v2323 = vpack.c.b16 %v1975, %v1972
        %v2324 = vpack.c.b16 %v1976, %v1973
        %v2325 = vpack.c.b16 %v1980, %v1977
        %v2326 = vpack.c.b16 %v1981, %v1978
        %v2327 = vpack.c.b16 %v1982, %v1979
        %v2328 = vpack.c.b16 %v1986, %v1983
        %v2329 = vpack.c.b16 %v1987, %v1984
        %v2330 = vpack.c.b16 %v1988, %v1985
        %v2331 = vpack.c.b16 %v1992, %v1989
        %v2332 = vpack.c.b16 %v1993, %v1990
        %v2333 = vpack.c.b16 %v1994, %v1991
        %v2334 = vpack.c.b16 %v1998, %v1995
        %v2335 = vpack.c.b16 %v1999, %v1996
        %v2336 = vpack.c.b16 %v2000, %v1997
        %v2337 = vpack.c.b16 %v2004, %v2001
        %v2338 = vpack.c.b16 %v2005, %v2002
        %v2339 = vpack.c.b16 %v2006, %v2003
        %v2340 = vpack.c.b16 %v2010, %v2007
        %v2341 = vpack.c.b16 %v2011, %v2008
        %v2342 = vpack.c.b16 %v2012, %v2009
        %v2343 = vpack.c.b16 %v2016, %v2013
        %v2344 = vpack.c.b16 %v2017, %v2014
        %v2345 = vpack.c.b16 %v2018, %v2015
        %v2346 = vpack.c.b16 %v2022, %v2019
        %v2347 = vpack.c.b16 %v2023, %v2020
        %v2348 = vpack.c.b16 %v2024, %v2021
        %v2349 = vpack.c.b16 %v2028, %v2025
        %v2350 = vpack.c.b16 %v2029, %v2026
        %v2351 = vpack.c.b16 %v2030, %v2027
        %v2352 = vpack.c.b16 %v2034, %v2031
        %v2353 = vpack.c.b16 %v2035, %v2032
        %v2354 = vpack.c.b16 %v2036, %v2033
        %v2355 = vpack.c.b16 %v2040, %v2037
        %v2356 = vpack.c.b16 %v2041, %v2038
        %v2357 = vpack.c.b16 %v2042, %v2039
        %v2358 = vpack.c.b16 %v2046, %v2043
        %v2359 = vpack.c.b16 %v2047, %v2044
        %v2360 = vpack.c.b16 %v2048, %v2045
        %v2361 = vpack.c.b16 %v2052, %v2049
        %v2362 = vpack.c.b16 %v2053, %v2050
        %v2363 = vpack.c.b16 %v2054, %v2051
        %v2364 = vpack.c.b16 %v2058, %v2055
        %v2365 = vpack.c.b16 %v2059, %v2056
        %v2366 = vpack.c.b16 %v2060, %v2057
        %v2367 = vpack.c.b16 %v2064, %v2061
        %v2368 = vpack.c.b16 %v2065, %v2062
        %v2369 = vpack.c.b16 %v2066, %v2063
        %v2370 = vpack.c.b16 %v2070, %v2067
        %v2371 = vpack.c.b16 %v2071, %v2068
        %v2372 = vpack.c.b16 %v2072, %v2069
        %v2373 = vpack.c.b16 %v2076, %v2073
        %v2374 = vpack.c.b16 %v2077, %v2074
        %v2375 = vpack.c.b16 %v2078, %v2075
        %v2376 = vpack.c.b16 %v2082, %v2079
        %v2377 = vpack.c.b16 %v2083, %v2080
        %v2378 = vpack.c.b16 %v2084, %v2081
        %v2379 = vpack.c.b16 %v2088, %v2085
        %v2380 = vpack.c.b16 %v2089, %v2086
        %v2381 = vpack.c.b16 %v2090, %v2087
        %v2382 = vpack.c.b16 %v2094, %v2091
        %v2383 = vpack.c.b16 %v2095, %v2092
        %v2384 = vpack.c.b16 %v2096, %v2093
        %v2385 = vpack.c.b16 %v2100, %v2097
        %v2386 = vpack.c.b16 %v2101, %v2098
        %v2387 = vpack.c.b16 %v2102, %v2099
        %v2388 = vpack.c.b16 %v2106, %v2103
        %v2389 = vpack.c.b16 %v2107, %v2104
        %v2390 = vpack.c.b16 %v2108, %v2105
        %v2391 = vpack.c.b16 %v2112, %v2109
        %v2392 = vpack.c.b16 %v2113, %v2110
        %v2393 = vpack.c.b16 %v2114, %v2111
        %v2394 = vpack.c.b16 %v2118, %v2115
        %v2395 = vpack.c.b16 %v2119, %v2116
        %v2396 = vpack.c.b16 %v2120, %v2117
        %v2397 = vpack.c.b16 %v2124, %v2121
        %v2398 = vpack.c.b16 %v2125, %v2122
        %v2399 = vpack.c.b16 %v2126, %v2123
        %v2400 = vpack.c.b16 %v2130, %v2127
        %v2401 = vpack.c.b16 %v2131, %v2128
        %v2402 = vpack.c.b16 %v2132, %v2129
        %v2403 = vpack.c.b16 %v2136, %v2133
        %v2404 = vpack.c.b16 %v2137, %v2134
        %v2405 = vpack.c.b16 %v2138, %v2135
        %v2406 = vpack.c.b16 %v2142, %v2139
        %v2407 = vpack.c.b16 %v2143, %v2140
        %v2408 = vpack.c.b16 %v2144, %v2141
        %v2409 = vpack.c.b16 %v2148, %v2145
        %v2410 = vpack.c.b16 %v2149, %v2146
        %v2411 = vpack.c.b16 %v2150, %v2147
        %v2412 = vpack.c.b16 %v2154, %v2151
        %v2413 = vpack.c.b16 %v2155, %v2152
        %v2414 = vpack.c.b16 %v2156, %v2153
        %v2415 = vpack.c.b16 %v2160, %v2157
        %v2416 = vpack.c.b16 %v2161, %v2158
        %v2417 = vpack.c.b16 %v2162, %v2159
        %v2418 = vpack.c.b16 %v2166, %v2163
        %v2419 = vpack.c.b16 %v2167, %v2164
        %v2420 = vpack.c.b16 %v2168, %v2165
        %v2421 = vpack.c.b16 %v2172, %v2169
        %v2422 = vpack.c.b16 %v2173, %v2170
        %v2423 = vpack.c.b16 %v2174, %v2171
        %v2424 = vpack.c.b16 %v2178, %v2175
        %v2425 = vpack.c.b16 %v2179, %v2176
        %v2426 = vpack.c.b16 %v2180, %v2177
        %v2427 = vpack.c.b16 %v2184, %v2181
        %v2428 = vpack.c.b16 %v2185, %v2182
        %v2429 = vpack.c.b16 %v2186, %v2183
        %v2430 = vpack.c.b16 %v2190, %v2187
        %v2431 = vpack.c.b16 %v2191, %v2188
        %v2432 = vpack.c.b16 %v2192, %v2189
        %2673 = vmatpush.bf16.msra.mxu0 %v2214
        %2674 = vmatpush.bf16.msra.mxu0 %v2211
        %2675 = vmatpush.bf16.msra.mxu0 %v2208
        %2676 = vmatpush.bf16.msra.mxu0 %v2205
        %2677 = vmatpush.bf16.msra.mxu0 %v2202
        %2678 = vmatpush.bf16.msra.mxu0 %v2199
        %2679 = vmatpush.bf16.msra.mxu0 %v2196
        %2680 = vmatpush.bf16.msra.mxu0 %v2193
        %2681 = vmatmul.bf16.gmra.mxu0 %v1193
        %v2682 = vpop.f32.mrf.mxu0
        %v2683 = vadd.f32 0.0, %v2682
        %v2684 = vpop.f32.mrf.mxu0
        %v2685 = vadd.f32 0.0, %v2684
        %2686 = vmatmul.bf16.gmra.mxu0 %v1203
        %v2687 = vpop.f32.mrf.mxu0
        %v2688 = vadd.f32 0.0, %v2687
        %v2689 = vpop.f32.mrf.mxu0
        %v2690 = vadd.f32 0.0, %v2689
        %2691 = vmatmul.bf16.gmra.mxu0 %v1213
        %v2692 = vpop.f32.mrf.mxu0
        %v2693 = vadd.f32 0.0, %v2692
        %v2694 = vpop.f32.mrf.mxu0
        %v2695 = vadd.f32 0.0, %v2694
        %2696 = vmatmul.bf16.gmra.mxu0 %v1223
        %v2697 = vpop.f32.mrf.mxu0
        %v2698 = vadd.f32 0.0, %v2697
        %v2699 = vpop.f32.mrf.mxu0
        %v2700 = vadd.f32 0.0, %v2699
        %2701 = vmatmul.bf16.gmra.mxu0 %v1233
        %v2702 = vpop.f32.mrf.mxu0
        %v2703 = vadd.f32 0.0, %v2702
        %v2704 = vpop.f32.mrf.mxu0
        %v2705 = vadd.f32 0.0, %v2704
        %2706 = vmatmul.bf16.gmra.mxu0 %v1243
        %v2707 = vpop.f32.mrf.mxu0
        %v2708 = vadd.f32 0.0, %v2707
        %v2709 = vpop.f32.mrf.mxu0
        %v2710 = vadd.f32 0.0, %v2709
        %2711 = vmatmul.bf16.gmra.mxu0 %v1253
        %v2712 = vpop.f32.mrf.mxu0
        %v2713 = vadd.f32 0.0, %v2712
        %v2714 = vpop.f32.mrf.mxu0
        %v2715 = vadd.f32 0.0, %v2714
        %2716 = vmatmul.bf16.gmra.mxu0 %v1263
        %v2717 = vpop.f32.mrf.mxu0
        %v2718 = vadd.f32 0.0, %v2717
        %v2719 = vpop.f32.mrf.mxu0
        %v2720 = vadd.f32 0.0, %v2719
        %2721 = vmatmul.bf16.gmra.mxu0 %v1273
        %v2722 = vpop.f32.mrf.mxu0
        %v2723 = vadd.f32 0.0, %v2722
        %v2724 = vpop.f32.mrf.mxu0
        %v2725 = vadd.f32 0.0, %v2724
        %2726 = vmatmul.bf16.gmra.mxu0 %v1283
        %v2727 = vpop.f32.mrf.mxu0
        %v2728 = vpop.f32.mrf.mxu0
        %2729 = vdwg.mxu0
        %2730 = vmatpush.bf16.msra.mxu0 %v2238
        %2731 = vmatpush.bf16.msra.mxu0 %v2235
        %2732 = vmatpush.bf16.msra.mxu0 %v2232
        %2733 = vmatpush.bf16.msra.mxu0 %v2229
        %2734 = vmatpush.bf16.msra.mxu0 %v2226
        %2735 = vmatpush.bf16.msra.mxu0 %v2223
        %2736 = vmatpush.bf16.msra.mxu0 %v2220
        %2737 = vmatpush.bf16.msra.mxu0 %v2217
        %2738 = vmatmul.bf16.gmra.mxu0 %v1194
        %v2739 = vpop.f32.mrf.mxu0
        %v2740 = vadd.f32 %v2683, %v2739
        %v2741 = vpop.f32.mrf.mxu0
        %v2742 = vadd.f32 %v2685, %v2741
        %2743 = vmatmul.bf16.gmra.mxu0 %v1204
        %v2744 = vpop.f32.mrf.mxu0
        %v2745 = vadd.f32 %v2688, %v2744
        %v2746 = vpop.f32.mrf.mxu0
        %v2747 = vadd.f32 %v2690, %v2746
        %2748 = vmatmul.bf16.gmra.mxu0 %v1214
        %v2749 = vpop.f32.mrf.mxu0
        %v2750 = vadd.f32 %v2693, %v2749
        %v2751 = vpop.f32.mrf.mxu0
        %v2752 = vadd.f32 %v2695, %v2751
        %2753 = vmatmul.bf16.gmra.mxu0 %v1224
        %v2754 = vpop.f32.mrf.mxu0
        %v2755 = vadd.f32 %v2698, %v2754
        %v2756 = vpop.f32.mrf.mxu0
        %v2757 = vadd.f32 %v2700, %v2756
        %2758 = vmatmul.bf16.gmra.mxu0 %v1234
        %v2759 = vpop.f32.mrf.mxu0
        %v2760 = vadd.f32 %v2703, %v2759
        %v2761 = vpop.f32.mrf.mxu0
        %v2762 = vadd.f32 %v2705, %v2761
        %2763 = vmatmul.bf16.gmra.mxu0 %v1244
        %v2764 = vpop.f32.mrf.mxu0
        %v2765 = vadd.f32 %v2708, %v2764
        %v2766 = vpop.f32.mrf.mxu0
        %v2767 = vadd.f32 %v2710, %v2766
        %2768 = vmatmul.bf16.gmra.mxu0 %v1254
        %v2769 = vpop.f32.mrf.mxu0
        %v2770 = vadd.f32 %v2713, %v2769
        %v2771 = vpop.f32.mrf.mxu0
        %v2772 = vadd.f32 %v2715, %v2771
        %2773 = vmatmul.bf16.gmra.mxu0 %v1264
        %v2774 = vpop.f32.mrf.mxu0
        %v2775 = vadd.f32 %v2718, %v2774
        %v2776 = vpop.f32.mrf.mxu0
        %v2777 = vadd.f32 %v2720, %v2776
        %2778 = vmatmul.bf16.gmra.mxu0 %v1274
        %v2779 = vpop.f32.mrf.mxu0
        %v2780 = vadd.f32 %v2723, %v2779
        %v2781 = vpop.f32.mrf.mxu0
        %v2782 = vadd.f32 %v2725, %v2781
        %2783 = vmatmul.bf16.gmra.mxu0 %v1284
        %v2784 = vpop.f32.mrf.mxu0
        %v2785 = vpop.f32.mrf.mxu0
        %2786 = vdwg.mxu0
        %2787 = vmatpush.bf16.msra.mxu0 %v2262
        %2788 = vmatpush.bf16.msra.mxu0 %v2259
        %2789 = vmatpush.bf16.msra.mxu0 %v2256
        %2790 = vmatpush.bf16.msra.mxu0 %v2253
        %2791 = vmatpush.bf16.msra.mxu0 %v2250
        %2792 = vmatpush.bf16.msra.mxu0 %v2247
        %2793 = vmatpush.bf16.msra.mxu0 %v2244
        %2794 = vmatpush.bf16.msra.mxu0 %v2241
        %2795 = vmatmul.bf16.gmra.mxu0 %v1195
        %v2796 = vpop.f32.mrf.mxu0
        %v2797 = vadd.f32 %v2740, %v2796
        %v2798 = vpop.f32.mrf.mxu0
        %v2799 = vadd.f32 %v2742, %v2798
        %2800 = vmatmul.bf16.gmra.mxu0 %v1205
        %v2801 = vpop.f32.mrf.mxu0
        %v2802 = vadd.f32 %v2745, %v2801
        %v2803 = vpop.f32.mrf.mxu0
        %v2804 = vadd.f32 %v2747, %v2803
        %2805 = vmatmul.bf16.gmra.mxu0 %v1215
        %v2806 = vpop.f32.mrf.mxu0
        %v2807 = vadd.f32 %v2750, %v2806
        %v2808 = vpop.f32.mrf.mxu0
        %v2809 = vadd.f32 %v2752, %v2808
        %2810 = vmatmul.bf16.gmra.mxu0 %v1225
        %v2811 = vpop.f32.mrf.mxu0
        %v2812 = vadd.f32 %v2755, %v2811
        %v2813 = vpop.f32.mrf.mxu0
        %v2814 = vadd.f32 %v2757, %v2813
        %2815 = vmatmul.bf16.gmra.mxu0 %v1235
        %v2816 = vpop.f32.mrf.mxu0
        %v2817 = vadd.f32 %v2760, %v2816
        %v2818 = vpop.f32.mrf.mxu0
        %v2819 = vadd.f32 %v2762, %v2818
        %2820 = vmatmul.bf16.gmra.mxu0 %v1245
        %v2821 = vpop.f32.mrf.mxu0
        %v2822 = vadd.f32 %v2765, %v2821
        %v2823 = vpop.f32.mrf.mxu0
        %v2824 = vadd.f32 %v2767, %v2823
        %2825 = vmatmul.bf16.gmra.mxu0 %v1255
        %v2826 = vpop.f32.mrf.mxu0
        %v2827 = vadd.f32 %v2770, %v2826
        %v2828 = vpop.f32.mrf.mxu0
        %v2829 = vadd.f32 %v2772, %v2828
        %2830 = vmatmul.bf16.gmra.mxu0 %v1265
        %v2831 = vpop.f32.mrf.mxu0
        %v2832 = vadd.f32 %v2775, %v2831
        %v2833 = vpop.f32.mrf.mxu0
        %v2834 = vadd.f32 %v2777, %v2833
        %2835 = vmatmul.bf16.gmra.mxu0 %v1275
        %v2836 = vpop.f32.mrf.mxu0
        %v2837 = vadd.f32 %v2780, %v2836
        %v2838 = vpop.f32.mrf.mxu0
        %v2839 = vadd.f32 %v2782, %v2838
        %2840 = vmatmul.bf16.gmra.mxu0 %v1285
        %v2841 = vpop.f32.mrf.mxu0
        %v2842 = vpop.f32.mrf.mxu0
        %2843 = vdwg.mxu0
        %2844 = vmatpush.bf16.msra.mxu0 %v2286
        %2845 = vmatpush.bf16.msra.mxu0 %v2283
        %2846 = vmatpush.bf16.msra.mxu0 %v2280
        %2847 = vmatpush.bf16.msra.mxu0 %v2277
        %2848 = vmatpush.bf16.msra.mxu0 %v2274
        %2849 = vmatpush.bf16.msra.mxu0 %v2271
        %2850 = vmatpush.bf16.msra.mxu0 %v2268
        %2851 = vmatpush.bf16.msra.mxu0 %v2265
        %2852 = vmatmul.bf16.gmra.mxu0 %v1196
        %v2853 = vpop.f32.mrf.mxu0
        %v2854 = vadd.f32 %v2797, %v2853
        %v2855 = vpop.f32.mrf.mxu0
        %v2856 = vadd.f32 %v2799, %v2855
        %2857 = vmatmul.bf16.gmra.mxu0 %v1206
        %v2858 = vpop.f32.mrf.mxu0
        %v2859 = vadd.f32 %v2802, %v2858
        %v2860 = vpop.f32.mrf.mxu0
        %v2861 = vadd.f32 %v2804, %v2860
        %2862 = vmatmul.bf16.gmra.mxu0 %v1216
        %v2863 = vpop.f32.mrf.mxu0
        %v2864 = vadd.f32 %v2807, %v2863
        %v2865 = vpop.f32.mrf.mxu0
        %v2866 = vadd.f32 %v2809, %v2865
        %2867 = vmatmul.bf16.gmra.mxu0 %v1226
        %v2868 = vpop.f32.mrf.mxu0
        %v2869 = vadd.f32 %v2812, %v2868
        %v2870 = vpop.f32.mrf.mxu0
        %v2871 = vadd.f32 %v2814, %v2870
        %2872 = vmatmul.bf16.gmra.mxu0 %v1236
        %v2873 = vpop.f32.mrf.mxu0
        %v2874 = vadd.f32 %v2817, %v2873
        %v2875 = vpop.f32.mrf.mxu0
        %v2876 = vadd.f32 %v2819, %v2875
        %2877 = vmatmul.bf16.gmra.mxu0 %v1246
        %v2878 = vpop.f32.mrf.mxu0
        %v2879 = vadd.f32 %v2822, %v2878
        %v2880 = vpop.f32.mrf.mxu0
        %v2881 = vadd.f32 %v2824, %v2880
        %2882 = vmatmul.bf16.gmra.mxu0 %v1256
        %v2883 = vpop.f32.mrf.mxu0
        %v2884 = vadd.f32 %v2827, %v2883
        %v2885 = vpop.f32.mrf.mxu0
        %v2886 = vadd.f32 %v2829, %v2885
        %2887 = vmatmul.bf16.gmra.mxu0 %v1266
        %v2888 = vpop.f32.mrf.mxu0
        %v2889 = vadd.f32 %v2832, %v2888
        %v2890 = vpop.f32.mrf.mxu0
        %v2891 = vadd.f32 %v2834, %v2890
        %2892 = vmatmul.bf16.gmra.mxu0 %v1276
        %v2893 = vpop.f32.mrf.mxu0
        %v2894 = vadd.f32 %v2837, %v2893
        %v2895 = vpop.f32.mrf.mxu0
        %v2896 = vadd.f32 %v2839, %v2895
        %2897 = vmatmul.bf16.gmra.mxu0 %v1286
        %v2898 = vpop.f32.mrf.mxu0
        %v2899 = vpop.f32.mrf.mxu0
        %2900 = vdwg.mxu0
        %2901 = vmatpush.bf16.msra.mxu0 %v2310
        %2902 = vmatpush.bf16.msra.mxu0 %v2307
        %2903 = vmatpush.bf16.msra.mxu0 %v2304
        %2904 = vmatpush.bf16.msra.mxu0 %v2301
        %2905 = vmatpush.bf16.msra.mxu0 %v2298
        %2906 = vmatpush.bf16.msra.mxu0 %v2295
        %2907 = vmatpush.bf16.msra.mxu0 %v2292
        %2908 = vmatpush.bf16.msra.mxu0 %v2289
        %2909 = vmatmul.bf16.gmra.mxu0 %v1197
        %v2910 = vpop.f32.mrf.mxu0
        %v2911 = vadd.f32 %v2854, %v2910
        %v2912 = vpop.f32.mrf.mxu0
        %v2913 = vadd.f32 %v2856, %v2912
        %2914 = vmatmul.bf16.gmra.mxu0 %v1207
        %v2915 = vpop.f32.mrf.mxu0
        %v2916 = vadd.f32 %v2859, %v2915
        %v2917 = vpop.f32.mrf.mxu0
        %v2918 = vadd.f32 %v2861, %v2917
        %2919 = vmatmul.bf16.gmra.mxu0 %v1217
        %v2920 = vpop.f32.mrf.mxu0
        %v2921 = vadd.f32 %v2864, %v2920
        %v2922 = vpop.f32.mrf.mxu0
        %v2923 = vadd.f32 %v2866, %v2922
        %2924 = vmatmul.bf16.gmra.mxu0 %v1227
        %v2925 = vpop.f32.mrf.mxu0
        %v2926 = vadd.f32 %v2869, %v2925
        %v2927 = vpop.f32.mrf.mxu0
        %v2928 = vadd.f32 %v2871, %v2927
        %2929 = vmatmul.bf16.gmra.mxu0 %v1237
        %v2930 = vpop.f32.mrf.mxu0
        %v2931 = vadd.f32 %v2874, %v2930
        %v2932 = vpop.f32.mrf.mxu0
        %v2933 = vadd.f32 %v2876, %v2932
        %2934 = vmatmul.bf16.gmra.mxu0 %v1247
        %v2935 = vpop.f32.mrf.mxu0
        %v2936 = vadd.f32 %v2879, %v2935
        %v2937 = vpop.f32.mrf.mxu0
        %v2938 = vadd.f32 %v2881, %v2937
        %2939 = vmatmul.bf16.gmra.mxu0 %v1257
        %v2940 = vpop.f32.mrf.mxu0
        %v2941 = vadd.f32 %v2884, %v2940
        %v2942 = vpop.f32.mrf.mxu0
        %v2943 = vadd.f32 %v2886, %v2942
        %2944 = vmatmul.bf16.gmra.mxu0 %v1267
        %v2945 = vpop.f32.mrf.mxu0
        %v2946 = vadd.f32 %v2889, %v2945
        %v2947 = vpop.f32.mrf.mxu0
        %v2948 = vadd.f32 %v2891, %v2947
        %2949 = vmatmul.bf16.gmra.mxu0 %v1277
        %v2950 = vpop.f32.mrf.mxu0
        %v2951 = vadd.f32 %v2894, %v2950
        %v2952 = vpop.f32.mrf.mxu0
        %v2953 = vadd.f32 %v2896, %v2952
        %2954 = vmatmul.bf16.gmra.mxu0 %v1287
        %v2955 = vpop.f32.mrf.mxu0
        %v2956 = vpop.f32.mrf.mxu0
        %2957 = vdwg.mxu0
        %2958 = vmatpush.bf16.msra.mxu0 %v2334
        %2959 = vmatpush.bf16.msra.mxu0 %v2331
        %2960 = vmatpush.bf16.msra.mxu0 %v2328
        %2961 = vmatpush.bf16.msra.mxu0 %v2325
        %2962 = vmatpush.bf16.msra.mxu0 %v2322
        %2963 = vmatpush.bf16.msra.mxu0 %v2319
        %2964 = vmatpush.bf16.msra.mxu0 %v2316
        %2965 = vmatpush.bf16.msra.mxu0 %v2313
        %2966 = vmatmul.bf16.gmra.mxu0 %v1198
        %v2967 = vpop.f32.mrf.mxu0
        %v2968 = vadd.f32 %v2911, %v2967
        %v2969 = vpop.f32.mrf.mxu0
        %v2970 = vadd.f32 %v2913, %v2969
        %2971 = vmatmul.bf16.gmra.mxu0 %v1208
        %v2972 = vpop.f32.mrf.mxu0
        %v2973 = vadd.f32 %v2916, %v2972
        %v2974 = vpop.f32.mrf.mxu0
        %v2975 = vadd.f32 %v2918, %v2974
        %2976 = vmatmul.bf16.gmra.mxu0 %v1218
        %v2977 = vpop.f32.mrf.mxu0
        %v2978 = vadd.f32 %v2921, %v2977
        %v2979 = vpop.f32.mrf.mxu0
        %v2980 = vadd.f32 %v2923, %v2979
        %2981 = vmatmul.bf16.gmra.mxu0 %v1228
        %v2982 = vpop.f32.mrf.mxu0
        %v2983 = vadd.f32 %v2926, %v2982
        %v2984 = vpop.f32.mrf.mxu0
        %v2985 = vadd.f32 %v2928, %v2984
        %2986 = vmatmul.bf16.gmra.mxu0 %v1238
        %v2987 = vpop.f32.mrf.mxu0
        %v2988 = vadd.f32 %v2931, %v2987
        %v2989 = vpop.f32.mrf.mxu0
        %v2990 = vadd.f32 %v2933, %v2989
        %2991 = vmatmul.bf16.gmra.mxu0 %v1248
        %v2992 = vpop.f32.mrf.mxu0
        %v2993 = vadd.f32 %v2936, %v2992
        %v2994 = vpop.f32.mrf.mxu0
        %v2995 = vadd.f32 %v2938, %v2994
        %2996 = vmatmul.bf16.gmra.mxu0 %v1258
        %v2997 = vpop.f32.mrf.mxu0
        %v2998 = vadd.f32 %v2941, %v2997
        %v2999 = vpop.f32.mrf.mxu0
        %v3000 = vadd.f32 %v2943, %v2999
        %3001 = vmatmul.bf16.gmra.mxu0 %v1268
        %v3002 = vpop.f32.mrf.mxu0
        %v3003 = vadd.f32 %v2946, %v3002
        %v3004 = vpop.f32.mrf.mxu0
        %v3005 = vadd.f32 %v2948, %v3004
        %3006 = vmatmul.bf16.gmra.mxu0 %v1278
        %v3007 = vpop.f32.mrf.mxu0
        %v3008 = vadd.f32 %v2951, %v3007
        %v3009 = vpop.f32.mrf.mxu0
        %v3010 = vadd.f32 %v2953, %v3009
        %3011 = vmatmul.bf16.gmra.mxu0 %v1288
        %v3012 = vpop.f32.mrf.mxu0
        %v3013 = vpop.f32.mrf.mxu0
        %3014 = vdwg.mxu0
        %3015 = vmatpush.bf16.msra.mxu0 %v2358
        %3016 = vmatpush.bf16.msra.mxu0 %v2355
        %3017 = vmatpush.bf16.msra.mxu0 %v2352
        %3018 = vmatpush.bf16.msra.mxu0 %v2349
        %3019 = vmatpush.bf16.msra.mxu0 %v2346
        %3020 = vmatpush.bf16.msra.mxu0 %v2343
        %3021 = vmatpush.bf16.msra.mxu0 %v2340
        %3022 = vmatpush.bf16.msra.mxu0 %v2337
        %3023 = vmatmul.bf16.gmra.mxu0 %v1199
        %v3024 = vpop.f32.mrf.mxu0
        %v3025 = vadd.f32 %v2968, %v3024
        %v3026 = vpop.f32.mrf.mxu0
        %v3027 = vadd.f32 %v2970, %v3026
        %3028 = vmatmul.bf16.gmra.mxu0 %v1209
        %v3029 = vpop.f32.mrf.mxu0
        %v3030 = vadd.f32 %v2973, %v3029
        %v3031 = vpop.f32.mrf.mxu0
        %v3032 = vadd.f32 %v2975, %v3031
        %3033 = vmatmul.bf16.gmra.mxu0 %v1219
        %v3034 = vpop.f32.mrf.mxu0
        %v3035 = vadd.f32 %v2978, %v3034
        %v3036 = vpop.f32.mrf.mxu0
        %v3037 = vadd.f32 %v2980, %v3036
        %3038 = vmatmul.bf16.gmra.mxu0 %v1229
        %v3039 = vpop.f32.mrf.mxu0
        %v3040 = vadd.f32 %v2983, %v3039
        %v3041 = vpop.f32.mrf.mxu0
        %v3042 = vadd.f32 %v2985, %v3041
        %3043 = vmatmul.bf16.gmra.mxu0 %v1239
        %v3044 = vpop.f32.mrf.mxu0
        %v3045 = vadd.f32 %v2988, %v3044
        %v3046 = vpop.f32.mrf.mxu0
        %v3047 = vadd.f32 %v2990, %v3046
        %3048 = vmatmul.bf16.gmra.mxu0 %v1249
        %v3049 = vpop.f32.mrf.mxu0
        %v3050 = vadd.f32 %v2993, %v3049
        %v3051 = vpop.f32.mrf.mxu0
        %v3052 = vadd.f32 %v2995, %v3051
        %3053 = vmatmul.bf16.gmra.mxu0 %v1259
        %v3054 = vpop.f32.mrf.mxu0
        %v3055 = vadd.f32 %v2998, %v3054
        %v3056 = vpop.f32.mrf.mxu0
        %v3057 = vadd.f32 %v3000, %v3056
        %3058 = vmatmul.bf16.gmra.mxu0 %v1269
        %v3059 = vpop.f32.mrf.mxu0
        %v3060 = vadd.f32 %v3003, %v3059
        %v3061 = vpop.f32.mrf.mxu0
        %v3062 = vadd.f32 %v3005, %v3061
        %3063 = vmatmul.bf16.gmra.mxu0 %v1279
        %v3064 = vpop.f32.mrf.mxu0
        %v3065 = vadd.f32 %v3008, %v3064
        %v3066 = vpop.f32.mrf.mxu0
        %v3067 = vadd.f32 %v3010, %v3066
        %3068 = vmatmul.bf16.gmra.mxu0 %v1289
        %v3069 = vpop.f32.mrf.mxu0
        %v3070 = vpop.f32.mrf.mxu0
        %3071 = vdwg.mxu0
        %3072 = vmatpush.bf16.msra.mxu0 %v2382
        %3073 = vmatpush.bf16.msra.mxu0 %v2379
        %3074 = vmatpush.bf16.msra.mxu0 %v2376
        %3075 = vmatpush.bf16.msra.mxu0 %v2373
        %3076 = vmatpush.bf16.msra.mxu0 %v2370
        %3077 = vmatpush.bf16.msra.mxu0 %v2367
        %3078 = vmatpush.bf16.msra.mxu0 %v2364
        %3079 = vmatpush.bf16.msra.mxu0 %v2361
        %3080 = vmatmul.bf16.gmra.mxu0 %v1200
        %v3081 = vpop.f32.mrf.mxu0
        %v3082 = vadd.f32 %v3025, %v3081
        %v3083 = vpop.f32.mrf.mxu0
        %v3084 = vadd.f32 %v3027, %v3083
        %3085 = vmatmul.bf16.gmra.mxu0 %v1210
        %v3086 = vpop.f32.mrf.mxu0
        %v3087 = vadd.f32 %v3030, %v3086
        %v3088 = vpop.f32.mrf.mxu0
        %v3089 = vadd.f32 %v3032, %v3088
        %3090 = vmatmul.bf16.gmra.mxu0 %v1220
        %v3091 = vpop.f32.mrf.mxu0
        %v3092 = vadd.f32 %v3035, %v3091
        %v3093 = vpop.f32.mrf.mxu0
        %v3094 = vadd.f32 %v3037, %v3093
        %3095 = vmatmul.bf16.gmra.mxu0 %v1230
        %v3096 = vpop.f32.mrf.mxu0
        %v3097 = vadd.f32 %v3040, %v3096
        %v3098 = vpop.f32.mrf.mxu0
        %v3099 = vadd.f32 %v3042, %v3098
        %3100 = vmatmul.bf16.gmra.mxu0 %v1240
        %v3101 = vpop.f32.mrf.mxu0
        %v3102 = vadd.f32 %v3045, %v3101
        %v3103 = vpop.f32.mrf.mxu0
        %v3104 = vadd.f32 %v3047, %v3103
        %3105 = vmatmul.bf16.gmra.mxu0 %v1250
        %v3106 = vpop.f32.mrf.mxu0
        %v3107 = vadd.f32 %v3050, %v3106
        %v3108 = vpop.f32.mrf.mxu0
        %v3109 = vadd.f32 %v3052, %v3108
        %3110 = vmatmul.bf16.gmra.mxu0 %v1260
        %v3111 = vpop.f32.mrf.mxu0
        %v3112 = vadd.f32 %v3055, %v3111
        %v3113 = vpop.f32.mrf.mxu0
        %v3114 = vadd.f32 %v3057, %v3113
        %3115 = vmatmul.bf16.gmra.mxu0 %v1270
        %v3116 = vpop.f32.mrf.mxu0
        %v3117 = vadd.f32 %v3060, %v3116
        %v3118 = vpop.f32.mrf.mxu0
        %v3119 = vadd.f32 %v3062, %v3118
        %3120 = vmatmul.bf16.gmra.mxu0 %v1280
        %v3121 = vpop.f32.mrf.mxu0
        %v3122 = vadd.f32 %v3065, %v3121
        %v3123 = vpop.f32.mrf.mxu0
        %v3124 = vadd.f32 %v3067, %v3123
        %3125 = vmatmul.bf16.gmra.mxu0 %v1290
        %v3126 = vpop.f32.mrf.mxu0
        %v3127 = vpop.f32.mrf.mxu0
        %3128 = vdwg.mxu0
        %3129 = vmatpush.bf16.msra.mxu0 %v2406
        %3130 = vmatpush.bf16.msra.mxu0 %v2403
        %3131 = vmatpush.bf16.msra.mxu0 %v2400
        %3132 = vmatpush.bf16.msra.mxu0 %v2397
        %3133 = vmatpush.bf16.msra.mxu0 %v2394
        %3134 = vmatpush.bf16.msra.mxu0 %v2391
        %3135 = vmatpush.bf16.msra.mxu0 %v2388
        %3136 = vmatpush.bf16.msra.mxu0 %v2385
        %3137 = vmatmul.bf16.gmra.mxu0 %v1201
        %v3138 = vpop.f32.mrf.mxu0
        %v3139 = vadd.f32 %v3082, %v3138
        %v3140 = vpop.f32.mrf.mxu0
        %v3141 = vadd.f32 %v3084, %v3140
        %3142 = vmatmul.bf16.gmra.mxu0 %v1211
        %v3143 = vpop.f32.mrf.mxu0
        %v3144 = vadd.f32 %v3087, %v3143
        %v3145 = vpop.f32.mrf.mxu0
        %v3146 = vadd.f32 %v3089, %v3145
        %3147 = vmatmul.bf16.gmra.mxu0 %v1221
        %v3148 = vpop.f32.mrf.mxu0
        %v3149 = vadd.f32 %v3092, %v3148
        %v3150 = vpop.f32.mrf.mxu0
        %v3151 = vadd.f32 %v3094, %v3150
        %3152 = vmatmul.bf16.gmra.mxu0 %v1231
        %v3153 = vpop.f32.mrf.mxu0
        %v3154 = vadd.f32 %v3097, %v3153
        %v3155 = vpop.f32.mrf.mxu0
        %v3156 = vadd.f32 %v3099, %v3155
        %3157 = vmatmul.bf16.gmra.mxu0 %v1241
        %v3158 = vpop.f32.mrf.mxu0
        %v3159 = vadd.f32 %v3102, %v3158
        %v3160 = vpop.f32.mrf.mxu0
        %v3161 = vadd.f32 %v3104, %v3160
        %3162 = vmatmul.bf16.gmra.mxu0 %v1251
        %v3163 = vpop.f32.mrf.mxu0
        %v3164 = vadd.f32 %v3107, %v3163
        %v3165 = vpop.f32.mrf.mxu0
        %v3166 = vadd.f32 %v3109, %v3165
        %3167 = vmatmul.bf16.gmra.mxu0 %v1261
        %v3168 = vpop.f32.mrf.mxu0
        %v3169 = vadd.f32 %v3112, %v3168
        %v3170 = vpop.f32.mrf.mxu0
        %v3171 = vadd.f32 %v3114, %v3170
        %3172 = vmatmul.bf16.gmra.mxu0 %v1271
        %v3173 = vpop.f32.mrf.mxu0
        %v3174 = vadd.f32 %v3117, %v3173
        %v3175 = vpop.f32.mrf.mxu0
        %v3176 = vadd.f32 %v3119, %v3175
        %3177 = vmatmul.bf16.gmra.mxu0 %v1281
        %v3178 = vpop.f32.mrf.mxu0
        %v3179 = vadd.f32 %v3122, %v3178
        %v3180 = vpop.f32.mrf.mxu0
        %v3181 = vadd.f32 %v3124, %v3180
        %3182 = vmatmul.bf16.gmra.mxu0 %v1291
        %v3183 = vpop.f32.mrf.mxu0
        %v3184 = vpop.f32.mrf.mxu0
        %3185 = vdwg.mxu0
        %3186 = vmatpush.bf16.msra.mxu0 %v2430
        %3187 = vmatpush.bf16.msra.mxu0 %v2427
        %3188 = vmatpush.bf16.msra.mxu0 %v2424
        %3189 = vmatpush.bf16.msra.mxu0 %v2421
        %3190 = vmatpush.bf16.msra.mxu0 %v2418
        %3191 = vmatpush.bf16.msra.mxu0 %v2415
        %3192 = vmatpush.bf16.msra.mxu0 %v2412
        %3193 = vmatpush.bf16.msra.mxu0 %v2409
        %3194 = vmatmul.bf16.gmra.mxu0 %v1202
        %v3195 = vpop.f32.mrf.mxu0
        %v3196 = vadd.f32 %v3139, %v3195
        %v3197 = vpop.f32.mrf.mxu0
        %v3198 = vadd.f32 %v3141, %v3197
        %3199 = vmatmul.bf16.gmra.mxu0 %v1212
        %v3200 = vpop.f32.mrf.mxu0
        %v3201 = vadd.f32 %v3144, %v3200
        %v3202 = vpop.f32.mrf.mxu0
        %v3203 = vadd.f32 %v3146, %v3202
        %3204 = vmatmul.bf16.gmra.mxu0 %v1222
        %v3205 = vpop.f32.mrf.mxu0
        %v3206 = vadd.f32 %v3149, %v3205
        %v3207 = vpop.f32.mrf.mxu0
        %v3208 = vadd.f32 %v3151, %v3207
        %3209 = vmatmul.bf16.gmra.mxu0 %v1232
        %v3210 = vpop.f32.mrf.mxu0
        %v3211 = vadd.f32 %v3154, %v3210
        %v3212 = vpop.f32.mrf.mxu0
        %v3213 = vadd.f32 %v3156, %v3212
        %3214 = vmatmul.bf16.gmra.mxu0 %v1242
        %v3215 = vpop.f32.mrf.mxu0
        %v3216 = vadd.f32 %v3159, %v3215
        %v3217 = vpop.f32.mrf.mxu0
        %v3218 = vadd.f32 %v3161, %v3217
        %3219 = vmatmul.bf16.gmra.mxu0 %v1252
        %v3220 = vpop.f32.mrf.mxu0
        %v3221 = vadd.f32 %v3164, %v3220
        %v3222 = vpop.f32.mrf.mxu0
        %v3223 = vadd.f32 %v3166, %v3222
        %3224 = vmatmul.bf16.gmra.mxu0 %v1262
        %v3225 = vpop.f32.mrf.mxu0
        %v3226 = vadd.f32 %v3169, %v3225
        %v3227 = vpop.f32.mrf.mxu0
        %v3228 = vadd.f32 %v3171, %v3227
        %3229 = vmatmul.bf16.gmra.mxu0 %v1272
        %v3230 = vpop.f32.mrf.mxu0
        %v3231 = vadd.f32 %v3174, %v3230
        %v3232 = vpop.f32.mrf.mxu0
        %v3233 = vadd.f32 %v3176, %v3232
        %3234 = vmatmul.bf16.gmra.mxu0 %v1282
        %v3235 = vpop.f32.mrf.mxu0
        %v3236 = vadd.f32 %v3179, %v3235
        %v3237 = vpop.f32.mrf.mxu0
        %v3238 = vadd.f32 %v3181, %v3237
        %3239 = vmatmul.bf16.gmra.mxu0 %v1292
        %v3240 = vpop.f32.mrf.mxu0
        %v3241 = vpop.f32.mrf.mxu0
        %3242 = vdwg.mxu0
        %3243 = vmatpush.bf16.msra.mxu0 %v2215
        %3244 = vmatpush.bf16.msra.mxu0 %v2212
        %3245 = vmatpush.bf16.msra.mxu0 %v2209
        %3246 = vmatpush.bf16.msra.mxu0 %v2206
        %3247 = vmatpush.bf16.msra.mxu0 %v2203
        %3248 = vmatpush.bf16.msra.mxu0 %v2200
        %3249 = vmatpush.bf16.msra.mxu0 %v2197
        %3250 = vmatpush.bf16.msra.mxu0 %v2194
        %3251 = vmatmul.bf16.gmra.mxu0 %v1193
        %v3252 = vpop.f32.mrf.mxu0
        %v3253 = vadd.f32 0.0, %v3252
        %v3254 = vpop.f32.mrf.mxu0
        %v3255 = vadd.f32 0.0, %v3254
        %3256 = vmatmul.bf16.gmra.mxu0 %v1203
        %v3257 = vpop.f32.mrf.mxu0
        %v3258 = vadd.f32 0.0, %v3257
        %v3259 = vpop.f32.mrf.mxu0
        %v3260 = vadd.f32 0.0, %v3259
        %3261 = vmatmul.bf16.gmra.mxu0 %v1213
        %v3262 = vpop.f32.mrf.mxu0
        %v3263 = vadd.f32 0.0, %v3262
        %v3264 = vpop.f32.mrf.mxu0
        %v3265 = vadd.f32 0.0, %v3264
        %3266 = vmatmul.bf16.gmra.mxu0 %v1223
        %v3267 = vpop.f32.mrf.mxu0
        %v3268 = vadd.f32 0.0, %v3267
        %v3269 = vpop.f32.mrf.mxu0
        %v3270 = vadd.f32 0.0, %v3269
        %3271 = vmatmul.bf16.gmra.mxu0 %v1233
        %v3272 = vpop.f32.mrf.mxu0
        %v3273 = vadd.f32 0.0, %v3272
        %v3274 = vpop.f32.mrf.mxu0
        %v3275 = vadd.f32 0.0, %v3274
        %3276 = vmatmul.bf16.gmra.mxu0 %v1243
        %v3277 = vpop.f32.mrf.mxu0
        %v3278 = vadd.f32 0.0, %v3277
        %v3279 = vpop.f32.mrf.mxu0
        %v3280 = vadd.f32 0.0, %v3279
        %3281 = vmatmul.bf16.gmra.mxu0 %v1253
        %v3282 = vpop.f32.mrf.mxu0
        %v3283 = vadd.f32 0.0, %v3282
        %v3284 = vpop.f32.mrf.mxu0
        %v3285 = vadd.f32 0.0, %v3284
        %3286 = vmatmul.bf16.gmra.mxu0 %v1263
        %v3287 = vpop.f32.mrf.mxu0
        %v3288 = vadd.f32 0.0, %v3287
        %v3289 = vpop.f32.mrf.mxu0
        %v3290 = vadd.f32 0.0, %v3289
        %3291 = vmatmul.bf16.gmra.mxu0 %v1273
        %v3292 = vpop.f32.mrf.mxu0
        %v3293 = vadd.f32 0.0, %v3292
        %v3294 = vpop.f32.mrf.mxu0
        %v3295 = vadd.f32 0.0, %v3294
        %3296 = vmatmul.bf16.gmra.mxu0 %v1283
        %v3297 = vpop.f32.mrf.mxu0
        %v3298 = vadd.f32 0.0, %v3297
        %v3299 = vpop.f32.mrf.mxu0
        %v3300 = vadd.f32 0.0, %v3299
        %3301 = vdwg.mxu0
        %3302 = vmatpush.bf16.msra.mxu0 %v2239
        %3303 = vmatpush.bf16.msra.mxu0 %v2236
        %3304 = vmatpush.bf16.msra.mxu0 %v2233
        %3305 = vmatpush.bf16.msra.mxu0 %v2230
        %3306 = vmatpush.bf16.msra.mxu0 %v2227
        %3307 = vmatpush.bf16.msra.mxu0 %v2224
        %3308 = vmatpush.bf16.msra.mxu0 %v2221
        %3309 = vmatpush.bf16.msra.mxu0 %v2218
        %3310 = vmatmul.bf16.gmra.mxu0 %v1194
        %v3311 = vpop.f32.mrf.mxu0
        %v3312 = vadd.f32 %v3253, %v3311
        %v3313 = vpop.f32.mrf.mxu0
        %v3314 = vadd.f32 %v3255, %v3313
        %3315 = vmatmul.bf16.gmra.mxu0 %v1204
        %v3316 = vpop.f32.mrf.mxu0
        %v3317 = vadd.f32 %v3258, %v3316
        %v3318 = vpop.f32.mrf.mxu0
        %v3319 = vadd.f32 %v3260, %v3318
        %3320 = vmatmul.bf16.gmra.mxu0 %v1214
        %v3321 = vpop.f32.mrf.mxu0
        %v3322 = vadd.f32 %v3263, %v3321
        %v3323 = vpop.f32.mrf.mxu0
        %v3324 = vadd.f32 %v3265, %v3323
        %3325 = vmatmul.bf16.gmra.mxu0 %v1224
        %v3326 = vpop.f32.mrf.mxu0
        %v3327 = vadd.f32 %v3268, %v3326
        %v3328 = vpop.f32.mrf.mxu0
        %v3329 = vadd.f32 %v3270, %v3328
        %3330 = vmatmul.bf16.gmra.mxu0 %v1234
        %v3331 = vpop.f32.mrf.mxu0
        %v3332 = vadd.f32 %v3273, %v3331
        %v3333 = vpop.f32.mrf.mxu0
        %v3334 = vadd.f32 %v3275, %v3333
        %3335 = vmatmul.bf16.gmra.mxu0 %v1244
        %v3336 = vpop.f32.mrf.mxu0
        %v3337 = vadd.f32 %v3278, %v3336
        %v3338 = vpop.f32.mrf.mxu0
        %v3339 = vadd.f32 %v3280, %v3338
        %3340 = vmatmul.bf16.gmra.mxu0 %v1254
        %v3341 = vpop.f32.mrf.mxu0
        %v3342 = vadd.f32 %v3283, %v3341
        %v3343 = vpop.f32.mrf.mxu0
        %v3344 = vadd.f32 %v3285, %v3343
        %3345 = vmatmul.bf16.gmra.mxu0 %v1264
        %v3346 = vpop.f32.mrf.mxu0
        %v3347 = vadd.f32 %v3288, %v3346
        %v3348 = vpop.f32.mrf.mxu0
        %v3349 = vadd.f32 %v3290, %v3348
        %3350 = vmatmul.bf16.gmra.mxu0 %v1274
        %v3351 = vpop.f32.mrf.mxu0
        %v3352 = vadd.f32 %v3293, %v3351
        %v3353 = vpop.f32.mrf.mxu0
        %v3354 = vadd.f32 %v3295, %v3353
        %3355 = vmatmul.bf16.gmra.mxu0 %v1284
        %v3356 = vpop.f32.mrf.mxu0
        %v3357 = vadd.f32 %v3298, %v3356
        %v3358 = vpop.f32.mrf.mxu0
        %v3359 = vadd.f32 %v3300, %v3358
        %3360 = vdwg.mxu0
        %3361 = vmatpush.bf16.msra.mxu0 %v2263
        %3362 = vmatpush.bf16.msra.mxu0 %v2260
        %3363 = vmatpush.bf16.msra.mxu0 %v2257
        %3364 = vmatpush.bf16.msra.mxu0 %v2254
        %3365 = vmatpush.bf16.msra.mxu0 %v2251
        %3366 = vmatpush.bf16.msra.mxu0 %v2248
        %3367 = vmatpush.bf16.msra.mxu0 %v2245
        %3368 = vmatpush.bf16.msra.mxu0 %v2242
        %3369 = vmatmul.bf16.gmra.mxu0 %v1195
        %v3370 = vpop.f32.mrf.mxu0
        %v3371 = vadd.f32 %v3312, %v3370
        %v3372 = vpop.f32.mrf.mxu0
        %v3373 = vadd.f32 %v3314, %v3372
        %3374 = vmatmul.bf16.gmra.mxu0 %v1205
        %v3375 = vpop.f32.mrf.mxu0
        %v3376 = vadd.f32 %v3317, %v3375
        %v3377 = vpop.f32.mrf.mxu0
        %v3378 = vadd.f32 %v3319, %v3377
        %3379 = vmatmul.bf16.gmra.mxu0 %v1215
        %v3380 = vpop.f32.mrf.mxu0
        %v3381 = vadd.f32 %v3322, %v3380
        %v3382 = vpop.f32.mrf.mxu0
        %v3383 = vadd.f32 %v3324, %v3382
        %3384 = vmatmul.bf16.gmra.mxu0 %v1225
        %v3385 = vpop.f32.mrf.mxu0
        %v3386 = vadd.f32 %v3327, %v3385
        %v3387 = vpop.f32.mrf.mxu0
        %v3388 = vadd.f32 %v3329, %v3387
        %3389 = vmatmul.bf16.gmra.mxu0 %v1235
        %v3390 = vpop.f32.mrf.mxu0
        %v3391 = vadd.f32 %v3332, %v3390
        %v3392 = vpop.f32.mrf.mxu0
        %v3393 = vadd.f32 %v3334, %v3392
        %3394 = vmatmul.bf16.gmra.mxu0 %v1245
        %v3395 = vpop.f32.mrf.mxu0
        %v3396 = vadd.f32 %v3337, %v3395
        %v3397 = vpop.f32.mrf.mxu0
        %v3398 = vadd.f32 %v3339, %v3397
        %3399 = vmatmul.bf16.gmra.mxu0 %v1255
        %v3400 = vpop.f32.mrf.mxu0
        %v3401 = vadd.f32 %v3342, %v3400
        %v3402 = vpop.f32.mrf.mxu0
        %v3403 = vadd.f32 %v3344, %v3402
        %3404 = vmatmul.bf16.gmra.mxu0 %v1265
        %v3405 = vpop.f32.mrf.mxu0
        %v3406 = vadd.f32 %v3347, %v3405
        %v3407 = vpop.f32.mrf.mxu0
        %v3408 = vadd.f32 %v3349, %v3407
        %3409 = vmatmul.bf16.gmra.mxu0 %v1275
        %v3410 = vpop.f32.mrf.mxu0
        %v3411 = vadd.f32 %v3352, %v3410
        %v3412 = vpop.f32.mrf.mxu0
        %v3413 = vadd.f32 %v3354, %v3412
        %3414 = vmatmul.bf16.gmra.mxu0 %v1285
        %v3415 = vpop.f32.mrf.mxu0
        %v3416 = vadd.f32 %v3357, %v3415
        %v3417 = vpop.f32.mrf.mxu0
        %v3418 = vadd.f32 %v3359, %v3417
        %3419 = vdwg.mxu0
        %3420 = vmatpush.bf16.msra.mxu0 %v2287
        %3421 = vmatpush.bf16.msra.mxu0 %v2284
        %3422 = vmatpush.bf16.msra.mxu0 %v2281
        %3423 = vmatpush.bf16.msra.mxu0 %v2278
        %3424 = vmatpush.bf16.msra.mxu0 %v2275
        %3425 = vmatpush.bf16.msra.mxu0 %v2272
        %3426 = vmatpush.bf16.msra.mxu0 %v2269
        %3427 = vmatpush.bf16.msra.mxu0 %v2266
        %3428 = vmatmul.bf16.gmra.mxu0 %v1196
        %v3429 = vpop.f32.mrf.mxu0
        %v3430 = vadd.f32 %v3371, %v3429
        %v3431 = vpop.f32.mrf.mxu0
        %v3432 = vadd.f32 %v3373, %v3431
        %3433 = vmatmul.bf16.gmra.mxu0 %v1206
        %v3434 = vpop.f32.mrf.mxu0
        %v3435 = vadd.f32 %v3376, %v3434
        %v3436 = vpop.f32.mrf.mxu0
        %v3437 = vadd.f32 %v3378, %v3436
        %3438 = vmatmul.bf16.gmra.mxu0 %v1216
        %v3439 = vpop.f32.mrf.mxu0
        %v3440 = vadd.f32 %v3381, %v3439
        %v3441 = vpop.f32.mrf.mxu0
        %v3442 = vadd.f32 %v3383, %v3441
        %3443 = vmatmul.bf16.gmra.mxu0 %v1226
        %v3444 = vpop.f32.mrf.mxu0
        %v3445 = vadd.f32 %v3386, %v3444
        %v3446 = vpop.f32.mrf.mxu0
        %v3447 = vadd.f32 %v3388, %v3446
        %3448 = vmatmul.bf16.gmra.mxu0 %v1236
        %v3449 = vpop.f32.mrf.mxu0
        %v3450 = vadd.f32 %v3391, %v3449
        %v3451 = vpop.f32.mrf.mxu0
        %v3452 = vadd.f32 %v3393, %v3451
        %3453 = vmatmul.bf16.gmra.mxu0 %v1246
        %v3454 = vpop.f32.mrf.mxu0
        %v3455 = vadd.f32 %v3396, %v3454
        %v3456 = vpop.f32.mrf.mxu0
        %v3457 = vadd.f32 %v3398, %v3456
        %3458 = vmatmul.bf16.gmra.mxu0 %v1256
        %v3459 = vpop.f32.mrf.mxu0
        %v3460 = vadd.f32 %v3401, %v3459
        %v3461 = vpop.f32.mrf.mxu0
        %v3462 = vadd.f32 %v3403, %v3461
        %3463 = vmatmul.bf16.gmra.mxu0 %v1266
        %v3464 = vpop.f32.mrf.mxu0
        %v3465 = vadd.f32 %v3406, %v3464
        %v3466 = vpop.f32.mrf.mxu0
        %v3467 = vadd.f32 %v3408, %v3466
        %3468 = vmatmul.bf16.gmra.mxu0 %v1276
        %v3469 = vpop.f32.mrf.mxu0
        %v3470 = vadd.f32 %v3411, %v3469
        %v3471 = vpop.f32.mrf.mxu0
        %v3472 = vadd.f32 %v3413, %v3471
        %3473 = vmatmul.bf16.gmra.mxu0 %v1286
        %v3474 = vpop.f32.mrf.mxu0
        %v3475 = vadd.f32 %v3416, %v3474
        %v3476 = vpop.f32.mrf.mxu0
        %v3477 = vadd.f32 %v3418, %v3476
        %3478 = vdwg.mxu0
        %3479 = vmatpush.bf16.msra.mxu0 %v2311
        %3480 = vmatpush.bf16.msra.mxu0 %v2308
        %3481 = vmatpush.bf16.msra.mxu0 %v2305
        %3482 = vmatpush.bf16.msra.mxu0 %v2302
        %3483 = vmatpush.bf16.msra.mxu0 %v2299
        %3484 = vmatpush.bf16.msra.mxu0 %v2296
        %3485 = vmatpush.bf16.msra.mxu0 %v2293
        %3486 = vmatpush.bf16.msra.mxu0 %v2290
        %3487 = vmatmul.bf16.gmra.mxu0 %v1197
        %v3488 = vpop.f32.mrf.mxu0
        %v3489 = vadd.f32 %v3430, %v3488
        %v3490 = vpop.f32.mrf.mxu0
        %v3491 = vadd.f32 %v3432, %v3490
        %3492 = vmatmul.bf16.gmra.mxu0 %v1207
        %v3493 = vpop.f32.mrf.mxu0
        %v3494 = vadd.f32 %v3435, %v3493
        %v3495 = vpop.f32.mrf.mxu0
        %v3496 = vadd.f32 %v3437, %v3495
        %3497 = vmatmul.bf16.gmra.mxu0 %v1217
        %v3498 = vpop.f32.mrf.mxu0
        %v3499 = vadd.f32 %v3440, %v3498
        %v3500 = vpop.f32.mrf.mxu0
        %v3501 = vadd.f32 %v3442, %v3500
        %3502 = vmatmul.bf16.gmra.mxu0 %v1227
        %v3503 = vpop.f32.mrf.mxu0
        %v3504 = vadd.f32 %v3445, %v3503
        %v3505 = vpop.f32.mrf.mxu0
        %v3506 = vadd.f32 %v3447, %v3505
        %3507 = vmatmul.bf16.gmra.mxu0 %v1237
        %v3508 = vpop.f32.mrf.mxu0
        %v3509 = vadd.f32 %v3450, %v3508
        %v3510 = vpop.f32.mrf.mxu0
        %v3511 = vadd.f32 %v3452, %v3510
        %3512 = vmatmul.bf16.gmra.mxu0 %v1247
        %v3513 = vpop.f32.mrf.mxu0
        %v3514 = vadd.f32 %v3455, %v3513
        %v3515 = vpop.f32.mrf.mxu0
        %v3516 = vadd.f32 %v3457, %v3515
        %3517 = vmatmul.bf16.gmra.mxu0 %v1257
        %v3518 = vpop.f32.mrf.mxu0
        %v3519 = vadd.f32 %v3460, %v3518
        %v3520 = vpop.f32.mrf.mxu0
        %v3521 = vadd.f32 %v3462, %v3520
        %3522 = vmatmul.bf16.gmra.mxu0 %v1267
        %v3523 = vpop.f32.mrf.mxu0
        %v3524 = vadd.f32 %v3465, %v3523
        %v3525 = vpop.f32.mrf.mxu0
        %v3526 = vadd.f32 %v3467, %v3525
        %3527 = vmatmul.bf16.gmra.mxu0 %v1277
        %v3528 = vpop.f32.mrf.mxu0
        %v3529 = vadd.f32 %v3470, %v3528
        %v3530 = vpop.f32.mrf.mxu0
        %v3531 = vadd.f32 %v3472, %v3530
        %3532 = vmatmul.bf16.gmra.mxu0 %v1287
        %v3533 = vpop.f32.mrf.mxu0
        %v3534 = vadd.f32 %v3475, %v3533
        %v3535 = vpop.f32.mrf.mxu0
        %v3536 = vadd.f32 %v3477, %v3535
        %3537 = vdwg.mxu0
        %3538 = vmatpush.bf16.msra.mxu0 %v2335
        %3539 = vmatpush.bf16.msra.mxu0 %v2332
        %3540 = vmatpush.bf16.msra.mxu0 %v2329
        %3541 = vmatpush.bf16.msra.mxu0 %v2326
        %3542 = vmatpush.bf16.msra.mxu0 %v2323
        %3543 = vmatpush.bf16.msra.mxu0 %v2320
        %3544 = vmatpush.bf16.msra.mxu0 %v2317
        %3545 = vmatpush.bf16.msra.mxu0 %v2314
        %3546 = vmatmul.bf16.gmra.mxu0 %v1198
        %v3547 = vpop.f32.mrf.mxu0
        %v3548 = vadd.f32 %v3489, %v3547
        %v3549 = vpop.f32.mrf.mxu0
        %v3550 = vadd.f32 %v3491, %v3549
        %3551 = vmatmul.bf16.gmra.mxu0 %v1208
        %v3552 = vpop.f32.mrf.mxu0
        %v3553 = vadd.f32 %v3494, %v3552
        %v3554 = vpop.f32.mrf.mxu0
        %v3555 = vadd.f32 %v3496, %v3554
        %3556 = vmatmul.bf16.gmra.mxu0 %v1218
        %v3557 = vpop.f32.mrf.mxu0
        %v3558 = vadd.f32 %v3499, %v3557
        %v3559 = vpop.f32.mrf.mxu0
        %v3560 = vadd.f32 %v3501, %v3559
        %3561 = vmatmul.bf16.gmra.mxu0 %v1228
        %v3562 = vpop.f32.mrf.mxu0
        %v3563 = vadd.f32 %v3504, %v3562
        %v3564 = vpop.f32.mrf.mxu0
        %v3565 = vadd.f32 %v3506, %v3564
        %3566 = vmatmul.bf16.gmra.mxu0 %v1238
        %v3567 = vpop.f32.mrf.mxu0
        %v3568 = vadd.f32 %v3509, %v3567
        %v3569 = vpop.f32.mrf.mxu0
        %v3570 = vadd.f32 %v3511, %v3569
        %3571 = vmatmul.bf16.gmra.mxu0 %v1248
        %v3572 = vpop.f32.mrf.mxu0
        %v3573 = vadd.f32 %v3514, %v3572
        %v3574 = vpop.f32.mrf.mxu0
        %v3575 = vadd.f32 %v3516, %v3574
        %3576 = vmatmul.bf16.gmra.mxu0 %v1258
        %v3577 = vpop.f32.mrf.mxu0
        %v3578 = vadd.f32 %v3519, %v3577
        %v3579 = vpop.f32.mrf.mxu0
        %v3580 = vadd.f32 %v3521, %v3579
        %3581 = vmatmul.bf16.gmra.mxu0 %v1268
        %v3582 = vpop.f32.mrf.mxu0
        %v3583 = vadd.f32 %v3524, %v3582
        %v3584 = vpop.f32.mrf.mxu0
        %v3585 = vadd.f32 %v3526, %v3584
        %3586 = vmatmul.bf16.gmra.mxu0 %v1278
        %v3587 = vpop.f32.mrf.mxu0
        %v3588 = vadd.f32 %v3529, %v3587
        %v3589 = vpop.f32.mrf.mxu0
        %v3590 = vadd.f32 %v3531, %v3589
        %3591 = vmatmul.bf16.gmra.mxu0 %v1288
        %v3592 = vpop.f32.mrf.mxu0
        %v3593 = vadd.f32 %v3534, %v3592
        %v3594 = vpop.f32.mrf.mxu0
        %v3595 = vadd.f32 %v3536, %v3594
        %3596 = vdwg.mxu0
        %3597 = vmatpush.bf16.msra.mxu0 %v2359
        %3598 = vmatpush.bf16.msra.mxu0 %v2356
        %3599 = vmatpush.bf16.msra.mxu0 %v2353
        %3600 = vmatpush.bf16.msra.mxu0 %v2350
        %3601 = vmatpush.bf16.msra.mxu0 %v2347
        %3602 = vmatpush.bf16.msra.mxu0 %v2344
        %3603 = vmatpush.bf16.msra.mxu0 %v2341
        %3604 = vmatpush.bf16.msra.mxu0 %v2338
        %3605 = vmatmul.bf16.gmra.mxu0 %v1199
        %v3606 = vpop.f32.mrf.mxu0
        %v3607 = vadd.f32 %v3548, %v3606
        %v3608 = vpop.f32.mrf.mxu0
        %v3609 = vadd.f32 %v3550, %v3608
        %3610 = vmatmul.bf16.gmra.mxu0 %v1209
        %v3611 = vpop.f32.mrf.mxu0
        %v3612 = vadd.f32 %v3553, %v3611
        %v3613 = vpop.f32.mrf.mxu0
        %v3614 = vadd.f32 %v3555, %v3613
        %3615 = vmatmul.bf16.gmra.mxu0 %v1219
        %v3616 = vpop.f32.mrf.mxu0
        %v3617 = vadd.f32 %v3558, %v3616
        %v3618 = vpop.f32.mrf.mxu0
        %v3619 = vadd.f32 %v3560, %v3618
        %3620 = vmatmul.bf16.gmra.mxu0 %v1229
        %v3621 = vpop.f32.mrf.mxu0
        %v3622 = vadd.f32 %v3563, %v3621
        %v3623 = vpop.f32.mrf.mxu0
        %v3624 = vadd.f32 %v3565, %v3623
        %3625 = vmatmul.bf16.gmra.mxu0 %v1239
        %v3626 = vpop.f32.mrf.mxu0
        %v3627 = vadd.f32 %v3568, %v3626
        %v3628 = vpop.f32.mrf.mxu0
        %v3629 = vadd.f32 %v3570, %v3628
        %3630 = vmatmul.bf16.gmra.mxu0 %v1249
        %v3631 = vpop.f32.mrf.mxu0
        %v3632 = vadd.f32 %v3573, %v3631
        %v3633 = vpop.f32.mrf.mxu0
        %v3634 = vadd.f32 %v3575, %v3633
        %3635 = vmatmul.bf16.gmra.mxu0 %v1259
        %v3636 = vpop.f32.mrf.mxu0
        %v3637 = vadd.f32 %v3578, %v3636
        %v3638 = vpop.f32.mrf.mxu0
        %v3639 = vadd.f32 %v3580, %v3638
        %3640 = vmatmul.bf16.gmra.mxu0 %v1269
        %v3641 = vpop.f32.mrf.mxu0
        %v3642 = vadd.f32 %v3583, %v3641
        %v3643 = vpop.f32.mrf.mxu0
        %v3644 = vadd.f32 %v3585, %v3643
        %3645 = vmatmul.bf16.gmra.mxu0 %v1279
        %v3646 = vpop.f32.mrf.mxu0
        %v3647 = vadd.f32 %v3588, %v3646
        %v3648 = vpop.f32.mrf.mxu0
        %v3649 = vadd.f32 %v3590, %v3648
        %3650 = vmatmul.bf16.gmra.mxu0 %v1289
        %v3651 = vpop.f32.mrf.mxu0
        %v3652 = vadd.f32 %v3593, %v3651
        %v3653 = vpop.f32.mrf.mxu0
        %v3654 = vadd.f32 %v3595, %v3653
        %3655 = vdwg.mxu0
        %3656 = vmatpush.bf16.msra.mxu0 %v2383
        %3657 = vmatpush.bf16.msra.mxu0 %v2380
        %3658 = vmatpush.bf16.msra.mxu0 %v2377
        %3659 = vmatpush.bf16.msra.mxu0 %v2374
        %3660 = vmatpush.bf16.msra.mxu0 %v2371
        %3661 = vmatpush.bf16.msra.mxu0 %v2368
        %3662 = vmatpush.bf16.msra.mxu0 %v2365
        %3663 = vmatpush.bf16.msra.mxu0 %v2362
        %3664 = vmatmul.bf16.gmra.mxu0 %v1200
        %v3665 = vpop.f32.mrf.mxu0
        %v3666 = vadd.f32 %v3607, %v3665
        %v3667 = vpop.f32.mrf.mxu0
        %v3668 = vadd.f32 %v3609, %v3667
        %3669 = vmatmul.bf16.gmra.mxu0 %v1210
        %v3670 = vpop.f32.mrf.mxu0
        %v3671 = vadd.f32 %v3612, %v3670
        %v3672 = vpop.f32.mrf.mxu0
        %v3673 = vadd.f32 %v3614, %v3672
        %3674 = vmatmul.bf16.gmra.mxu0 %v1220
        %v3675 = vpop.f32.mrf.mxu0
        %v3676 = vadd.f32 %v3617, %v3675
        %v3677 = vpop.f32.mrf.mxu0
        %v3678 = vadd.f32 %v3619, %v3677
        %3679 = vmatmul.bf16.gmra.mxu0 %v1230
        %v3680 = vpop.f32.mrf.mxu0
        %v3681 = vadd.f32 %v3622, %v3680
        %v3682 = vpop.f32.mrf.mxu0
        %v3683 = vadd.f32 %v3624, %v3682
        %3684 = vmatmul.bf16.gmra.mxu0 %v1240
        %v3685 = vpop.f32.mrf.mxu0
        %v3686 = vadd.f32 %v3627, %v3685
        %v3687 = vpop.f32.mrf.mxu0
        %v3688 = vadd.f32 %v3629, %v3687
        %3689 = vmatmul.bf16.gmra.mxu0 %v1250
        %v3690 = vpop.f32.mrf.mxu0
        %v3691 = vadd.f32 %v3632, %v3690
        %v3692 = vpop.f32.mrf.mxu0
        %v3693 = vadd.f32 %v3634, %v3692
        %3694 = vmatmul.bf16.gmra.mxu0 %v1260
        %v3695 = vpop.f32.mrf.mxu0
        %v3696 = vadd.f32 %v3637, %v3695
        %v3697 = vpop.f32.mrf.mxu0
        %v3698 = vadd.f32 %v3639, %v3697
        %3699 = vmatmul.bf16.gmra.mxu0 %v1270
        %v3700 = vpop.f32.mrf.mxu0
        %v3701 = vadd.f32 %v3642, %v3700
        %v3702 = vpop.f32.mrf.mxu0
        %v3703 = vadd.f32 %v3644, %v3702
        %3704 = vmatmul.bf16.gmra.mxu0 %v1280
        %v3705 = vpop.f32.mrf.mxu0
        %v3706 = vadd.f32 %v3647, %v3705
        %v3707 = vpop.f32.mrf.mxu0
        %v3708 = vadd.f32 %v3649, %v3707
        %3709 = vmatmul.bf16.gmra.mxu0 %v1290
        %v3710 = vpop.f32.mrf.mxu0
        %v3711 = vadd.f32 %v3652, %v3710
        %v3712 = vpop.f32.mrf.mxu0
        %v3713 = vadd.f32 %v3654, %v3712
        %3714 = vdwg.mxu0
        %3715 = vmatpush.bf16.msra.mxu0 %v2407
        %3716 = vmatpush.bf16.msra.mxu0 %v2404
        %3717 = vmatpush.bf16.msra.mxu0 %v2401
        %3718 = vmatpush.bf16.msra.mxu0 %v2398
        %3719 = vmatpush.bf16.msra.mxu0 %v2395
        %3720 = vmatpush.bf16.msra.mxu0 %v2392
        %3721 = vmatpush.bf16.msra.mxu0 %v2389
        %3722 = vmatpush.bf16.msra.mxu0 %v2386
        %3723 = vmatmul.bf16.gmra.mxu0 %v1201
        %v3724 = vpop.f32.mrf.mxu0
        %v3725 = vadd.f32 %v3666, %v3724
        %v3726 = vpop.f32.mrf.mxu0
        %v3727 = vadd.f32 %v3668, %v3726
        %3728 = vmatmul.bf16.gmra.mxu0 %v1211
        %v3729 = vpop.f32.mrf.mxu0
        %v3730 = vadd.f32 %v3671, %v3729
        %v3731 = vpop.f32.mrf.mxu0
        %v3732 = vadd.f32 %v3673, %v3731
        %3733 = vmatmul.bf16.gmra.mxu0 %v1221
        %v3734 = vpop.f32.mrf.mxu0
        %v3735 = vadd.f32 %v3676, %v3734
        %v3736 = vpop.f32.mrf.mxu0
        %v3737 = vadd.f32 %v3678, %v3736
        %3738 = vmatmul.bf16.gmra.mxu0 %v1231
        %v3739 = vpop.f32.mrf.mxu0
        %v3740 = vadd.f32 %v3681, %v3739
        %v3741 = vpop.f32.mrf.mxu0
        %v3742 = vadd.f32 %v3683, %v3741
        %3743 = vmatmul.bf16.gmra.mxu0 %v1241
        %v3744 = vpop.f32.mrf.mxu0
        %v3745 = vadd.f32 %v3686, %v3744
        %v3746 = vpop.f32.mrf.mxu0
        %v3747 = vadd.f32 %v3688, %v3746
        %3748 = vmatmul.bf16.gmra.mxu0 %v1251
        %v3749 = vpop.f32.mrf.mxu0
        %v3750 = vadd.f32 %v3691, %v3749
        %v3751 = vpop.f32.mrf.mxu0
        %v3752 = vadd.f32 %v3693, %v3751
        %3753 = vmatmul.bf16.gmra.mxu0 %v1261
        %v3754 = vpop.f32.mrf.mxu0
        %v3755 = vadd.f32 %v3696, %v3754
        %v3756 = vpop.f32.mrf.mxu0
        %v3757 = vadd.f32 %v3698, %v3756
        %3758 = vmatmul.bf16.gmra.mxu0 %v1271
        %v3759 = vpop.f32.mrf.mxu0
        %v3760 = vadd.f32 %v3701, %v3759
        %v3761 = vpop.f32.mrf.mxu0
        %v3762 = vadd.f32 %v3703, %v3761
        %3763 = vmatmul.bf16.gmra.mxu0 %v1281
        %v3764 = vpop.f32.mrf.mxu0
        %v3765 = vadd.f32 %v3706, %v3764
        %v3766 = vpop.f32.mrf.mxu0
        %v3767 = vadd.f32 %v3708, %v3766
        %3768 = vmatmul.bf16.gmra.mxu0 %v1291
        %v3769 = vpop.f32.mrf.mxu0
        %v3770 = vadd.f32 %v3711, %v3769
        %v3771 = vpop.f32.mrf.mxu0
        %v3772 = vadd.f32 %v3713, %v3771
        %3773 = vdwg.mxu0
        %3774 = vmatpush.bf16.msra.mxu0 %v2431
        %3775 = vmatpush.bf16.msra.mxu0 %v2428
        %3776 = vmatpush.bf16.msra.mxu0 %v2425
        %3777 = vmatpush.bf16.msra.mxu0 %v2422
        %3778 = vmatpush.bf16.msra.mxu0 %v2419
        %3779 = vmatpush.bf16.msra.mxu0 %v2416
        %3780 = vmatpush.bf16.msra.mxu0 %v2413
        %3781 = vmatpush.bf16.msra.mxu0 %v2410
        %3782 = vmatmul.bf16.gmra.mxu0 %v1202
        %v3783 = vpop.f32.mrf.mxu0
        %v3784 = vadd.f32 %v3725, %v3783
        %v3785 = vpop.f32.mrf.mxu0
        %v3786 = vadd.f32 %v3727, %v3785
        %3787 = vmatmul.bf16.gmra.mxu0 %v1212
        %v3788 = vpop.f32.mrf.mxu0
        %v3789 = vadd.f32 %v3730, %v3788
        %v3790 = vpop.f32.mrf.mxu0
        %v3791 = vadd.f32 %v3732, %v3790
        %3792 = vmatmul.bf16.gmra.mxu0 %v1222
        %v3793 = vpop.f32.mrf.mxu0
        %v3794 = vadd.f32 %v3735, %v3793
        %v3795 = vpop.f32.mrf.mxu0
        %v3796 = vadd.f32 %v3737, %v3795
        %3797 = vmatmul.bf16.gmra.mxu0 %v1232
        %v3798 = vpop.f32.mrf.mxu0
        %v3799 = vadd.f32 %v3740, %v3798
        %v3800 = vpop.f32.mrf.mxu0
        %v3801 = vadd.f32 %v3742, %v3800
        %3802 = vmatmul.bf16.gmra.mxu0 %v1242
        %v3803 = vpop.f32.mrf.mxu0
        %v3804 = vadd.f32 %v3745, %v3803
        %v3805 = vpop.f32.mrf.mxu0
        %v3806 = vadd.f32 %v3747, %v3805
        %3807 = vmatmul.bf16.gmra.mxu0 %v1252
        %v3808 = vpop.f32.mrf.mxu0
        %v3809 = vadd.f32 %v3750, %v3808
        %v3810 = vpop.f32.mrf.mxu0
        %v3811 = vadd.f32 %v3752, %v3810
        %3812 = vmatmul.bf16.gmra.mxu0 %v1262
        %v3813 = vpop.f32.mrf.mxu0
        %v3814 = vadd.f32 %v3755, %v3813
        %v3815 = vpop.f32.mrf.mxu0
        %v3816 = vadd.f32 %v3757, %v3815
        %3817 = vmatmul.bf16.gmra.mxu0 %v1272
        %v3818 = vpop.f32.mrf.mxu0
        %v3819 = vadd.f32 %v3760, %v3818
        %v3820 = vpop.f32.mrf.mxu0
        %v3821 = vadd.f32 %v3762, %v3820
        %3822 = vmatmul.bf16.gmra.mxu0 %v1282
        %v3823 = vpop.f32.mrf.mxu0
        %v3824 = vadd.f32 %v3765, %v3823
        %v3825 = vpop.f32.mrf.mxu0
        %v3826 = vadd.f32 %v3767, %v3825
        %3827 = vmatmul.bf16.gmra.mxu0 %v1292
        %v3828 = vpop.f32.mrf.mxu0
        %v3829 = vadd.f32 %v3770, %v3828
        %v3830 = vpop.f32.mrf.mxu0
        %v3831 = vadd.f32 %v3772, %v3830
        %3832 = vdwg.mxu0
        %3833 = vmatpush.bf16.msra.mxu0 %v2216
        %3834 = vmatpush.bf16.msra.mxu0 %v2213
        %3835 = vmatpush.bf16.msra.mxu0 %v2210
        %3836 = vmatpush.bf16.msra.mxu0 %v2207
        %3837 = vmatpush.bf16.msra.mxu0 %v2204
        %3838 = vmatpush.bf16.msra.mxu0 %v2201
        %3839 = vmatpush.bf16.msra.mxu0 %v2198
        %3840 = vmatpush.bf16.msra.mxu0 %v2195
        %3841 = vmatmul.bf16.gmra.mxu0 %v1193
        %v3842 = vpop.f32.mrf.mxu0
        %v3843 = vpop.f32.mrf.mxu0
        %3844 = vmatmul.bf16.gmra.mxu0 %v1203
        %v3845 = vpop.f32.mrf.mxu0
        %v3846 = vadd.f32 0.0, %v3845
        %v3847 = vpop.f32.mrf.mxu0
        %v3848 = vadd.f32 0.0, %v3847
        %3849 = vmatmul.bf16.gmra.mxu0 %v1213
        %v3850 = vpop.f32.mrf.mxu0
        %v3851 = vadd.f32 0.0, %v3850
        %v3852 = vpop.f32.mrf.mxu0
        %v3853 = vadd.f32 0.0, %v3852
        %3854 = vmatmul.bf16.gmra.mxu0 %v1223
        %v3855 = vpop.f32.mrf.mxu0
        %v3856 = vadd.f32 0.0, %v3855
        %v3857 = vpop.f32.mrf.mxu0
        %v3858 = vadd.f32 0.0, %v3857
        %3859 = vmatmul.bf16.gmra.mxu0 %v1233
        %v3860 = vpop.f32.mrf.mxu0
        %v3861 = vadd.f32 0.0, %v3860
        %v3862 = vpop.f32.mrf.mxu0
        %v3863 = vadd.f32 0.0, %v3862
        %3864 = vmatmul.bf16.gmra.mxu0 %v1243
        %v3865 = vpop.f32.mrf.mxu0
        %v3866 = vadd.f32 0.0, %v3865
        %v3867 = vpop.f32.mrf.mxu0
        %v3868 = vadd.f32 0.0, %v3867
        %3869 = vmatmul.bf16.gmra.mxu0 %v1253
        %v3870 = vpop.f32.mrf.mxu0
        %v3871 = vadd.f32 0.0, %v3870
        %v3872 = vpop.f32.mrf.mxu0
        %v3873 = vadd.f32 0.0, %v3872
        %3874 = vmatmul.bf16.gmra.mxu0 %v1263
        %v3875 = vpop.f32.mrf.mxu0
        %v3876 = vadd.f32 0.0, %v3875
        %v3877 = vpop.f32.mrf.mxu0
        %v3878 = vadd.f32 0.0, %v3877
        %3879 = vmatmul.bf16.gmra.mxu0 %v1273
        %v3880 = vpop.f32.mrf.mxu0
        %v3881 = vadd.f32 0.0, %v3880
        %v3882 = vpop.f32.mrf.mxu0
        %v3883 = vadd.f32 0.0, %v3882
        %3884 = vmatmul.bf16.gmra.mxu0 %v1283
        %v3885 = vpop.f32.mrf.mxu0
        %v3886 = vadd.f32 0.0, %v3885
        %v3887 = vpop.f32.mrf.mxu0
        %v3888 = vadd.f32 0.0, %v3887
        %3889 = vdwg.mxu0
        %3890 = vmatpush.bf16.msra.mxu0 %v2240
        %3891 = vmatpush.bf16.msra.mxu0 %v2237
        %3892 = vmatpush.bf16.msra.mxu0 %v2234
        %3893 = vmatpush.bf16.msra.mxu0 %v2231
        %3894 = vmatpush.bf16.msra.mxu0 %v2228
        %3895 = vmatpush.bf16.msra.mxu0 %v2225
        %3896 = vmatpush.bf16.msra.mxu0 %v2222
        %3897 = vmatpush.bf16.msra.mxu0 %v2219
        %3898 = vmatmul.bf16.gmra.mxu0 %v1194
        %v3899 = vpop.f32.mrf.mxu0
        %v3900 = vpop.f32.mrf.mxu0
        %3901 = vmatmul.bf16.gmra.mxu0 %v1204
        %v3902 = vpop.f32.mrf.mxu0
        %v3903 = vadd.f32 %v3846, %v3902
        %v3904 = vpop.f32.mrf.mxu0
        %v3905 = vadd.f32 %v3848, %v3904
        %3906 = vmatmul.bf16.gmra.mxu0 %v1214
        %v3907 = vpop.f32.mrf.mxu0
        %v3908 = vadd.f32 %v3851, %v3907
        %v3909 = vpop.f32.mrf.mxu0
        %v3910 = vadd.f32 %v3853, %v3909
        %3911 = vmatmul.bf16.gmra.mxu0 %v1224
        %v3912 = vpop.f32.mrf.mxu0
        %v3913 = vadd.f32 %v3856, %v3912
        %v3914 = vpop.f32.mrf.mxu0
        %v3915 = vadd.f32 %v3858, %v3914
        %3916 = vmatmul.bf16.gmra.mxu0 %v1234
        %v3917 = vpop.f32.mrf.mxu0
        %v3918 = vadd.f32 %v3861, %v3917
        %v3919 = vpop.f32.mrf.mxu0
        %v3920 = vadd.f32 %v3863, %v3919
        %3921 = vmatmul.bf16.gmra.mxu0 %v1244
        %v3922 = vpop.f32.mrf.mxu0
        %v3923 = vadd.f32 %v3866, %v3922
        %v3924 = vpop.f32.mrf.mxu0
        %v3925 = vadd.f32 %v3868, %v3924
        %3926 = vmatmul.bf16.gmra.mxu0 %v1254
        %v3927 = vpop.f32.mrf.mxu0
        %v3928 = vadd.f32 %v3871, %v3927
        %v3929 = vpop.f32.mrf.mxu0
        %v3930 = vadd.f32 %v3873, %v3929
        %3931 = vmatmul.bf16.gmra.mxu0 %v1264
        %v3932 = vpop.f32.mrf.mxu0
        %v3933 = vadd.f32 %v3876, %v3932
        %v3934 = vpop.f32.mrf.mxu0
        %v3935 = vadd.f32 %v3878, %v3934
        %3936 = vmatmul.bf16.gmra.mxu0 %v1274
        %v3937 = vpop.f32.mrf.mxu0
        %v3938 = vadd.f32 %v3881, %v3937
        %v3939 = vpop.f32.mrf.mxu0
        %v3940 = vadd.f32 %v3883, %v3939
        %3941 = vmatmul.bf16.gmra.mxu0 %v1284
        %v3942 = vpop.f32.mrf.mxu0
        %v3943 = vadd.f32 %v3886, %v3942
        %v3944 = vpop.f32.mrf.mxu0
        %v3945 = vadd.f32 %v3888, %v3944
        %3946 = vdwg.mxu0
        %3947 = vmatpush.bf16.msra.mxu0 %v2264
        %3948 = vmatpush.bf16.msra.mxu0 %v2261
        %3949 = vmatpush.bf16.msra.mxu0 %v2258
        %3950 = vmatpush.bf16.msra.mxu0 %v2255
        %3951 = vmatpush.bf16.msra.mxu0 %v2252
        %3952 = vmatpush.bf16.msra.mxu0 %v2249
        %3953 = vmatpush.bf16.msra.mxu0 %v2246
        %3954 = vmatpush.bf16.msra.mxu0 %v2243
        %3955 = vmatmul.bf16.gmra.mxu0 %v1195
        %v3956 = vpop.f32.mrf.mxu0
        %v3957 = vpop.f32.mrf.mxu0
        %3958 = vmatmul.bf16.gmra.mxu0 %v1205
        %v3959 = vpop.f32.mrf.mxu0
        %v3960 = vadd.f32 %v3903, %v3959
        %v3961 = vpop.f32.mrf.mxu0
        %v3962 = vadd.f32 %v3905, %v3961
        %3963 = vmatmul.bf16.gmra.mxu0 %v1215
        %v3964 = vpop.f32.mrf.mxu0
        %v3965 = vadd.f32 %v3908, %v3964
        %v3966 = vpop.f32.mrf.mxu0
        %v3967 = vadd.f32 %v3910, %v3966
        %3968 = vmatmul.bf16.gmra.mxu0 %v1225
        %v3969 = vpop.f32.mrf.mxu0
        %v3970 = vadd.f32 %v3913, %v3969
        %v3971 = vpop.f32.mrf.mxu0
        %v3972 = vadd.f32 %v3915, %v3971
        %3973 = vmatmul.bf16.gmra.mxu0 %v1235
        %v3974 = vpop.f32.mrf.mxu0
        %v3975 = vadd.f32 %v3918, %v3974
        %v3976 = vpop.f32.mrf.mxu0
        %v3977 = vadd.f32 %v3920, %v3976
        %3978 = vmatmul.bf16.gmra.mxu0 %v1245
        %v3979 = vpop.f32.mrf.mxu0
        %v3980 = vadd.f32 %v3923, %v3979
        %v3981 = vpop.f32.mrf.mxu0
        %v3982 = vadd.f32 %v3925, %v3981
        %3983 = vmatmul.bf16.gmra.mxu0 %v1255
        %v3984 = vpop.f32.mrf.mxu0
        %v3985 = vadd.f32 %v3928, %v3984
        %v3986 = vpop.f32.mrf.mxu0
        %v3987 = vadd.f32 %v3930, %v3986
        %3988 = vmatmul.bf16.gmra.mxu0 %v1265
        %v3989 = vpop.f32.mrf.mxu0
        %v3990 = vadd.f32 %v3933, %v3989
        %v3991 = vpop.f32.mrf.mxu0
        %v3992 = vadd.f32 %v3935, %v3991
        %3993 = vmatmul.bf16.gmra.mxu0 %v1275
        %v3994 = vpop.f32.mrf.mxu0
        %v3995 = vadd.f32 %v3938, %v3994
        %v3996 = vpop.f32.mrf.mxu0
        %v3997 = vadd.f32 %v3940, %v3996
        %3998 = vmatmul.bf16.gmra.mxu0 %v1285
        %v3999 = vpop.f32.mrf.mxu0
        %v4000 = vadd.f32 %v3943, %v3999
        %v4001 = vpop.f32.mrf.mxu0
        %v4002 = vadd.f32 %v3945, %v4001
        %4003 = vdwg.mxu0
        %4004 = vmatpush.bf16.msra.mxu0 %v2288
        %4005 = vmatpush.bf16.msra.mxu0 %v2285
        %4006 = vmatpush.bf16.msra.mxu0 %v2282
        %4007 = vmatpush.bf16.msra.mxu0 %v2279
        %4008 = vmatpush.bf16.msra.mxu0 %v2276
        %4009 = vmatpush.bf16.msra.mxu0 %v2273
        %4010 = vmatpush.bf16.msra.mxu0 %v2270
        %4011 = vmatpush.bf16.msra.mxu0 %v2267
        %4012 = vmatmul.bf16.gmra.mxu0 %v1196
        %v4013 = vpop.f32.mrf.mxu0
        %v4014 = vpop.f32.mrf.mxu0
        %4015 = vmatmul.bf16.gmra.mxu0 %v1206
        %v4016 = vpop.f32.mrf.mxu0
        %v4017 = vadd.f32 %v3960, %v4016
        %v4018 = vpop.f32.mrf.mxu0
        %v4019 = vadd.f32 %v3962, %v4018
        %4020 = vmatmul.bf16.gmra.mxu0 %v1216
        %v4021 = vpop.f32.mrf.mxu0
        %v4022 = vadd.f32 %v3965, %v4021
        %v4023 = vpop.f32.mrf.mxu0
        %v4024 = vadd.f32 %v3967, %v4023
        %4025 = vmatmul.bf16.gmra.mxu0 %v1226
        %v4026 = vpop.f32.mrf.mxu0
        %v4027 = vadd.f32 %v3970, %v4026
        %v4028 = vpop.f32.mrf.mxu0
        %v4029 = vadd.f32 %v3972, %v4028
        %4030 = vmatmul.bf16.gmra.mxu0 %v1236
        %v4031 = vpop.f32.mrf.mxu0
        %v4032 = vadd.f32 %v3975, %v4031
        %v4033 = vpop.f32.mrf.mxu0
        %v4034 = vadd.f32 %v3977, %v4033
        %4035 = vmatmul.bf16.gmra.mxu0 %v1246
        %v4036 = vpop.f32.mrf.mxu0
        %v4037 = vadd.f32 %v3980, %v4036
        %v4038 = vpop.f32.mrf.mxu0
        %v4039 = vadd.f32 %v3982, %v4038
        %4040 = vmatmul.bf16.gmra.mxu0 %v1256
        %v4041 = vpop.f32.mrf.mxu0
        %v4042 = vadd.f32 %v3985, %v4041
        %v4043 = vpop.f32.mrf.mxu0
        %v4044 = vadd.f32 %v3987, %v4043
        %4045 = vmatmul.bf16.gmra.mxu0 %v1266
        %v4046 = vpop.f32.mrf.mxu0
        %v4047 = vadd.f32 %v3990, %v4046
        %v4048 = vpop.f32.mrf.mxu0
        %v4049 = vadd.f32 %v3992, %v4048
        %4050 = vmatmul.bf16.gmra.mxu0 %v1276
        %v4051 = vpop.f32.mrf.mxu0
        %v4052 = vadd.f32 %v3995, %v4051
        %v4053 = vpop.f32.mrf.mxu0
        %v4054 = vadd.f32 %v3997, %v4053
        %4055 = vmatmul.bf16.gmra.mxu0 %v1286
        %v4056 = vpop.f32.mrf.mxu0
        %v4057 = vadd.f32 %v4000, %v4056
        %v4058 = vpop.f32.mrf.mxu0
        %v4059 = vadd.f32 %v4002, %v4058
        %4060 = vdwg.mxu0
        %4061 = vmatpush.bf16.msra.mxu0 %v2312
        %4062 = vmatpush.bf16.msra.mxu0 %v2309
        %4063 = vmatpush.bf16.msra.mxu0 %v2306
        %4064 = vmatpush.bf16.msra.mxu0 %v2303
        %4065 = vmatpush.bf16.msra.mxu0 %v2300
        %4066 = vmatpush.bf16.msra.mxu0 %v2297
        %4067 = vmatpush.bf16.msra.mxu0 %v2294
        %4068 = vmatpush.bf16.msra.mxu0 %v2291
        %4069 = vmatmul.bf16.gmra.mxu0 %v1197
        %v4070 = vpop.f32.mrf.mxu0
        %v4071 = vpop.f32.mrf.mxu0
        %4072 = vmatmul.bf16.gmra.mxu0 %v1207
        %v4073 = vpop.f32.mrf.mxu0
        %v4074 = vadd.f32 %v4017, %v4073
        %v4075 = vpop.f32.mrf.mxu0
        %v4076 = vadd.f32 %v4019, %v4075
        %4077 = vmatmul.bf16.gmra.mxu0 %v1217
        %v4078 = vpop.f32.mrf.mxu0
        %v4079 = vadd.f32 %v4022, %v4078
        %v4080 = vpop.f32.mrf.mxu0
        %v4081 = vadd.f32 %v4024, %v4080
        %4082 = vmatmul.bf16.gmra.mxu0 %v1227
        %v4083 = vpop.f32.mrf.mxu0
        %v4084 = vadd.f32 %v4027, %v4083
        %v4085 = vpop.f32.mrf.mxu0
        %v4086 = vadd.f32 %v4029, %v4085
        %4087 = vmatmul.bf16.gmra.mxu0 %v1237
        %v4088 = vpop.f32.mrf.mxu0
        %v4089 = vadd.f32 %v4032, %v4088
        %v4090 = vpop.f32.mrf.mxu0
        %v4091 = vadd.f32 %v4034, %v4090
        %4092 = vmatmul.bf16.gmra.mxu0 %v1247
        %v4093 = vpop.f32.mrf.mxu0
        %v4094 = vadd.f32 %v4037, %v4093
        %v4095 = vpop.f32.mrf.mxu0
        %v4096 = vadd.f32 %v4039, %v4095
        %4097 = vmatmul.bf16.gmra.mxu0 %v1257
        %v4098 = vpop.f32.mrf.mxu0
        %v4099 = vadd.f32 %v4042, %v4098
        %v4100 = vpop.f32.mrf.mxu0
        %v4101 = vadd.f32 %v4044, %v4100
        %4102 = vmatmul.bf16.gmra.mxu0 %v1267
        %v4103 = vpop.f32.mrf.mxu0
        %v4104 = vadd.f32 %v4047, %v4103
        %v4105 = vpop.f32.mrf.mxu0
        %v4106 = vadd.f32 %v4049, %v4105
        %4107 = vmatmul.bf16.gmra.mxu0 %v1277
        %v4108 = vpop.f32.mrf.mxu0
        %v4109 = vadd.f32 %v4052, %v4108
        %v4110 = vpop.f32.mrf.mxu0
        %v4111 = vadd.f32 %v4054, %v4110
        %4112 = vmatmul.bf16.gmra.mxu0 %v1287
        %v4113 = vpop.f32.mrf.mxu0
        %v4114 = vadd.f32 %v4057, %v4113
        %v4115 = vpop.f32.mrf.mxu0
        %v4116 = vadd.f32 %v4059, %v4115
        %4117 = vdwg.mxu0
        %4118 = vmatpush.bf16.msra.mxu0 %v2336
        %4119 = vmatpush.bf16.msra.mxu0 %v2333
        %4120 = vmatpush.bf16.msra.mxu0 %v2330
        %4121 = vmatpush.bf16.msra.mxu0 %v2327
        %4122 = vmatpush.bf16.msra.mxu0 %v2324
        %4123 = vmatpush.bf16.msra.mxu0 %v2321
        %4124 = vmatpush.bf16.msra.mxu0 %v2318
        %4125 = vmatpush.bf16.msra.mxu0 %v2315
        %4126 = vmatmul.bf16.gmra.mxu0 %v1198
        %v4127 = vpop.f32.mrf.mxu0
        %v4128 = vpop.f32.mrf.mxu0
        %4129 = vmatmul.bf16.gmra.mxu0 %v1208
        %v4130 = vpop.f32.mrf.mxu0
        %v4131 = vadd.f32 %v4074, %v4130
        %v4132 = vpop.f32.mrf.mxu0
        %v4133 = vadd.f32 %v4076, %v4132
        %4134 = vmatmul.bf16.gmra.mxu0 %v1218
        %v4135 = vpop.f32.mrf.mxu0
        %v4136 = vadd.f32 %v4079, %v4135
        %v4137 = vpop.f32.mrf.mxu0
        %v4138 = vadd.f32 %v4081, %v4137
        %4139 = vmatmul.bf16.gmra.mxu0 %v1228
        %v4140 = vpop.f32.mrf.mxu0
        %v4141 = vadd.f32 %v4084, %v4140
        %v4142 = vpop.f32.mrf.mxu0
        %v4143 = vadd.f32 %v4086, %v4142
        %4144 = vmatmul.bf16.gmra.mxu0 %v1238
        %v4145 = vpop.f32.mrf.mxu0
        %v4146 = vadd.f32 %v4089, %v4145
        %v4147 = vpop.f32.mrf.mxu0
        %v4148 = vadd.f32 %v4091, %v4147
        %4149 = vmatmul.bf16.gmra.mxu0 %v1248
        %v4150 = vpop.f32.mrf.mxu0
        %v4151 = vadd.f32 %v4094, %v4150
        %v4152 = vpop.f32.mrf.mxu0
        %v4153 = vadd.f32 %v4096, %v4152
        %4154 = vmatmul.bf16.gmra.mxu0 %v1258
        %v4155 = vpop.f32.mrf.mxu0
        %v4156 = vadd.f32 %v4099, %v4155
        %v4157 = vpop.f32.mrf.mxu0
        %v4158 = vadd.f32 %v4101, %v4157
        %4159 = vmatmul.bf16.gmra.mxu0 %v1268
        %v4160 = vpop.f32.mrf.mxu0
        %v4161 = vadd.f32 %v4104, %v4160
        %v4162 = vpop.f32.mrf.mxu0
        %v4163 = vadd.f32 %v4106, %v4162
        %4164 = vmatmul.bf16.gmra.mxu0 %v1278
        %v4165 = vpop.f32.mrf.mxu0
        %v4166 = vadd.f32 %v4109, %v4165
        %v4167 = vpop.f32.mrf.mxu0
        %v4168 = vadd.f32 %v4111, %v4167
        %4169 = vmatmul.bf16.gmra.mxu0 %v1288
        %v4170 = vpop.f32.mrf.mxu0
        %v4171 = vadd.f32 %v4114, %v4170
        %v4172 = vpop.f32.mrf.mxu0
        %v4173 = vadd.f32 %v4116, %v4172
        %4174 = vdwg.mxu0
        %4175 = vmatpush.bf16.msra.mxu0 %v2360
        %4176 = vmatpush.bf16.msra.mxu0 %v2357
        %4177 = vmatpush.bf16.msra.mxu0 %v2354
        %4178 = vmatpush.bf16.msra.mxu0 %v2351
        %4179 = vmatpush.bf16.msra.mxu0 %v2348
        %4180 = vmatpush.bf16.msra.mxu0 %v2345
        %4181 = vmatpush.bf16.msra.mxu0 %v2342
        %4182 = vmatpush.bf16.msra.mxu0 %v2339
        %4183 = vmatmul.bf16.gmra.mxu0 %v1199
        %v4184 = vpop.f32.mrf.mxu0
        %v4185 = vpop.f32.mrf.mxu0
        %4186 = vmatmul.bf16.gmra.mxu0 %v1209
        %v4187 = vpop.f32.mrf.mxu0
        %v4188 = vadd.f32 %v4131, %v4187
        %v4189 = vpop.f32.mrf.mxu0
        %v4190 = vadd.f32 %v4133, %v4189
        %4191 = vmatmul.bf16.gmra.mxu0 %v1219
        %v4192 = vpop.f32.mrf.mxu0
        %v4193 = vadd.f32 %v4136, %v4192
        %v4194 = vpop.f32.mrf.mxu0
        %v4195 = vadd.f32 %v4138, %v4194
        %4196 = vmatmul.bf16.gmra.mxu0 %v1229
        %v4197 = vpop.f32.mrf.mxu0
        %v4198 = vadd.f32 %v4141, %v4197
        %v4199 = vpop.f32.mrf.mxu0
        %v4200 = vadd.f32 %v4143, %v4199
        %4201 = vmatmul.bf16.gmra.mxu0 %v1239
        %v4202 = vpop.f32.mrf.mxu0
        %v4203 = vadd.f32 %v4146, %v4202
        %v4204 = vpop.f32.mrf.mxu0
        %v4205 = vadd.f32 %v4148, %v4204
        %4206 = vmatmul.bf16.gmra.mxu0 %v1249
        %v4207 = vpop.f32.mrf.mxu0
        %v4208 = vadd.f32 %v4151, %v4207
        %v4209 = vpop.f32.mrf.mxu0
        %v4210 = vadd.f32 %v4153, %v4209
        %4211 = vmatmul.bf16.gmra.mxu0 %v1259
        %v4212 = vpop.f32.mrf.mxu0
        %v4213 = vadd.f32 %v4156, %v4212
        %v4214 = vpop.f32.mrf.mxu0
        %v4215 = vadd.f32 %v4158, %v4214
        %4216 = vmatmul.bf16.gmra.mxu0 %v1269
        %v4217 = vpop.f32.mrf.mxu0
        %v4218 = vadd.f32 %v4161, %v4217
        %v4219 = vpop.f32.mrf.mxu0
        %v4220 = vadd.f32 %v4163, %v4219
        %4221 = vmatmul.bf16.gmra.mxu0 %v1279
        %v4222 = vpop.f32.mrf.mxu0
        %v4223 = vadd.f32 %v4166, %v4222
        %v4224 = vpop.f32.mrf.mxu0
        %v4225 = vadd.f32 %v4168, %v4224
        %4226 = vmatmul.bf16.gmra.mxu0 %v1289
        %v4227 = vpop.f32.mrf.mxu0
        %v4228 = vadd.f32 %v4171, %v4227
        %v4229 = vpop.f32.mrf.mxu0
        %v4230 = vadd.f32 %v4173, %v4229
        %4231 = vdwg.mxu0
        %4232 = vmatpush.bf16.msra.mxu0 %v2384
        %4233 = vmatpush.bf16.msra.mxu0 %v2381
        %4234 = vmatpush.bf16.msra.mxu0 %v2378
        %4235 = vmatpush.bf16.msra.mxu0 %v2375
        %4236 = vmatpush.bf16.msra.mxu0 %v2372
        %4237 = vmatpush.bf16.msra.mxu0 %v2369
        %4238 = vmatpush.bf16.msra.mxu0 %v2366
        %4239 = vmatpush.bf16.msra.mxu0 %v2363
        %4240 = vmatmul.bf16.gmra.mxu0 %v1200
        %v4241 = vpop.f32.mrf.mxu0
        %v4242 = vpop.f32.mrf.mxu0
        %4243 = vmatmul.bf16.gmra.mxu0 %v1210
        %v4244 = vpop.f32.mrf.mxu0
        %v4245 = vadd.f32 %v4188, %v4244
        %v4246 = vpop.f32.mrf.mxu0
        %v4247 = vadd.f32 %v4190, %v4246
        %4248 = vmatmul.bf16.gmra.mxu0 %v1220
        %v4249 = vpop.f32.mrf.mxu0
        %v4250 = vadd.f32 %v4193, %v4249
        %v4251 = vpop.f32.mrf.mxu0
        %v4252 = vadd.f32 %v4195, %v4251
        %4253 = vmatmul.bf16.gmra.mxu0 %v1230
        %v4254 = vpop.f32.mrf.mxu0
        %v4255 = vadd.f32 %v4198, %v4254
        %v4256 = vpop.f32.mrf.mxu0
        %v4257 = vadd.f32 %v4200, %v4256
        %4258 = vmatmul.bf16.gmra.mxu0 %v1240
        %v4259 = vpop.f32.mrf.mxu0
        %v4260 = vadd.f32 %v4203, %v4259
        %v4261 = vpop.f32.mrf.mxu0
        %v4262 = vadd.f32 %v4205, %v4261
        %4263 = vmatmul.bf16.gmra.mxu0 %v1250
        %v4264 = vpop.f32.mrf.mxu0
        %v4265 = vadd.f32 %v4208, %v4264
        %v4266 = vpop.f32.mrf.mxu0
        %v4267 = vadd.f32 %v4210, %v4266
        %4268 = vmatmul.bf16.gmra.mxu0 %v1260
        %v4269 = vpop.f32.mrf.mxu0
        %v4270 = vadd.f32 %v4213, %v4269
        %v4271 = vpop.f32.mrf.mxu0
        %v4272 = vadd.f32 %v4215, %v4271
        %4273 = vmatmul.bf16.gmra.mxu0 %v1270
        %v4274 = vpop.f32.mrf.mxu0
        %v4275 = vadd.f32 %v4218, %v4274
        %v4276 = vpop.f32.mrf.mxu0
        %v4277 = vadd.f32 %v4220, %v4276
        %4278 = vmatmul.bf16.gmra.mxu0 %v1280
        %v4279 = vpop.f32.mrf.mxu0
        %v4280 = vadd.f32 %v4223, %v4279
        %v4281 = vpop.f32.mrf.mxu0
        %v4282 = vadd.f32 %v4225, %v4281
        %4283 = vmatmul.bf16.gmra.mxu0 %v1290
        %v4284 = vpop.f32.mrf.mxu0
        %v4285 = vadd.f32 %v4228, %v4284
        %v4286 = vpop.f32.mrf.mxu0
        %v4287 = vadd.f32 %v4230, %v4286
        %4288 = vdwg.mxu0
        %4289 = vmatpush.bf16.msra.mxu0 %v2408
        %4290 = vmatpush.bf16.msra.mxu0 %v2405
        %4291 = vmatpush.bf16.msra.mxu0 %v2402
        %4292 = vmatpush.bf16.msra.mxu0 %v2399
        %4293 = vmatpush.bf16.msra.mxu0 %v2396
        %4294 = vmatpush.bf16.msra.mxu0 %v2393
        %4295 = vmatpush.bf16.msra.mxu0 %v2390
        %4296 = vmatpush.bf16.msra.mxu0 %v2387
        %4297 = vmatmul.bf16.gmra.mxu0 %v1201
        %v4298 = vpop.f32.mrf.mxu0
        %v4299 = vpop.f32.mrf.mxu0
        %4300 = vmatmul.bf16.gmra.mxu0 %v1211
        %v4301 = vpop.f32.mrf.mxu0
        %v4302 = vadd.f32 %v4245, %v4301
        %v4303 = vpop.f32.mrf.mxu0
        %v4304 = vadd.f32 %v4247, %v4303
        %4305 = vmatmul.bf16.gmra.mxu0 %v1221
        %v4306 = vpop.f32.mrf.mxu0
        %v4307 = vadd.f32 %v4250, %v4306
        %v4308 = vpop.f32.mrf.mxu0
        %v4309 = vadd.f32 %v4252, %v4308
        %4310 = vmatmul.bf16.gmra.mxu0 %v1231
        %v4311 = vpop.f32.mrf.mxu0
        %v4312 = vadd.f32 %v4255, %v4311
        %v4313 = vpop.f32.mrf.mxu0
        %v4314 = vadd.f32 %v4257, %v4313
        %4315 = vmatmul.bf16.gmra.mxu0 %v1241
        %v4316 = vpop.f32.mrf.mxu0
        %v4317 = vadd.f32 %v4260, %v4316
        %v4318 = vpop.f32.mrf.mxu0
        %v4319 = vadd.f32 %v4262, %v4318
        %4320 = vmatmul.bf16.gmra.mxu0 %v1251
        %v4321 = vpop.f32.mrf.mxu0
        %v4322 = vadd.f32 %v4265, %v4321
        %v4323 = vpop.f32.mrf.mxu0
        %v4324 = vadd.f32 %v4267, %v4323
        %4325 = vmatmul.bf16.gmra.mxu0 %v1261
        %v4326 = vpop.f32.mrf.mxu0
        %v4327 = vadd.f32 %v4270, %v4326
        %v4328 = vpop.f32.mrf.mxu0
        %v4329 = vadd.f32 %v4272, %v4328
        %4330 = vmatmul.bf16.gmra.mxu0 %v1271
        %v4331 = vpop.f32.mrf.mxu0
        %v4332 = vadd.f32 %v4275, %v4331
        %v4333 = vpop.f32.mrf.mxu0
        %v4334 = vadd.f32 %v4277, %v4333
        %4335 = vmatmul.bf16.gmra.mxu0 %v1281
        %v4336 = vpop.f32.mrf.mxu0
        %v4337 = vadd.f32 %v4280, %v4336
        %v4338 = vpop.f32.mrf.mxu0
        %v4339 = vadd.f32 %v4282, %v4338
        %4340 = vmatmul.bf16.gmra.mxu0 %v1291
        %v4341 = vpop.f32.mrf.mxu0
        %v4342 = vadd.f32 %v4285, %v4341
        %v4343 = vpop.f32.mrf.mxu0
        %v4344 = vadd.f32 %v4287, %v4343
        %4345 = vdwg.mxu0
        %4346 = vmatpush.bf16.msra.mxu0 %v2432
        %4347 = vmatpush.bf16.msra.mxu0 %v2429
        %4348 = vmatpush.bf16.msra.mxu0 %v2426
        %4349 = vmatpush.bf16.msra.mxu0 %v2423
        %4350 = vmatpush.bf16.msra.mxu0 %v2420
        %4351 = vmatpush.bf16.msra.mxu0 %v2417
        %4352 = vmatpush.bf16.msra.mxu0 %v2414
        %4353 = vmatpush.bf16.msra.mxu0 %v2411
        %4354 = vmatmul.bf16.gmra.mxu0 %v1202
        %v4355 = vpop.f32.mrf.mxu0
        %v4356 = vpop.f32.mrf.mxu0
        %4357 = vmatmul.bf16.gmra.mxu0 %v1212
        %v4358 = vpop.f32.mrf.mxu0
        %v4359 = vadd.f32 %v4302, %v4358
        %v4360 = vpop.f32.mrf.mxu0
        %v4361 = vadd.f32 %v4304, %v4360
        %4362 = vmatmul.bf16.gmra.mxu0 %v1222
        %v4363 = vpop.f32.mrf.mxu0
        %v4364 = vadd.f32 %v4307, %v4363
        %v4365 = vpop.f32.mrf.mxu0
        %v4366 = vadd.f32 %v4309, %v4365
        %4367 = vmatmul.bf16.gmra.mxu0 %v1232
        %v4368 = vpop.f32.mrf.mxu0
        %v4369 = vadd.f32 %v4312, %v4368
        %v4370 = vpop.f32.mrf.mxu0
        %v4371 = vadd.f32 %v4314, %v4370
        %4372 = vmatmul.bf16.gmra.mxu0 %v1242
        %v4373 = vpop.f32.mrf.mxu0
        %v4374 = vadd.f32 %v4317, %v4373
        %v4375 = vpop.f32.mrf.mxu0
        %v4376 = vadd.f32 %v4319, %v4375
        %4377 = vmatmul.bf16.gmra.mxu0 %v1252
        %v4378 = vpop.f32.mrf.mxu0
        %v4379 = vadd.f32 %v4322, %v4378
        %v4380 = vpop.f32.mrf.mxu0
        %v4381 = vadd.f32 %v4324, %v4380
        %4382 = vmatmul.bf16.gmra.mxu0 %v1262
        %v4383 = vpop.f32.mrf.mxu0
        %v4384 = vadd.f32 %v4327, %v4383
        %v4385 = vpop.f32.mrf.mxu0
        %v4386 = vadd.f32 %v4329, %v4385
        %4387 = vmatmul.bf16.gmra.mxu0 %v1272
        %v4388 = vpop.f32.mrf.mxu0
        %v4389 = vadd.f32 %v4332, %v4388
        %v4390 = vpop.f32.mrf.mxu0
        %v4391 = vadd.f32 %v4334, %v4390
        %4392 = vmatmul.bf16.gmra.mxu0 %v1282
        %v4393 = vpop.f32.mrf.mxu0
        %v4394 = vadd.f32 %v4337, %v4393
        %v4395 = vpop.f32.mrf.mxu0
        %v4396 = vadd.f32 %v4339, %v4395
        %4397 = vmatmul.bf16.gmra.mxu0 %v1292
        %v4398 = vpop.f32.mrf.mxu0
        %v4399 = vadd.f32 %v4342, %v4398
        %v4400 = vpop.f32.mrf.mxu0
        %v4401 = vadd.f32 %v4344, %v4400
        %4402 = vdwg.mxu0
        %v4403 = vadd.f32 %v3784, 0.0
        %v4404 = vadd.f32 %v3786, 0.0
        %v4405 = vadd.f32 %v3789, %v3196
        %v4406 = vadd.f32 %v3791, %v3198
        %v4407 = vadd.f32 %v3794, %v3201
        %v4408 = vadd.f32 %v3796, %v3203
        %v4409 = vadd.f32 %v3799, %v3206
        %v4410 = vadd.f32 %v3801, %v3208
        %v4411 = vadd.f32 %v3804, %v3211
        %v4412 = vadd.f32 %v3806, %v3213
        %v4413 = vadd.f32 %v3809, %v3216
        %v4414 = vadd.f32 %v3811, %v3218
        %v4415 = vadd.f32 %v3814, %v3221
        %v4416 = vadd.f32 %v3816, %v3223
        %v4417 = vadd.f32 %v3819, %v3226
        %v4418 = vadd.f32 %v3821, %v3228
        %v4419 = vadd.f32 %v3824, %v3231
        %v4420 = vadd.f32 %v3826, %v3233
        %v4421 = vadd.f32 %v3829, %v3236
        %v4422 = vadd.f32 %v3831, %v3238
        %v4423 = vadd.f32 %v4403, %v4359
        %v4424 = vadd.f32 %v4404, %v4361
        %v4425 = vadd.f32 %v4405, %v4364
        %v4426 = vadd.f32 %v4406, %v4366
        %v4427 = vadd.f32 %v4407, %v4369
        %v4428 = vadd.f32 %v4408, %v4371
        %v4429 = vadd.f32 %v4409, %v4374
        %v4430 = vadd.f32 %v4410, %v4376
        %v4431 = vadd.f32 %v4411, %v4379
        %v4432 = vadd.f32 %v4412, %v4381
        %v4433 = vadd.f32 %v4413, %v4384
        %v4434 = vadd.f32 %v4414, %v4386
        %v4435 = vadd.f32 %v4415, %v4389
        %v4436 = vadd.f32 %v4416, %v4391
        %v4437 = vadd.f32 %v4417, %v4394
        %v4438 = vadd.f32 %v4418, %v4396
        %v4439 = vadd.f32 %v4419, %v4399
        %v4440 = vadd.f32 %v4420, %v4401
        %v4441 = vadd.f32 %v4421, 0.0
        %v4442 = vadd.f32 %v4422, 0.0
        %v4443 = vld [vmem:[%s2] sm:$0x1]
        %v4445 = vperm.slane %v4443, 0
        %v4447 = vmul.f32 %v4423, %v4445
        %v4448 = vmul.f32 %v4424, %v4445
        %v4449 = vmul.f32 %v4425, %v4445
        %v4450 = vmul.f32 %v4426, %v4445
        %v4451 = vmul.f32 %v4427, %v4445
        %v4452 = vmul.f32 %v4428, %v4445
        %v4453 = vmul.f32 %v4429, %v4445
        %v4454 = vmul.f32 %v4430, %v4445
        %v4455 = vmul.f32 %v4431, %v4445
        %v4456 = vmul.f32 %v4432, %v4445
        %v4457 = vmul.f32 %v4433, %v4445
        %v4458 = vmul.f32 %v4434, %v4445
        %v4459 = vmul.f32 %v4435, %v4445
        %v4460 = vmul.f32 %v4436, %v4445
        %v4461 = vmul.f32 %v4437, %v4445
        %v4462 = vmul.f32 %v4438, %v4445
        %v4463 = vmul.f32 %v4439, %v4445
        %v4464 = vmul.f32 %v4440, %v4445
        %v4465 = vmul.f32 %v4441, %v4445
        %v4466 = vmul.f32 %v4442, %v4445
        %v4467 = vld [vmem:[%s3] sm:$0x1]
        %v4469 = vperm.slane %v4467, 0
        %v4471 = vadd.f32 %v4447, %v4469
        %v4472 = vadd.f32 %v4448, %v4469
        %v4473 = vadd.f32 %v4449, %v4469
        %v4474 = vadd.f32 %v4450, %v4469
        %v4475 = vadd.f32 %v4451, %v4469
        %v4476 = vadd.f32 %v4452, %v4469
        %v4477 = vadd.f32 %v4453, %v4469
        %v4478 = vadd.f32 %v4454, %v4469
        %v4479 = vadd.f32 %v4455, %v4469
        %v4480 = vadd.f32 %v4456, %v4469
        %v4481 = vadd.f32 %v4457, %v4469
        %v4482 = vadd.f32 %v4458, %v4469
        %v4483 = vadd.f32 %v4459, %v4469
        %v4484 = vadd.f32 %v4460, %v4469
        %v4485 = vadd.f32 %v4461, %v4469
        %v4486 = vadd.f32 %v4462, %v4469
        %v4487 = vadd.f32 %v4463, %v4469
        %v4488 = vadd.f32 %v4464, %v4469
        %v4489 = vadd.f32 %v4465, %v4469
        %v4490 = vadd.f32 %v4466, %v4469
        %v4491 = vmax.f32 %v4471, 0.0
        %v4492 = vmax.f32 %v4472, 0.0
        %v4493 = vmax.f32 %v4473, 0.0
        %v4494 = vmax.f32 %v4474, 0.0
        %v4495 = vmax.f32 %v4475, 0.0
        %v4496 = vmax.f32 %v4476, 0.0
        %v4497 = vmax.f32 %v4477, 0.0
        %v4498 = vmax.f32 %v4478, 0.0
        %v4499 = vmax.f32 %v4479, 0.0
        %v4500 = vmax.f32 %v4480, 0.0
        %v4501 = vmax.f32 %v4481, 0.0
        %v4502 = vmax.f32 %v4482, 0.0
        %v4503 = vmax.f32 %v4483, 0.0
        %v4504 = vmax.f32 %v4484, 0.0
        %v4505 = vmax.f32 %v4485, 0.0
        %v4506 = vmax.f32 %v4486, 0.0
        %v4507 = vmax.f32 %v4487, 0.0
        %v4508 = vmax.f32 %v4488, 0.0
        %v4509 = vmax.f32 %v4489, 0.0
        %v4510 = vmax.f32 %v4490, 0.0
        %v4511 = vmax.f32 %v4491, 0.0
        %v4512 = vmax.f32 %v4492, 0.0
        %v4513 = vmax.f32 %v4493, %v4491
        %v4514 = vmax.f32 %v4494, %v4492
        %v4515 = vmax.f32 %v4495, %v4493
        %v4516 = vmax.f32 %v4496, %v4494
        %v4517 = vmax.f32 %v4497, %v4495
        %v4518 = vmax.f32 %v4498, %v4496
        %v4519 = vmax.f32 %v4499, %v4497
        %v4520 = vmax.f32 %v4500, %v4498
        %v4521 = vmax.f32 %v4501, %v4499
        %v4522 = vmax.f32 %v4502, %v4500
        %v4523 = vmax.f32 %v4503, %v4501
        %v4524 = vmax.f32 %v4504, %v4502
        %v4525 = vmax.f32 %v4505, %v4503
        %v4526 = vmax.f32 %v4506, %v4504
        %v4527 = vmax.f32 %v4507, %v4505
        %v4528 = vmax.f32 %v4508, %v4506
        %v4529 = vmax.f32 %v4509, %v4507
        %v4530 = vmax.f32 %v4510, %v4508
        %v4531 = vmax.f32 %v4511, %v4493
        %v4532 = vmax.f32 %v4512, %v4494
        %v4533 = vmax.f32 %v4513, %v4495
        %v4534 = vmax.f32 %v4514, %v4496
        %v4535 = vmax.f32 %v4515, %v4497
        %v4536 = vmax.f32 %v4516, %v4498
        %v4537 = vmax.f32 %v4517, %v4499
        %v4538 = vmax.f32 %v4518, %v4500
        %v4539 = vmax.f32 %v4519, %v4501
        %v4540 = vmax.f32 %v4520, %v4502
        %v4541 = vmax.f32 %v4521, %v4503
        %v4542 = vmax.f32 %v4522, %v4504
        %v4543 = vmax.f32 %v4523, %v4505
        %v4544 = vmax.f32 %v4524, %v4506
        %v4545 = vmax.f32 %v4525, %v4507
        %v4546 = vmax.f32 %v4526, %v4508
        %v4547 = vmax.f32 %v4527, %v4509
        %v4548 = vmax.f32 %v4528, %v4510
        %v4549 = vmax.f32 %v4529, 0.0
        %v4550 = vmax.f32 %v4530, 0.0
        %v4551 = vld [vmem:[%s4] sm:$0x1]
        %v4553 = vperm.slane %v4551, 0
        %v4555 = vmul.f32 %v4531, %v4553
        %v4556 = vmul.f32 %v4532, %v4553
        %v4557 = vadd.f32 %v4555, 0.0
        %v4558 = vadd.f32 %v4556, 0.0
        %s4559 = scalar_lea.vmem %s4, 1
        %v4560 = vld [vmem:[%s4559] sm:$0x1]
        %v4562 = vperm.slane %v4560, 0
        %v4564 = vmul.f32 %v4533, %v4562
        %v4565 = vmul.f32 %v4534, %v4562
        %v4566 = vadd.f32 %v4557, %v4564
        %v4567 = vadd.f32 %v4558, %v4565
        %s4568 = scalar_lea.vmem %s4, 2
        %v4569 = vld [vmem:[%s4568] sm:$0x1]
        %v4571 = vperm.slane %v4569, 0
        %v4573 = vmul.f32 %v4535, %v4571
        %v4574 = vmul.f32 %v4536, %v4571
        %v4575 = vadd.f32 %v4566, %v4573
        %v4576 = vadd.f32 %v4567, %v4574
        %s4577 = scalar_lea.vmem %s4, 3
        %v4578 = vld [vmem:[%s4577] sm:$0x1]
        %v4580 = vperm.slane %v4578, 0
        %v4582 = vmul.f32 %v4537, %v4580
        %v4583 = vmul.f32 %v4538, %v4580
        %v4584 = vadd.f32 %v4575, %v4582
        %v4585 = vadd.f32 %v4576, %v4583
        %s4586 = scalar_lea.vmem %s4, 4
        %v4587 = vld [vmem:[%s4586] sm:$0x1]
        %v4589 = vperm.slane %v4587, 0
        %v4591 = vmul.f32 %v4539, %v4589
        %v4592 = vmul.f32 %v4540, %v4589
        %v4593 = vadd.f32 %v4584, %v4591
        %v4594 = vadd.f32 %v4585, %v4592
        %s4595 = scalar_lea.vmem %s4, 5
        %v4596 = vld [vmem:[%s4595] sm:$0x1]
        %v4598 = vperm.slane %v4596, 0
        %v4600 = vmul.f32 %v4541, %v4598
        %v4601 = vmul.f32 %v4542, %v4598
        %v4602 = vadd.f32 %v4593, %v4600
        %v4603 = vadd.f32 %v4594, %v4601
        %s4604 = scalar_lea.vmem %s4, 6
        %v4605 = vld [vmem:[%s4604] sm:$0x1]
        %v4607 = vperm.slane %v4605, 0
        %v4609 = vmul.f32 %v4543, %v4607
        %v4610 = vmul.f32 %v4544, %v4607
        %v4611 = vadd.f32 %v4602, %v4609
        %v4612 = vadd.f32 %v4603, %v4610
        %s4613 = scalar_lea.vmem %s4, 7
        %v4614 = vld [vmem:[%s4613] sm:$0x1]
        %v4616 = vperm.slane %v4614, 0
        %v4618 = vmul.f32 %v4545, %v4616
        %v4619 = vmul.f32 %v4546, %v4616
        %v4620 = vadd.f32 %v4611, %v4618
        %v4621 = vadd.f32 %v4612, %v4619
        %s4622 = scalar_lea.vmem %s4, 8
        %v4623 = vld [vmem:[%s4622] sm:$0x1]
        %v4625 = vperm.slane %v4623, 0
        %v4627 = vmul.f32 %v4547, %v4625
        %v4628 = vmul.f32 %v4548, %v4625
        %v4629 = vadd.f32 %v4620, %v4627
        %v4630 = vadd.f32 %v4621, %v4628
        %s4631 = scalar_lea.vmem %s4, 9
        %v4632 = vld [vmem:[%s4631] sm:$0x1]
        %v4634 = vperm.slane %v4632, 0
        %v4636 = vmul.f32 %v4549, %v4634
        %v4637 = vmul.f32 %v4550, %v4634
        %v4638 = vadd.f32 %v4629, %v4636
        %v4639 = vadd.f32 %v4630, %v4637
        %4640 = vadd.xlane.f32.xlu0 %v4638
        %v4641 = vpop.xlane.xlu0 %4640
        %4642 = vadd.xlane.f32.xlu0 %v4639
        %v4643 = vpop.xlane.xlu0 %4642
        %v4644 = vld [vmem:[%s5] sm:$0x1]
        %v4646 = vperm.slane %v4644, 0
        %v4648 = vadd.f32 %v4641, %v4646
        %v4649 = vadd.f32 %v4643, %v4646
        %4650 = vst [vmem:[%s471] sm:$0xff] %v4648
        %4651 = vst [vmem:[%s471 + $0x8] sm:$0xff] %v4649
        %s4652 = smul.u32 2, %s17
        %p4653 = scmp.lt.s32.totalorder %s4652, 3
        %s4654 = scalar_select %p4653, %s4652, 3
        %s4655 = smul.addr %s4654, 8
        %s4656 = scalar_lea.vmem %s6, %s4655
        // Predicated region
        $region68: #{efficient3d_head.1} parent=62 // pred_check
          %p4657 = pneg %p166
        $region69: #{efficient3d_head.1} parent=62 // pred_check_branch
          %4659 = sbr.rel (%p4657) target = $region71
        $region70: #{efficient3d_head.1} parent=62 // pred_region
          %s4660 = smul.u32 2, %s17
        $region71: #{efficient3d_head.1} parent=62 // pred_fallthru
          _
      $region63: #{efficient3d_head.1} parent=5 // pred_fallthru
        _
      %p4661 = scmp.le.s32.totalorder 2, %s12
      // Predicated region
      $region72: #{efficient3d_head.1} parent=5 // pred_check
        %p4662 = pneg %p4661
      $region73: #{efficient3d_head.1} parent=5 // pred_check_branch
        %4664 = sbr.rel (%p4662) target = $region75
      $region74: #{efficient3d_head.1} parent=5 // pred_region
        %s4665 = ssub.s32 %s12, 2
        // Predicated region
        $region76: #{efficient3d_head.1} parent=74 // pred_check
          %p4666 = pneg %p172
        $region77: #{efficient3d_head.1} parent=74 // pred_check_branch
          %4668 = sbr.rel (%p4666) target = $region79
        $region78: #{efficient3d_head.1} parent=74 // pred_region
          %s4669 = smul.u32 2, %s18
          %p4670 = scmp.lt.s32.totalorder %s4669, 3
          %s4671 = scalar_select %p4670, %s4669, 3
          %s4672 = smul.addr %s4671, 8
          %s4673 = scalar_lea.vmem %s6, %s4672
        $region79: #{efficient3d_head.1} parent=74 // pred_fallthru
          _
      $region75: #{efficient3d_head.1} parent=5 // pred_fallthru
        _
    $region6: #{efficient3d_head.1} parent=1 // loop_footer
      %s16 = sadd.s32 1, %s12
    $region7: #{efficient3d_head.1} parent=1 // loop_footer_branch
      %11 = sbr.rel target = $region3
    $region8: #{efficient3d_head.1} parent=1 // loop_exit
      _

</llo_original>
